<compile_context>
chip_gen: v6e
topology: v6e:2x2x1
jax: 0.10.0
libtpu: 0.0.40
codegen_flags: <defaults>
</compile_context>

<pallas_src>
import functools

import jax
import jax.numpy as jnp
from jax import lax
from jax.experimental import pallas as pl
from jax.experimental.pallas import tpu as pltpu


def _sigmoid(z):
    # sigmoid(z) == 0.5 * tanh(0.5 z) + 0.5  -> single EUP tanh per gate
    # instead of exp + reciprocal on the latency-bound recurrence.
    return 0.5 * jnp.tanh(0.5 * z) + 0.5


# ---------------------------------------------------------------------------
# Fused kernel: one grid step == one LSTM layer (weights streamed),
# final Linear fused into the last layer's grid step.
# ---------------------------------------------------------------------------
def _predictor_kernel(x_ref, w_ih0_ref, w_ih_ref, w_hh_ref, b_ref,
                      w_out_ref, b_out_ref, out_ref,
                      seq_scr, gproj_scr, *, num_layers, time_chunk, unroll):
    """Predictor forward, one LSTM layer per grid step.

    x_ref     : (T, B, D_pad)     time-major input (loaded once, layer 0 only)
    w_ih0_ref : (D_pad, 4H)       layer-0 input weights (pre-transposed)
    w_ih_ref  : (H, 4H)           this layer's input weights (streamed; slot 0 unused)
    w_hh_ref  : (H, 4H)           this layer's recurrent weights (streamed)
    b_ref     : (1, 4H)           this layer's combined bias  b_ih + b_hh (f32)
    w_out_ref : (H, O)            output Linear weight (pre-transposed)
    b_out_ref : (1, O)            output Linear bias
    out_ref   : (B, O)            Linear(h_T) == pred[:, -1, :] (written on last layer)
    seq_scr   : (T|1, B, H)       inter-layer activations (VMEM resident across layers)
    gproj_scr : (Tc, B, 4H)       chunked hoisted projection + bias (f32)
    """
    layer = pl.program_id(0)
    T, B, _ = x_ref.shape
    H = w_hh_ref.shape[0]                 # padded hidden size (multiple of 128)
    G = 4 * H
    mxu_dtype = w_hh_ref.dtype

    bias = b_ref[...]                     # (1, 4H) f32

    # Recurrent state lives in the fori_loop carry (vregs), not VMEM scratch.
    h = jnp.zeros((B, H), jnp.float32)
    c = jnp.zeros((B, H), jnp.float32)

    num_chunks = -(-T // time_chunk)      # static python int
    for ci in range(num_chunks):
        t0 = ci * time_chunk
        tc = min(time_chunk, T - t0)      # static

        # ---- Hoisted input projection for this time chunk: ONE big MXU
        #      matmul, bias folded in once (not per step). ------------------
        @pl.when(layer == 0)
        def _():
            xin = x_ref[pl.ds(t0, tc)].reshape(tc * B, x_ref.shape[-1])
            proj = jnp.dot(xin, w_ih0_ref[...],
                           preferred_element_type=jnp.float32) + bias
            gproj_scr[pl.ds(0, tc)] = proj.reshape(tc, B, G)

        if num_layers > 1:
            @pl.when(layer > 0)
            def _():
                hin = seq_scr[pl.ds(t0, tc)].reshape(tc * B, H)
                proj = jnp.dot(hin, w_ih_ref[...],
                               preferred_element_type=jnp.float32) + bias
                gproj_scr[pl.ds(0, tc)] = proj.reshape(tc, B, G)

        # ---- Serial recurrence over the chunk: one small MXU push per step,
        #      h/c carried in registers. -------------------------------------
        def step(i, carry, *, _t0=t0):
            h, c = carry
            gates = gproj_scr[i] + jnp.dot(
                h.astype(mxu_dtype), w_hh_ref[...],
                preferred_element_type=jnp.float32)            # (B, 4H) f32

            # PyTorch gate order [i, f, g, o]; slices lane-aligned (H % 128 == 0).
            i_g = _sigmoid(gates[:, 0 * H:1 * H])
            f_g = _sigmoid(gates[:, 1 * H:2 * H])
            g_g = jnp.tanh(gates[:, 2 * H:3 * H])
            o_g = _sigmoid(gates[:, 3 * H:4 * H])

            c_new = f_g * c + i_g * g_g
            h_new = o_g * jnp.tanh(c_new)

            if num_layers > 1:
                @pl.when(layer < num_layers - 1)
                def _():
                    seq_scr[_t0 + i] = h_new.astype(seq_scr.dtype)

            return (h_new, c_new)

        h, c = lax.fori_loop(0, tc, step, (h, c),
                             unroll=max(1, min(unroll, tc)))

    # ---- Fused output Linear on the final hidden state (== pred[:, -1, :]).
    @pl.when(layer == num_layers - 1)
    def _():
        out_ref[...] = (
            jnp.dot(h.astype(mxu_dtype), w_out_ref[...],
                    preferred_element_type=jnp.float32) + b_out_ref[...]
        ).astype(out_ref.dtype)


# ---------------------------------------------------------------------------
# Wrapper: padding, weight prep, VMEM budgeting, single pallas_call
# ---------------------------------------------------------------------------
def _round_up(x, m):
    return ((x + m - 1) // m) * m


def _pad_to(a, shape):
    return jnp.pad(a, [(0, s - d) for d, s in zip(a.shape, shape)])


def _pad_gate_blocks(w, h, h_pad, k_pad):
    """(4h, k) PyTorch [i|f|g|o] weight -> (k_pad, 4*h_pad), per-gate zero pad."""
    k = w.shape[1]
    w4 = _pad_to(w.reshape(4, h, k), (4, h_pad, k_pad))
    return w4.reshape(4 * h_pad, k_pad).T


def predictor_forward(x, params, *, mxu_dtype=jnp.bfloat16,
                      time_chunk=32, unroll=8):
    """Equivalent of Predictor.forward: x (B, T, input_size) -> (B, output_size)."""
    B, T, D_in = x.shape
    lstm = params["lstm"]
    L = len(lstm)
    H = lstm[0]["w_hh"].shape[1]
    O = params["w_out"].shape[0]

    bpe = jnp.dtype(mxu_dtype).itemsize          # bytes per MXU-operand element
    sub = 8 if bpe == 4 else 16                  # sublane packing granularity
    B_pad = _round_up(max(B, sub), sub)
    H_pad = _round_up(max(H, 8), 128)
    D_pad = _round_up(max(D_in, 8), 128)         # layer-0 feature dim padded separately
    O_pad = _round_up(max(O, 8), 128)
    G_pad = 4 * H_pad
    Tc = max(1, min(time_chunk, T))

    # ---- input: batch-first -> time-major, (T, B_pad, D_pad) ---------------
    x_tm = jnp.transpose(x, (1, 0, 2)).astype(jnp.float32)
    x_tm = _pad_to(x_tm, (T, B_pad, D_pad)).astype(mxu_dtype)

    # ---- LSTM weights: per-gate padding, pre-transpose, stack per layer ----
    w_ih0 = _pad_gate_blocks(lstm[0]["w_ih"].astype(jnp.float32),
                             H, H_pad, D_pad).astype(mxu_dtype)   # (D_pad, 4H)

    w_ih_rest = [jnp.zeros((H_pad, G_pad), jnp.float32)]  # slot 0 unused (layer 0 uses w_ih0)
    w_hh_all, b_all = [], []
    for li, layer in enumerate(lstm):
        w_hh_all.append(_pad_gate_blocks(layer["w_hh"].astype(jnp.float32),
                                         H, H_pad, H_pad))
        b = (layer["b_ih"] + layer["b_hh"]).astype(jnp.float32)
        b_all.append(_pad_to(b.reshape(4, H), (4, H_pad)).reshape(1, G_pad))
        if li > 0:
            w_ih_rest.append(_pad_gate_blocks(layer["w_ih"].astype(jnp.float32),
                                              H, H_pad, H_pad))
    w_ih_rest = jnp.stack(w_ih_rest).astype(mxu_dtype)     # (L, H_pad, 4H_pad)
    w_hh_all = jnp.stack(w_hh_all).astype(mxu_dtype)       # (L, H_pad, 4H_pad)
    b_all = jnp.stack(b_all)                               # (L, 1, 4H_pad) f32

    w_out_p = _pad_to(params["w_out"].astype(jnp.float32),
                      (O_pad, H_pad)).T.astype(mxu_dtype)  # (H_pad, O_pad)
    b_out_p = _pad_to(params["b_out"].astype(jnp.float32), (O_pad,))[None, :]

    seq_len = T if L > 1 else 1    # inter-layer activations only needed for L > 1

    # ---- explicit VMEM budget -> vmem_limit_bytes ---------------------------
    vmem_need = (
        T * B_pad * D_pad * bpe                  # x, resident across all layers
        + D_pad * G_pad * bpe                    # layer-0 W_ih, resident
        + 2 * 2 * H_pad * G_pad * bpe            # streamed W_ih + W_hh (double-buffered)
        + 2 * G_pad * 4                          # streamed bias (double-buffered)
        + H_pad * O_pad * bpe + O_pad * 4        # output Linear weights
        + 2 * B_pad * O_pad * 4                  # output block
        + seq_len * B_pad * H_pad * bpe          # seq_scr (inter-layer activations)
        + Tc * B_pad * G_pad * 4                 # gproj_scr (chunked projection, f32)
    )
    vmem_limit = int(min(max(int(vmem_need * 1.3) + (8 << 20), 32 << 20), 128 << 20))

    kernel = functools.partial(_predictor_kernel, num_layers=L,
                               time_chunk=Tc, unroll=unroll)

    out_pad = pl.pallas_call(
        kernel,
        grid=(L,),
        in_specs=[
            pl.BlockSpec((T, B_pad, D_pad), lambda l: (0, 0, 0)),     # x (loaded once)
            pl.BlockSpec((D_pad, G_pad), lambda l: (0, 0)),           # W_ih layer 0
            pl.BlockSpec((None, H_pad, G_pad), lambda l: (l, 0, 0)),  # W_ih layers>0 (streamed)
            pl.BlockSpec((None, H_pad, G_pad), lambda l: (l, 0, 0)),  # W_hh (streamed)
            pl.BlockSpec((None, 1, G_pad), lambda l: (l, 0, 0)),      # bias (streamed)
            pl.BlockSpec((H_pad, O_pad), lambda l: (0, 0)),           # W_out
            pl.BlockSpec((1, O_pad), lambda l: (0, 0)),               # b_out
        ],
        out_specs=pl.BlockSpec((B_pad, O_pad), lambda l: (0, 0)),
        out_shape=jax.ShapeDtypeStruct((B_pad, O_pad), jnp.float32),
        scratch_shapes=[
            pltpu.VMEM((seq_len, B_pad, H_pad), mxu_dtype),   # inter-layer activations
            pltpu.VMEM((Tc, B_pad, G_pad), jnp.float32),      # chunked hoisted projection
        ],
        compiler_params=pltpu.CompilerParams(
            dimension_semantics=("arbitrary",),               # layers are sequential
            vmem_limit_bytes=vmem_limit,
        ),
    )(x_tm, w_ih0, w_ih_rest, w_hh_all, b_all, w_out_p, b_out_p)

    return out_pad[:B, :O]


# ---------------------------------------------------------------------------
# Deterministic parameter init (same shapes as nn.LSTM / nn.Linear)
# ---------------------------------------------------------------------------
def init_params(key, input_size, hidden_size, num_layers, output_size):
    stdv = 1.0 / (hidden_size ** 0.5)
    params = {"lstm": []}
    for l in range(num_layers):
        d_in = input_size if l == 0 else hidden_size
        key, k1, k2, k3, k4 = jax.random.split(key, 5)
        params["lstm"].append({
            "w_ih": jax.random.uniform(k1, (4 * hidden_size, d_in), jnp.float32, -stdv, stdv),
            "w_hh": jax.random.uniform(k2, (4 * hidden_size, hidden_size), jnp.float32, -stdv, stdv),
            "b_ih": jax.random.uniform(k3, (4 * hidden_size,), jnp.float32, -stdv, stdv),
            "b_hh": jax.random.uniform(k4, (4 * hidden_size,), jnp.float32, -stdv, stdv),
        })
    key, k5, k6 = jax.random.split(key, 3)
    params["w_out"] = jax.random.uniform(k5, (output_size, hidden_size), jnp.float32, -stdv, stdv)
    params["b_out"] = jax.random.uniform(k6, (output_size,), jnp.float32, -stdv, stdv)
    return params


# ---------------------------------------------------------------------------
# Pure-JAX fp32 reference (mirrors torch.nn.LSTM semantics)
# ---------------------------------------------------------------------------
def reference_forward(x, params):
    H = params["lstm"][0]["w_hh"].shape[1]
    h_seq = jnp.transpose(x, (1, 0, 2)).astype(jnp.float32)
    for layer in params["lstm"]:
        B = h_seq.shape[1]
        w_ih_t = layer["w_ih"].T
        w_hh_t = layer["w_hh"].T
        b = (layer["b_ih"] + layer["b_hh"])[None, :]

        def step(carry, x_t, *, _wi=w_ih_t, _wh=w_hh_t, _b=b):
            h, c = carry
            gates = x_t @ _wi + h @ _wh + _b
            i = jax.nn.sigmoid(gates[:, 0 * H:1 * H])
            f = jax.nn.sigmoid(gates[:, 1 * H:2 * H])
            g = jnp.tanh(gates[:, 2 * H:3 * H])
            o = jax.nn.sigmoid(gates[:, 3 * H:4 * H])
            c_new = f * c + i * g
            h_new = o * jnp.tanh(c_new)
            return (h_new, c_new), h_new

        h0 = jnp.zeros((B, H), jnp.float32)
        c0 = jnp.zeros((B, H), jnp.float32)
        _, h_seq = lax.scan(step, (h0, c0), h_seq)
    return h_seq[-1] @ params["w_out"].T + params["b_out"][None, :]


# ---------------------------------------------------------------------------
if __name__ == "__main__":
    batch, seq = 2, 8
    input_size, hidden_size, num_layers, output_size = 4, 32, 2, 4

    key = jax.random.PRNGKey(0)
    key, kx = jax.random.split(key)
    x = jax.random.normal(kx, (batch, seq, input_size), jnp.float32)
    params = init_params(key, input_size, hidden_size, num_layers, output_size)

    ref = reference_forward(x, params)

    # fp32 MXU path: tight check against the fp32 reference.
    out_f32 = jax.block_until_ready(
        jax.jit(functools.partial(predictor_forward, mxu_dtype=jnp.float32))(x, params))
    assert out_f32.shape == (batch, output_size), out_f32.shape
    assert jnp.allclose(out_f32, ref, atol=1e-4, rtol=1e-4), (
        f"fp32 mismatch: max abs err {jnp.max(jnp.abs(out_f32 - ref))}")

    # bf16 MXU-operand path (weights/activations bf16, gate math + accum f32):
    # error compounds over T steps and L layers, so tolerance is looser.
    out_bf16 = jax.block_until_ready(
        jax.jit(functools.partial(predictor_forward, mxu_dtype=jnp.bfloat16))(x, params))
    assert out_bf16.shape == (batch, output_size), out_bf16.shape
    assert jnp.allclose(out_bf16, ref, atol=1e-1, rtol=1e-1), (
        f"bf16 mismatch: max abs err {jnp.max(jnp.abs(out_bf16 - ref))}")

    print("KERNEL_OK")
</pallas_src>

<mosaic_0001>
module attributes {stable_mosaic.version = 11 : i64} {
  func.func @_predictor_kernel(%arg0: i32, %arg1: memref<8x8x128xf32, #tpu.memory_space<vmem>>, %arg2: memref<128x512xf32, #tpu.memory_space<vmem>>, %arg3: memref<1x128x512xf32, #tpu.memory_space<vmem>>, %arg4: memref<1x128x512xf32, #tpu.memory_space<vmem>>, %arg5: memref<1x1x512xf32, #tpu.memory_space<vmem>>, %arg6: memref<128x128xf32, #tpu.memory_space<vmem>>, %arg7: memref<1x128xf32, #tpu.memory_space<vmem>>, %arg8: memref<8x128xf32, #tpu.memory_space<vmem>>, %arg9: memref<8x8x128xf32, #tpu.memory_space<vmem>>, %arg10: memref<8x8x512xf32, #tpu.memory_space<vmem>>) attributes {dimension_semantics = [#tpu.dimension_semantics<arbitrary>], iteration_bounds = array<i64: 2>, scalar_prefetch = 0 : i64, scratch_operands = 2 : i64, tpu.core_type = #tpu.core_type<tc>, window_params = [{pipeline_mode = #tpu.pipeline_mode<synchronous>, transform_indices = @transform_0, window_bounds = array<i64: 8, 8, 128>}, {pipeline_mode = #tpu.pipeline_mode<synchronous>, transform_indices = @transform_1, window_bounds = array<i64: 128, 512>}, {transform_indices = @transform_2, window_bounds = array<i64: 1, 128, 512>}, {transform_indices = @transform_3, window_bounds = array<i64: 1, 128, 512>}, {transform_indices = @transform_4, window_bounds = array<i64: 1, 1, 512>}, {pipeline_mode = #tpu.pipeline_mode<synchronous>, transform_indices = @transform_5, window_bounds = array<i64: 128, 128>}, {pipeline_mode = #tpu.pipeline_mode<synchronous>, transform_indices = @transform_6, window_bounds = array<i64: 1, 128>}, {pipeline_mode = #tpu.pipeline_mode<synchronous>, transform_indices = @transform_7, window_bounds = array<i64: 8, 128>}]} {
    %c0 = arith.constant 0 : index
    %c0_0 = arith.constant 0 : index
    %c0_1 = arith.constant 0 : index
    %0 = vector.load %arg5[%c0, %c0_0, %c0_1] : memref<1x1x512xf32, #tpu.memory_space<vmem>>, vector<1x1x512xf32>
    %1 = vector.shape_cast %0 : vector<1x1x512xf32> to vector<1x512xf32>
    %cst = arith.constant 0.000000e+00 : f32
    %2 = vector.broadcast %cst : f32 to vector<8x128xf32>
    %cst_2 = arith.constant 0.000000e+00 : f32
    %3 = vector.broadcast %cst_2 : f32 to vector<8x128xf32>
    %c0_i32 = arith.constant 0 : i32
    %4 = arith.cmpi eq, %arg0, %c0_i32 : i32
    %5 = arith.extui %4 : i1 to i32
    %c0_i32_3 = arith.constant 0 : i32
    %6 = arith.cmpi ne, %5, %c0_i32_3 : i32
    scf.if %6 {
      %c0_145 = arith.constant 0 : index
      %c0_146 = arith.constant 0 : index
      %c0_147 = arith.constant 0 : index
      %341 = vector.load %arg1[%c0_145, %c0_146, %c0_147] : memref<8x8x128xf32, #tpu.memory_space<vmem>>, vector<8x8x128xf32>
      %342 = vector.shape_cast %341 : vector<8x8x128xf32> to vector<64x128xf32>
      %c0_148 = arith.constant 0 : index
      %c0_149 = arith.constant 0 : index
      %343 = vector.load %arg2[%c0_148, %c0_149] : memref<128x512xf32, #tpu.memory_space<vmem>>, vector<128x512xf32>
      %cst_150 = arith.constant dense<0.000000e+00> : vector<64x512xf32>
      %344 = tpu.matmul %342, %343, %cst_150 {dimension_numbers = #tpu.dot_dimension_numbers<[1], [0], [0], [1], [0, 0, 1, 1], [], []>} : vector<64x128xf32>, vector<128x512xf32>, vector<64x512xf32> -> vector<64x512xf32>
      %345 = vector.broadcast %1 : vector<1x512xf32> to vector<64x512xf32>
      %346 = arith.addf %344, %345 : vector<64x512xf32>
      %347 = vector.shape_cast %346 : vector<64x512xf32> to vector<8x8x512xf32>
      %c0_151 = arith.constant 0 : index
      %c0_152 = arith.constant 0 : index
      %c0_153 = arith.constant 0 : index
      %348 = vector.load %arg10[%c0_151, %c0_152, %c0_153] : memref<8x8x512xf32, #tpu.memory_space<vmem>>, vector<8x8x512xf32>
      tpu.vector_store %arg10[%c0_151, %c0_152, %c0_153], %347 {strides = array<i32>} : memref<8x8x512xf32, #tpu.memory_space<vmem>>, vector<8x8x512xf32>,
    } else {
    }
    %c0_i32_4 = arith.constant 0 : i32
    %7 = arith.cmpi sgt, %arg0, %c0_i32_4 : i32
    %8 = arith.extui %7 : i1 to i32
    %c0_i32_5 = arith.constant 0 : i32
    %9 = arith.cmpi ne, %8, %c0_i32_5 : i32
    scf.if %9 {
      %c0_145 = arith.constant 0 : index
      %c0_146 = arith.constant 0 : index
      %c0_147 = arith.constant 0 : index
      %341 = vector.load %arg9[%c0_145, %c0_146, %c0_147] : memref<8x8x128xf32, #tpu.memory_space<vmem>>, vector<8x8x128xf32>
      %342 = vector.shape_cast %341 : vector<8x8x128xf32> to vector<64x128xf32>
      %c0_148 = arith.constant 0 : index
      %c0_149 = arith.constant 0 : index
      %c0_150 = arith.constant 0 : index
      %343 = vector.load %arg3[%c0_148, %c0_149, %c0_150] : memref<1x128x512xf32, #tpu.memory_space<vmem>>, vector<1x128x512xf32>
      %344 = vector.shape_cast %343 : vector<1x128x512xf32> to vector<128x512xf32>
      %cst_151 = arith.constant dense<0.000000e+00> : vector<64x512xf32>
      %345 = tpu.matmul %342, %344, %cst_151 {dimension_numbers = #tpu.dot_dimension_numbers<[1], [0], [0], [1], [0, 0, 1, 1], [], []>} : vector<64x128xf32>, vector<128x512xf32>, vector<64x512xf32> -> vector<64x512xf32>
      %346 = vector.broadcast %1 : vector<1x512xf32> to vector<64x512xf32>
      %347 = arith.addf %345, %346 : vector<64x512xf32>
      %348 = vector.shape_cast %347 : vector<64x512xf32> to vector<8x8x512xf32>
      %c0_152 = arith.constant 0 : index
      %c0_153 = arith.constant 0 : index
      %c0_154 = arith.constant 0 : index
      %349 = vector.load %arg10[%c0_152, %c0_153, %c0_154] : memref<8x8x512xf32, #tpu.memory_space<vmem>>, vector<8x8x512xf32>
      tpu.vector_store %arg10[%c0_152, %c0_153, %c0_154], %348 {strides = array<i32>} : memref<8x8x512xf32, #tpu.memory_space<vmem>>, vector<8x8x512xf32>,
    } else {
    }
    %c0_i32_6 = arith.constant 0 : i32
    %10 = arith.index_cast %c0_i32_6 : i32 to index
    %c0_7 = arith.constant 0 : index
    %c0_8 = arith.constant 0 : index
    %11 = vector.load %arg10[%10, %c0_7, %c0_8] : memref<8x8x512xf32, #tpu.memory_space<vmem>>, vector<1x8x512xf32>
    %12 = vector.shape_cast %11 : vector<1x8x512xf32> to vector<8x512xf32>
    %c0_9 = arith.constant 0 : index
    %c0_10 = arith.constant 0 : index
    %c0_11 = arith.constant 0 : index
    %13 = vector.load %arg4[%c0_9, %c0_10, %c0_11] : memref<1x128x512xf32, #tpu.memory_space<vmem>>, vector<1x128x512xf32>
    %14 = vector.shape_cast %13 : vector<1x128x512xf32> to vector<128x512xf32>
    %cst_12 = arith.constant dense<0.000000e+00> : vector<8x512xf32>
    %15 = tpu.matmul %2, %14, %cst_12 {dimension_numbers = #tpu.dot_dimension_numbers<[1], [0], [0], [1], [0, 0, 1, 1], [], []>} : vector<8x128xf32>, vector<128x512xf32>, vector<8x512xf32> -> vector<8x512xf32>
    %16 = arith.addf %12, %15 : vector<8x512xf32>
    %17 = vector.extract_strided_slice %16 {offsets = [0, 0], sizes = [8, 128], strides = [1, 1]} : vector<8x512xf32> to vector<8x128xf32>
    %cst_13 = arith.constant 5.000000e-01 : f32
    %18 = vector.broadcast %cst_13 : f32 to vector<8x128xf32>
    %19 = arith.mulf %18, %17 : vector<8x128xf32>
    %20 = math.tanh %19 : vector<8x128xf32>
    %cst_14 = arith.constant 5.000000e-01 : f32
    %21 = vector.broadcast %cst_14 : f32 to vector<8x128xf32>
    %22 = arith.mulf %21, %20 : vector<8x128xf32>
    %cst_15 = arith.constant 5.000000e-01 : f32
    %23 = vector.broadcast %cst_15 : f32 to vector<8x128xf32>
    %24 = arith.addf %22, %23 : vector<8x128xf32>
    %25 = vector.extract_strided_slice %16 {offsets = [0, 128], sizes = [8, 128], strides = [1, 1]} : vector<8x512xf32> to vector<8x128xf32>
    %cst_16 = arith.constant 5.000000e-01 : f32
    %26 = vector.broadcast %cst_16 : f32 to vector<8x128xf32>
    %27 = arith.mulf %26, %25 : vector<8x128xf32>
    %28 = math.tanh %27 : vector<8x128xf32>
    %cst_17 = arith.constant 5.000000e-01 : f32
    %29 = vector.broadcast %cst_17 : f32 to vector<8x128xf32>
    %30 = arith.mulf %29, %28 : vector<8x128xf32>
    %cst_18 = arith.constant 5.000000e-01 : f32
    %31 = vector.broadcast %cst_18 : f32 to vector<8x128xf32>
    %32 = arith.addf %30, %31 : vector<8x128xf32>
    %33 = vector.extract_strided_slice %16 {offsets = [0, 256], sizes = [8, 128], strides = [1, 1]} : vector<8x512xf32> to vector<8x128xf32>
    %34 = math.tanh %33 : vector<8x128xf32>
    %35 = vector.extract_strided_slice %16 {offsets = [0, 384], sizes = [8, 128], strides = [1, 1]} : vector<8x512xf32> to vector<8x128xf32>
    %cst_19 = arith.constant 5.000000e-01 : f32
    %36 = vector.broadcast %cst_19 : f32 to vector<8x128xf32>
    %37 = arith.mulf %36, %35 : vector<8x128xf32>
    %38 = math.tanh %37 : vector<8x128xf32>
    %cst_20 = arith.constant 5.000000e-01 : f32
    %39 = vector.broadcast %cst_20 : f32 to vector<8x128xf32>
    %40 = arith.mulf %39, %38 : vector<8x128xf32>
    %cst_21 = arith.constant 5.000000e-01 : f32
    %41 = vector.broadcast %cst_21 : f32 to vector<8x128xf32>
    %42 = arith.addf %40, %41 : vector<8x128xf32>
    %43 = arith.mulf %32, %3 : vector<8x128xf32>
    %44 = arith.mulf %24, %34 : vector<8x128xf32>
    %45 = arith.addf %43, %44 : vector<8x128xf32>
    %46 = math.tanh %45 : vector<8x128xf32>
    %47 = arith.mulf %42, %46 : vector<8x128xf32>
    %c1_i32 = arith.constant 1 : i32
    %48 = arith.cmpi slt, %arg0, %c1_i32 : i32
    %49 = arith.extui %48 : i1 to i32
    %c0_i32_22 = arith.constant 0 : i32
    %50 = arith.cmpi ne, %49, %c0_i32_22 : i32
    scf.if %50 {
      %c0_i32_145 = arith.constant 0 : i32
      %341 = arith.addi %c0_i32_145, %c0_i32_6 : i32
      %342 = arith.index_cast %341 : i32 to index
      %c0_146 = arith.constant 0 : index
      %c0_147 = arith.constant 0 : index
      %343 = vector.load %arg9[%342, %c0_146, %c0_147] : memref<8x8x128xf32, #tpu.memory_space<vmem>>, vector<1x8x128xf32>
      %344 = vector.shape_cast %343 : vector<1x8x128xf32> to vector<8x128xf32>
      %345 = vector.shape_cast %47 : vector<8x128xf32> to vector<1x8x128xf32>
      tpu.vector_store %arg9[%342, %c0_146, %c0_147], %345 {strides = array<i32>} : memref<8x8x128xf32, #tpu.memory_space<vmem>>, vector<1x8x128xf32>,
    } else {
    }
    %c1_i32_23 = arith.constant 1 : i32
    %51 = arith.index_cast %c1_i32_23 : i32 to index
    %c0_24 = arith.constant 0 : index
    %c0_25 = arith.constant 0 : index
    %52 = vector.load %arg10[%51, %c0_24, %c0_25] : memref<8x8x512xf32, #tpu.memory_space<vmem>>, vector<1x8x512xf32>
    %53 = vector.shape_cast %52 : vector<1x8x512xf32> to vector<8x512xf32>
    %c0_26 = arith.constant 0 : index
    %c0_27 = arith.constant 0 : index
    %c0_28 = arith.constant 0 : index
    %54 = vector.load %arg4[%c0_26, %c0_27, %c0_28] : memref<1x128x512xf32, #tpu.memory_space<vmem>>, vector<1x128x512xf32>
    %55 = vector.shape_cast %54 : vector<1x128x512xf32> to vector<128x512xf32>
    %cst_29 = arith.constant dense<0.000000e+00> : vector<8x512xf32>
    %56 = tpu.matmul %47, %55, %cst_29 {dimension_numbers = #tpu.dot_dimension_numbers<[1], [0], [0], [1], [0, 0, 1, 1], [], []>} : vector<8x128xf32>, vector<128x512xf32>, vector<8x512xf32> -> vector<8x512xf32>
    %57 = arith.addf %53, %56 : vector<8x512xf32>
    %58 = vector.extract_strided_slice %57 {offsets = [0, 0], sizes = [8, 128], strides = [1, 1]} : vector<8x512xf32> to vector<8x128xf32>
    %cst_30 = arith.constant 5.000000e-01 : f32
    %59 = vector.broadcast %cst_30 : f32 to vector<8x128xf32>
    %60 = arith.mulf %59, %58 : vector<8x128xf32>
    %61 = math.tanh %60 : vector<8x128xf32>
    %cst_31 = arith.constant 5.000000e-01 : f32
    %62 = vector.broadcast %cst_31 : f32 to vector<8x128xf32>
    %63 = arith.mulf %62, %61 : vector<8x128xf32>
    %cst_32 = arith.constant 5.000000e-01 : f32
    %64 = vector.broadcast %cst_32 : f32 to vector<8x128xf32>
    %65 = arith.addf %63, %64 : vector<8x128xf32>
    %66 = vector.extract_strided_slice %57 {offsets = [0, 128], sizes = [8, 128], strides = [1, 1]} : vector<8x512xf32> to vector<8x128xf32>
    %cst_33 = arith.constant 5.000000e-01 : f32
    %67 = vector.broadcast %cst_33 : f32 to vector<8x128xf32>
    %68 = arith.mulf %67, %66 : vector<8x128xf32>
    %69 = math.tanh %68 : vector<8x128xf32>
    %cst_34 = arith.constant 5.000000e-01 : f32
    %70 = vector.broadcast %cst_34 : f32 to vector<8x128xf32>
    %71 = arith.mulf %70, %69 : vector<8x128xf32>
    %cst_35 = arith.constant 5.000000e-01 : f32
    %72 = vector.broadcast %cst_35 : f32 to vector<8x128xf32>
    %73 = arith.addf %71, %72 : vector<8x128xf32>
    %74 = vector.extract_strided_slice %57 {offsets = [0, 256], sizes = [8, 128], strides = [1, 1]} : vector<8x512xf32> to vector<8x128xf32>
    %75 = math.tanh %74 : vector<8x128xf32>
    %76 = vector.extract_strided_slice %57 {offsets = [0, 384], sizes = [8, 128], strides = [1, 1]} : vector<8x512xf32> to vector<8x128xf32>
    %cst_36 = arith.constant 5.000000e-01 : f32
    %77 = vector.broadcast %cst_36 : f32 to vector<8x128xf32>
    %78 = arith.mulf %77, %76 : vector<8x128xf32>
    %79 = math.tanh %78 : vector<8x128xf32>
    %cst_37 = arith.constant 5.000000e-01 : f32
    %80 = vector.broadcast %cst_37 : f32 to vector<8x128xf32>
    %81 = arith.mulf %80, %79 : vector<8x128xf32>
    %cst_38 = arith.constant 5.000000e-01 : f32
    %82 = vector.broadcast %cst_38 : f32 to vector<8x128xf32>
    %83 = arith.addf %81, %82 : vector<8x128xf32>
    %84 = arith.mulf %73, %45 : vector<8x128xf32>
    %85 = arith.mulf %65, %75 : vector<8x128xf32>
    %86 = arith.addf %84, %85 : vector<8x128xf32>
    %87 = math.tanh %86 : vector<8x128xf32>
    %88 = arith.mulf %83, %87 : vector<8x128xf32>
    %c1_i32_39 = arith.constant 1 : i32
    %89 = arith.cmpi slt, %arg0, %c1_i32_39 : i32
    %90 = arith.extui %89 : i1 to i32
    %c0_i32_40 = arith.constant 0 : i32
    %91 = arith.cmpi ne, %90, %c0_i32_40 : i32
    scf.if %91 {
      %c0_i32_145 = arith.constant 0 : i32
      %341 = arith.addi %c0_i32_145, %c1_i32_23 : i32
      %342 = arith.index_cast %341 : i32 to index
      %c0_146 = arith.constant 0 : index
      %c0_147 = arith.constant 0 : index
      %343 = vector.load %arg9[%342, %c0_146, %c0_147] : memref<8x8x128xf32, #tpu.memory_space<vmem>>, vector<1x8x128xf32>
      %344 = vector.shape_cast %343 : vector<1x8x128xf32> to vector<8x128xf32>
      %345 = vector.shape_cast %88 : vector<8x128xf32> to vector<1x8x128xf32>
      tpu.vector_store %arg9[%342, %c0_146, %c0_147], %345 {strides = array<i32>} : memref<8x8x128xf32, #tpu.memory_space<vmem>>, vector<1x8x128xf32>,
    } else {
    }
    %c2_i32 = arith.constant 2 : i32
    %92 = arith.index_cast %c2_i32 : i32 to index
    %c0_41 = arith.constant 0 : index
    %c0_42 = arith.constant 0 : index
    %93 = vector.load %arg10[%92, %c0_41, %c0_42] : memref<8x8x512xf32, #tpu.memory_space<vmem>>, vector<1x8x512xf32>
    %94 = vector.shape_cast %93 : vector<1x8x512xf32> to vector<8x512xf32>
    %c0_43 = arith.constant 0 : index
    %c0_44 = arith.constant 0 : index
    %c0_45 = arith.constant 0 : index
    %95 = vector.load %arg4[%c0_43, %c0_44, %c0_45] : memref<1x128x512xf32, #tpu.memory_space<vmem>>, vector<1x128x512xf32>
    %96 = vector.shape_cast %95 : vector<1x128x512xf32> to vector<128x512xf32>
    %cst_46 = arith.constant dense<0.000000e+00> : vector<8x512xf32>
    %97 = tpu.matmul %88, %96, %cst_46 {dimension_numbers = #tpu.dot_dimension_numbers<[1], [0], [0], [1], [0, 0, 1, 1], [], []>} : vector<8x128xf32>, vector<128x512xf32>, vector<8x512xf32> -> vector<8x512xf32>
    %98 = arith.addf %94, %97 : vector<8x512xf32>
    %99 = vector.extract_strided_slice %98 {offsets = [0, 0], sizes = [8, 128], strides = [1, 1]} : vector<8x512xf32> to vector<8x128xf32>
    %cst_47 = arith.constant 5.000000e-01 : f32
    %100 = vector.broadcast %cst_47 : f32 to vector<8x128xf32>
    %101 = arith.mulf %100, %99 : vector<8x128xf32>
    %102 = math.tanh %101 : vector<8x128xf32>
    %cst_48 = arith.constant 5.000000e-01 : f32
    %103 = vector.broadcast %cst_48 : f32 to vector<8x128xf32>
    %104 = arith.mulf %103, %102 : vector<8x128xf32>
    %cst_49 = arith.constant 5.000000e-01 : f32
    %105 = vector.broadcast %cst_49 : f32 to vector<8x128xf32>
    %106 = arith.addf %104, %105 : vector<8x128xf32>
    %107 = vector.extract_strided_slice %98 {offsets = [0, 128], sizes = [8, 128], strides = [1, 1]} : vector<8x512xf32> to vector<8x128xf32>
    %cst_50 = arith.constant 5.000000e-01 : f32
    %108 = vector.broadcast %cst_50 : f32 to vector<8x128xf32>
    %109 = arith.mulf %108, %107 : vector<8x128xf32>
    %110 = math.tanh %109 : vector<8x128xf32>
    %cst_51 = arith.constant 5.000000e-01 : f32
    %111 = vector.broadcast %cst_51 : f32 to vector<8x128xf32>
    %112 = arith.mulf %111, %110 : vector<8x128xf32>
    %cst_52 = arith.constant 5.000000e-01 : f32
    %113 = vector.broadcast %cst_52 : f32 to vector<8x128xf32>
    %114 = arith.addf %112, %113 : vector<8x128xf32>
    %115 = vector.extract_strided_slice %98 {offsets = [0, 256], sizes = [8, 128], strides = [1, 1]} : vector<8x512xf32> to vector<8x128xf32>
    %116 = math.tanh %115 : vector<8x128xf32>
    %117 = vector.extract_strided_slice %98 {offsets = [0, 384], sizes = [8, 128], strides = [1, 1]} : vector<8x512xf32> to vector<8x128xf32>
    %cst_53 = arith.constant 5.000000e-01 : f32
    %118 = vector.broadcast %cst_53 : f32 to vector<8x128xf32>
    %119 = arith.mulf %118, %117 : vector<8x128xf32>
    %120 = math.tanh %119 : vector<8x128xf32>
    %cst_54 = arith.constant 5.000000e-01 : f32
    %121 = vector.broadcast %cst_54 : f32 to vector<8x128xf32>
    %122 = arith.mulf %121, %120 : vector<8x128xf32>
    %cst_55 = arith.constant 5.000000e-01 : f32
    %123 = vector.broadcast %cst_55 : f32 to vector<8x128xf32>
    %124 = arith.addf %122, %123 : vector<8x128xf32>
    %125 = arith.mulf %114, %86 : vector<8x128xf32>
    %126 = arith.mulf %106, %116 : vector<8x128xf32>
    %127 = arith.addf %125, %126 : vector<8x128xf32>
    %128 = math.tanh %127 : vector<8x128xf32>
    %129 = arith.mulf %124, %128 : vector<8x128xf32>
    %c1_i32_56 = arith.constant 1 : i32
    %130 = arith.cmpi slt, %arg0, %c1_i32_56 : i32
    %131 = arith.extui %130 : i1 to i32
    %c0_i32_57 = arith.constant 0 : i32
    %132 = arith.cmpi ne, %131, %c0_i32_57 : i32
    scf.if %132 {
      %c0_i32_145 = arith.constant 0 : i32
      %341 = arith.addi %c0_i32_145, %c2_i32 : i32
      %342 = arith.index_cast %341 : i32 to index
      %c0_146 = arith.constant 0 : index
      %c0_147 = arith.constant 0 : index
      %343 = vector.load %arg9[%342, %c0_146, %c0_147] : memref<8x8x128xf32, #tpu.memory_space<vmem>>, vector<1x8x128xf32>
      %344 = vector.shape_cast %343 : vector<1x8x128xf32> to vector<8x128xf32>
      %345 = vector.shape_cast %129 : vector<8x128xf32> to vector<1x8x128xf32>
      tpu.vector_store %arg9[%342, %c0_146, %c0_147], %345 {strides = array<i32>} : memref<8x8x128xf32, #tpu.memory_space<vmem>>, vector<1x8x128xf32>,
    } else {
    }
    %c3_i32 = arith.constant 3 : i32
    %133 = arith.index_cast %c3_i32 : i32 to index
    %c0_58 = arith.constant 0 : index
    %c0_59 = arith.constant 0 : index
    %134 = vector.load %arg10[%133, %c0_58, %c0_59] : memref<8x8x512xf32, #tpu.memory_space<vmem>>, vector<1x8x512xf32>
    %135 = vector.shape_cast %134 : vector<1x8x512xf32> to vector<8x512xf32>
    %c0_60 = arith.constant 0 : index
    %c0_61 = arith.constant 0 : index
    %c0_62 = arith.constant 0 : index
    %136 = vector.load %arg4[%c0_60, %c0_61, %c0_62] : memref<1x128x512xf32, #tpu.memory_space<vmem>>, vector<1x128x512xf32>
    %137 = vector.shape_cast %136 : vector<1x128x512xf32> to vector<128x512xf32>
    %cst_63 = arith.constant dense<0.000000e+00> : vector<8x512xf32>
    %138 = tpu.matmul %129, %137, %cst_63 {dimension_numbers = #tpu.dot_dimension_numbers<[1], [0], [0], [1], [0, 0, 1, 1], [], []>} : vector<8x128xf32>, vector<128x512xf32>, vector<8x512xf32> -> vector<8x512xf32>
    %139 = arith.addf %135, %138 : vector<8x512xf32>
    %140 = vector.extract_strided_slice %139 {offsets = [0, 0], sizes = [8, 128], strides = [1, 1]} : vector<8x512xf32> to vector<8x128xf32>
    %cst_64 = arith.constant 5.000000e-01 : f32
    %141 = vector.broadcast %cst_64 : f32 to vector<8x128xf32>
    %142 = arith.mulf %141, %140 : vector<8x128xf32>
    %143 = math.tanh %142 : vector<8x128xf32>
    %cst_65 = arith.constant 5.000000e-01 : f32
    %144 = vector.broadcast %cst_65 : f32 to vector<8x128xf32>
    %145 = arith.mulf %144, %143 : vector<8x128xf32>
    %cst_66 = arith.constant 5.000000e-01 : f32
    %146 = vector.broadcast %cst_66 : f32 to vector<8x128xf32>
    %147 = arith.addf %145, %146 : vector<8x128xf32>
    %148 = vector.extract_strided_slice %139 {offsets = [0, 128], sizes = [8, 128], strides = [1, 1]} : vector<8x512xf32> to vector<8x128xf32>
    %cst_67 = arith.constant 5.000000e-01 : f32
    %149 = vector.broadcast %cst_67 : f32 to vector<8x128xf32>
    %150 = arith.mulf %149, %148 : vector<8x128xf32>
    %151 = math.tanh %150 : vector<8x128xf32>
    %cst_68 = arith.constant 5.000000e-01 : f32
    %152 = vector.broadcast %cst_68 : f32 to vector<8x128xf32>
    %153 = arith.mulf %152, %151 : vector<8x128xf32>
    %cst_69 = arith.constant 5.000000e-01 : f32
    %154 = vector.broadcast %cst_69 : f32 to vector<8x128xf32>
    %155 = arith.addf %153, %154 : vector<8x128xf32>
    %156 = vector.extract_strided_slice %139 {offsets = [0, 256], sizes = [8, 128], strides = [1, 1]} : vector<8x512xf32> to vector<8x128xf32>
    %157 = math.tanh %156 : vector<8x128xf32>
    %158 = vector.extract_strided_slice %139 {offsets = [0, 384], sizes = [8, 128], strides = [1, 1]} : vector<8x512xf32> to vector<8x128xf32>
    %cst_70 = arith.constant 5.000000e-01 : f32
    %159 = vector.broadcast %cst_70 : f32 to vector<8x128xf32>
    %160 = arith.mulf %159, %158 : vector<8x128xf32>
    %161 = math.tanh %160 : vector<8x128xf32>
    %cst_71 = arith.constant 5.000000e-01 : f32
    %162 = vector.broadcast %cst_71 : f32 to vector<8x128xf32>
    %163 = arith.mulf %162, %161 : vector<8x128xf32>
    %cst_72 = arith.constant 5.000000e-01 : f32
    %164 = vector.broadcast %cst_72 : f32 to vector<8x128xf32>
    %165 = arith.addf %163, %164 : vector<8x128xf32>
    %166 = arith.mulf %155, %127 : vector<8x128xf32>
    %167 = arith.mulf %147, %157 : vector<8x128xf32>
    %168 = arith.addf %166, %167 : vector<8x128xf32>
    %169 = math.tanh %168 : vector<8x128xf32>
    %170 = arith.mulf %165, %169 : vector<8x128xf32>
    %c1_i32_73 = arith.constant 1 : i32
    %171 = arith.cmpi slt, %arg0, %c1_i32_73 : i32
    %172 = arith.extui %171 : i1 to i32
    %c0_i32_74 = arith.constant 0 : i32
    %173 = arith.cmpi ne, %172, %c0_i32_74 : i32
    scf.if %173 {
      %c0_i32_145 = arith.constant 0 : i32
      %341 = arith.addi %c0_i32_145, %c3_i32 : i32
      %342 = arith.index_cast %341 : i32 to index
      %c0_146 = arith.constant 0 : index
      %c0_147 = arith.constant 0 : index
      %343 = vector.load %arg9[%342, %c0_146, %c0_147] : memref<8x8x128xf32, #tpu.memory_space<vmem>>, vector<1x8x128xf32>
      %344 = vector.shape_cast %343 : vector<1x8x128xf32> to vector<8x128xf32>
      %345 = vector.shape_cast %170 : vector<8x128xf32> to vector<1x8x128xf32>
      tpu.vector_store %arg9[%342, %c0_146, %c0_147], %345 {strides = array<i32>} : memref<8x8x128xf32, #tpu.memory_space<vmem>>, vector<1x8x128xf32>,
    } else {
    }
    %c4_i32 = arith.constant 4 : i32
    %174 = arith.index_cast %c4_i32 : i32 to index
    %c0_75 = arith.constant 0 : index
    %c0_76 = arith.constant 0 : index
    %175 = vector.load %arg10[%174, %c0_75, %c0_76] : memref<8x8x512xf32, #tpu.memory_space<vmem>>, vector<1x8x512xf32>
    %176 = vector.shape_cast %175 : vector<1x8x512xf32> to vector<8x512xf32>
    %c0_77 = arith.constant 0 : index
    %c0_78 = arith.constant 0 : index
    %c0_79 = arith.constant 0 : index
    %177 = vector.load %arg4[%c0_77, %c0_78, %c0_79] : memref<1x128x512xf32, #tpu.memory_space<vmem>>, vector<1x128x512xf32>
    %178 = vector.shape_cast %177 : vector<1x128x512xf32> to vector<128x512xf32>
    %cst_80 = arith.constant dense<0.000000e+00> : vector<8x512xf32>
    %179 = tpu.matmul %170, %178, %cst_80 {dimension_numbers = #tpu.dot_dimension_numbers<[1], [0], [0], [1], [0, 0, 1, 1], [], []>} : vector<8x128xf32>, vector<128x512xf32>, vector<8x512xf32> -> vector<8x512xf32>
    %180 = arith.addf %176, %179 : vector<8x512xf32>
    %181 = vector.extract_strided_slice %180 {offsets = [0, 0], sizes = [8, 128], strides = [1, 1]} : vector<8x512xf32> to vector<8x128xf32>
    %cst_81 = arith.constant 5.000000e-01 : f32
    %182 = vector.broadcast %cst_81 : f32 to vector<8x128xf32>
    %183 = arith.mulf %182, %181 : vector<8x128xf32>
    %184 = math.tanh %183 : vector<8x128xf32>
    %cst_82 = arith.constant 5.000000e-01 : f32
    %185 = vector.broadcast %cst_82 : f32 to vector<8x128xf32>
    %186 = arith.mulf %185, %184 : vector<8x128xf32>
    %cst_83 = arith.constant 5.000000e-01 : f32
    %187 = vector.broadcast %cst_83 : f32 to vector<8x128xf32>
    %188 = arith.addf %186, %187 : vector<8x128xf32>
    %189 = vector.extract_strided_slice %180 {offsets = [0, 128], sizes = [8, 128], strides = [1, 1]} : vector<8x512xf32> to vector<8x128xf32>
    %cst_84 = arith.constant 5.000000e-01 : f32
    %190 = vector.broadcast %cst_84 : f32 to vector<8x128xf32>
    %191 = arith.mulf %190, %189 : vector<8x128xf32>
    %192 = math.tanh %191 : vector<8x128xf32>
    %cst_85 = arith.constant 5.000000e-01 : f32
    %193 = vector.broadcast %cst_85 : f32 to vector<8x128xf32>
    %194 = arith.mulf %193, %192 : vector<8x128xf32>
    %cst_86 = arith.constant 5.000000e-01 : f32
    %195 = vector.broadcast %cst_86 : f32 to vector<8x128xf32>
    %196 = arith.addf %194, %195 : vector<8x128xf32>
    %197 = vector.extract_strided_slice %180 {offsets = [0, 256], sizes = [8, 128], strides = [1, 1]} : vector<8x512xf32> to vector<8x128xf32>
    %198 = math.tanh %197 : vector<8x128xf32>
    %199 = vector.extract_strided_slice %180 {offsets = [0, 384], sizes = [8, 128], strides = [1, 1]} : vector<8x512xf32> to vector<8x128xf32>
    %cst_87 = arith.constant 5.000000e-01 : f32
    %200 = vector.broadcast %cst_87 : f32 to vector<8x128xf32>
    %201 = arith.mulf %200, %199 : vector<8x128xf32>
    %202 = math.tanh %201 : vector<8x128xf32>
    %cst_88 = arith.constant 5.000000e-01 : f32
    %203 = vector.broadcast %cst_88 : f32 to vector<8x128xf32>
    %204 = arith.mulf %203, %202 : vector<8x128xf32>
    %cst_89 = arith.constant 5.000000e-01 : f32
    %205 = vector.broadcast %cst_89 : f32 to vector<8x128xf32>
    %206 = arith.addf %204, %205 : vector<8x128xf32>
    %207 = arith.mulf %196, %168 : vector<8x128xf32>
    %208 = arith.mulf %188, %198 : vector<8x128xf32>
    %209 = arith.addf %207, %208 : vector<8x128xf32>
    %210 = math.tanh %209 : vector<8x128xf32>
    %211 = arith.mulf %206, %210 : vector<8x128xf32>
    %c1_i32_90 = arith.constant 1 : i32
    %212 = arith.cmpi slt, %arg0, %c1_i32_90 : i32
    %213 = arith.extui %212 : i1 to i32
    %c0_i32_91 = arith.constant 0 : i32
    %214 = arith.cmpi ne, %213, %c0_i32_91 : i32
    scf.if %214 {
      %c0_i32_145 = arith.constant 0 : i32
      %341 = arith.addi %c0_i32_145, %c4_i32 : i32
      %342 = arith.index_cast %341 : i32 to index
      %c0_146 = arith.constant 0 : index
      %c0_147 = arith.constant 0 : index
      %343 = vector.load %arg9[%342, %c0_146, %c0_147] : memref<8x8x128xf32, #tpu.memory_space<vmem>>, vector<1x8x128xf32>
      %344 = vector.shape_cast %343 : vector<1x8x128xf32> to vector<8x128xf32>
      %345 = vector.shape_cast %211 : vector<8x128xf32> to vector<1x8x128xf32>
      tpu.vector_store %arg9[%342, %c0_146, %c0_147], %345 {strides = array<i32>} : memref<8x8x128xf32, #tpu.memory_space<vmem>>, vector<1x8x128xf32>,
    } else {
    }
    %c5_i32 = arith.constant 5 : i32
    %215 = arith.index_cast %c5_i32 : i32 to index
    %c0_92 = arith.constant 0 : index
    %c0_93 = arith.constant 0 : index
    %216 = vector.load %arg10[%215, %c0_92, %c0_93] : memref<8x8x512xf32, #tpu.memory_space<vmem>>, vector<1x8x512xf32>
    %217 = vector.shape_cast %216 : vector<1x8x512xf32> to vector<8x512xf32>
    %c0_94 = arith.constant 0 : index
    %c0_95 = arith.constant 0 : index
    %c0_96 = arith.constant 0 : index
    %218 = vector.load %arg4[%c0_94, %c0_95, %c0_96] : memref<1x128x512xf32, #tpu.memory_space<vmem>>, vector<1x128x512xf32>
    %219 = vector.shape_cast %218 : vector<1x128x512xf32> to vector<128x512xf32>
    %cst_97 = arith.constant dense<0.000000e+00> : vector<8x512xf32>
    %220 = tpu.matmul %211, %219, %cst_97 {dimension_numbers = #tpu.dot_dimension_numbers<[1], [0], [0], [1], [0, 0, 1, 1], [], []>} : vector<8x128xf32>, vector<128x512xf32>, vector<8x512xf32> -> vector<8x512xf32>
    %221 = arith.addf %217, %220 : vector<8x512xf32>
    %222 = vector.extract_strided_slice %221 {offsets = [0, 0], sizes = [8, 128], strides = [1, 1]} : vector<8x512xf32> to vector<8x128xf32>
    %cst_98 = arith.constant 5.000000e-01 : f32
    %223 = vector.broadcast %cst_98 : f32 to vector<8x128xf32>
    %224 = arith.mulf %223, %222 : vector<8x128xf32>
    %225 = math.tanh %224 : vector<8x128xf32>
    %cst_99 = arith.constant 5.000000e-01 : f32
    %226 = vector.broadcast %cst_99 : f32 to vector<8x128xf32>
    %227 = arith.mulf %226, %225 : vector<8x128xf32>
    %cst_100 = arith.constant 5.000000e-01 : f32
    %228 = vector.broadcast %cst_100 : f32 to vector<8x128xf32>
    %229 = arith.addf %227, %228 : vector<8x128xf32>
    %230 = vector.extract_strided_slice %221 {offsets = [0, 128], sizes = [8, 128], strides = [1, 1]} : vector<8x512xf32> to vector<8x128xf32>
    %cst_101 = arith.constant 5.000000e-01 : f32
    %231 = vector.broadcast %cst_101 : f32 to vector<8x128xf32>
    %232 = arith.mulf %231, %230 : vector<8x128xf32>
    %233 = math.tanh %232 : vector<8x128xf32>
    %cst_102 = arith.constant 5.000000e-01 : f32
    %234 = vector.broadcast %cst_102 : f32 to vector<8x128xf32>
    %235 = arith.mulf %234, %233 : vector<8x128xf32>
    %cst_103 = arith.constant 5.000000e-01 : f32
    %236 = vector.broadcast %cst_103 : f32 to vector<8x128xf32>
    %237 = arith.addf %235, %236 : vector<8x128xf32>
    %238 = vector.extract_strided_slice %221 {offsets = [0, 256], sizes = [8, 128], strides = [1, 1]} : vector<8x512xf32> to vector<8x128xf32>
    %239 = math.tanh %238 : vector<8x128xf32>
    %240 = vector.extract_strided_slice %221 {offsets = [0, 384], sizes = [8, 128], strides = [1, 1]} : vector<8x512xf32> to vector<8x128xf32>
    %cst_104 = arith.constant 5.000000e-01 : f32
    %241 = vector.broadcast %cst_104 : f32 to vector<8x128xf32>
    %242 = arith.mulf %241, %240 : vector<8x128xf32>
    %243 = math.tanh %242 : vector<8x128xf32>
    %cst_105 = arith.constant 5.000000e-01 : f32
    %244 = vector.broadcast %cst_105 : f32 to vector<8x128xf32>
    %245 = arith.mulf %244, %243 : vector<8x128xf32>
    %cst_106 = arith.constant 5.000000e-01 : f32
    %246 = vector.broadcast %cst_106 : f32 to vector<8x128xf32>
    %247 = arith.addf %245, %246 : vector<8x128xf32>
    %248 = arith.mulf %237, %209 : vector<8x128xf32>
    %249 = arith.mulf %229, %239 : vector<8x128xf32>
    %250 = arith.addf %248, %249 : vector<8x128xf32>
    %251 = math.tanh %250 : vector<8x128xf32>
    %252 = arith.mulf %247, %251 : vector<8x128xf32>
    %c1_i32_107 = arith.constant 1 : i32
    %253 = arith.cmpi slt, %arg0, %c1_i32_107 : i32
    %254 = arith.extui %253 : i1 to i32
    %c0_i32_108 = arith.constant 0 : i32
    %255 = arith.cmpi ne, %254, %c0_i32_108 : i32
    scf.if %255 {
      %c0_i32_145 = arith.constant 0 : i32
      %341 = arith.addi %c0_i32_145, %c5_i32 : i32
      %342 = arith.index_cast %341 : i32 to index
      %c0_146 = arith.constant 0 : index
      %c0_147 = arith.constant 0 : index
      %343 = vector.load %arg9[%342, %c0_146, %c0_147] : memref<8x8x128xf32, #tpu.memory_space<vmem>>, vector<1x8x128xf32>
      %344 = vector.shape_cast %343 : vector<1x8x128xf32> to vector<8x128xf32>
      %345 = vector.shape_cast %252 : vector<8x128xf32> to vector<1x8x128xf32>
      tpu.vector_store %arg9[%342, %c0_146, %c0_147], %345 {strides = array<i32>} : memref<8x8x128xf32, #tpu.memory_space<vmem>>, vector<1x8x128xf32>,
    } else {
    }
    %c6_i32 = arith.constant 6 : i32
    %256 = arith.index_cast %c6_i32 : i32 to index
    %c0_109 = arith.constant 0 : index
    %c0_110 = arith.constant 0 : index
    %257 = vector.load %arg10[%256, %c0_109, %c0_110] : memref<8x8x512xf32, #tpu.memory_space<vmem>>, vector<1x8x512xf32>
    %258 = vector.shape_cast %257 : vector<1x8x512xf32> to vector<8x512xf32>
    %c0_111 = arith.constant 0 : index
    %c0_112 = arith.constant 0 : index
    %c0_113 = arith.constant 0 : index
    %259 = vector.load %arg4[%c0_111, %c0_112, %c0_113] : memref<1x128x512xf32, #tpu.memory_space<vmem>>, vector<1x128x512xf32>
    %260 = vector.shape_cast %259 : vector<1x128x512xf32> to vector<128x512xf32>
    %cst_114 = arith.constant dense<0.000000e+00> : vector<8x512xf32>
    %261 = tpu.matmul %252, %260, %cst_114 {dimension_numbers = #tpu.dot_dimension_numbers<[1], [0], [0], [1], [0, 0, 1, 1], [], []>} : vector<8x128xf32>, vector<128x512xf32>, vector<8x512xf32> -> vector<8x512xf32>
    %262 = arith.addf %258, %261 : vector<8x512xf32>
    %263 = vector.extract_strided_slice %262 {offsets = [0, 0], sizes = [8, 128], strides = [1, 1]} : vector<8x512xf32> to vector<8x128xf32>
    %cst_115 = arith.constant 5.000000e-01 : f32
    %264 = vector.broadcast %cst_115 : f32 to vector<8x128xf32>
    %265 = arith.mulf %264, %263 : vector<8x128xf32>
    %266 = math.tanh %265 : vector<8x128xf32>
    %cst_116 = arith.constant 5.000000e-01 : f32
    %267 = vector.broadcast %cst_116 : f32 to vector<8x128xf32>
    %268 = arith.mulf %267, %266 : vector<8x128xf32>
    %cst_117 = arith.constant 5.000000e-01 : f32
    %269 = vector.broadcast %cst_117 : f32 to vector<8x128xf32>
    %270 = arith.addf %268, %269 : vector<8x128xf32>
    %271 = vector.extract_strided_slice %262 {offsets = [0, 128], sizes = [8, 128], strides = [1, 1]} : vector<8x512xf32> to vector<8x128xf32>
    %cst_118 = arith.constant 5.000000e-01 : f32
    %272 = vector.broadcast %cst_118 : f32 to vector<8x128xf32>
    %273 = arith.mulf %272, %271 : vector<8x128xf32>
    %274 = math.tanh %273 : vector<8x128xf32>
    %cst_119 = arith.constant 5.000000e-01 : f32
    %275 = vector.broadcast %cst_119 : f32 to vector<8x128xf32>
    %276 = arith.mulf %275, %274 : vector<8x128xf32>
    %cst_120 = arith.constant 5.000000e-01 : f32
    %277 = vector.broadcast %cst_120 : f32 to vector<8x128xf32>
    %278 = arith.addf %276, %277 : vector<8x128xf32>
    %279 = vector.extract_strided_slice %262 {offsets = [0, 256], sizes = [8, 128], strides = [1, 1]} : vector<8x512xf32> to vector<8x128xf32>
    %280 = math.tanh %279 : vector<8x128xf32>
    %281 = vector.extract_strided_slice %262 {offsets = [0, 384], sizes = [8, 128], strides = [1, 1]} : vector<8x512xf32> to vector<8x128xf32>
    %cst_121 = arith.constant 5.000000e-01 : f32
    %282 = vector.broadcast %cst_121 : f32 to vector<8x128xf32>
    %283 = arith.mulf %282, %281 : vector<8x128xf32>
    %284 = math.tanh %283 : vector<8x128xf32>
    %cst_122 = arith.constant 5.000000e-01 : f32
    %285 = vector.broadcast %cst_122 : f32 to vector<8x128xf32>
    %286 = arith.mulf %285, %284 : vector<8x128xf32>
    %cst_123 = arith.constant 5.000000e-01 : f32
    %287 = vector.broadcast %cst_123 : f32 to vector<8x128xf32>
    %288 = arith.addf %286, %287 : vector<8x128xf32>
    %289 = arith.mulf %278, %250 : vector<8x128xf32>
    %290 = arith.mulf %270, %280 : vector<8x128xf32>
    %291 = arith.addf %289, %290 : vector<8x128xf32>
    %292 = math.tanh %291 : vector<8x128xf32>
    %293 = arith.mulf %288, %292 : vector<8x128xf32>
    %c1_i32_124 = arith.constant 1 : i32
    %294 = arith.cmpi slt, %arg0, %c1_i32_124 : i32
    %295 = arith.extui %294 : i1 to i32
    %c0_i32_125 = arith.constant 0 : i32
    %296 = arith.cmpi ne, %295, %c0_i32_125 : i32
    scf.if %296 {
      %c0_i32_145 = arith.constant 0 : i32
      %341 = arith.addi %c0_i32_145, %c6_i32 : i32
      %342 = arith.index_cast %341 : i32 to index
      %c0_146 = arith.constant 0 : index
      %c0_147 = arith.constant 0 : index
      %343 = vector.load %arg9[%342, %c0_146, %c0_147] : memref<8x8x128xf32, #tpu.memory_space<vmem>>, vector<1x8x128xf32>
      %344 = vector.shape_cast %343 : vector<1x8x128xf32> to vector<8x128xf32>
      %345 = vector.shape_cast %293 : vector<8x128xf32> to vector<1x8x128xf32>
      tpu.vector_store %arg9[%342, %c0_146, %c0_147], %345 {strides = array<i32>} : memref<8x8x128xf32, #tpu.memory_space<vmem>>, vector<1x8x128xf32>,
    } else {
    }
    %c7_i32 = arith.constant 7 : i32
    %297 = arith.index_cast %c7_i32 : i32 to index
    %c0_126 = arith.constant 0 : index
    %c0_127 = arith.constant 0 : index
    %298 = vector.load %arg10[%297, %c0_126, %c0_127] : memref<8x8x512xf32, #tpu.memory_space<vmem>>, vector<1x8x512xf32>
    %299 = vector.shape_cast %298 : vector<1x8x512xf32> to vector<8x512xf32>
    %c0_128 = arith.constant 0 : index
    %c0_129 = arith.constant 0 : index
    %c0_130 = arith.constant 0 : index
    %300 = vector.load %arg4[%c0_128, %c0_129, %c0_130] : memref<1x128x512xf32, #tpu.memory_space<vmem>>, vector<1x128x512xf32>
    %301 = vector.shape_cast %300 : vector<1x128x512xf32> to vector<128x512xf32>
    %cst_131 = arith.constant dense<0.000000e+00> : vector<8x512xf32>
    %302 = tpu.matmul %293, %301, %cst_131 {dimension_numbers = #tpu.dot_dimension_numbers<[1], [0], [0], [1], [0, 0, 1, 1], [], []>} : vector<8x128xf32>, vector<128x512xf32>, vector<8x512xf32> -> vector<8x512xf32>
    %303 = arith.addf %299, %302 : vector<8x512xf32>
    %304 = vector.extract_strided_slice %303 {offsets = [0, 0], sizes = [8, 128], strides = [1, 1]} : vector<8x512xf32> to vector<8x128xf32>
    %cst_132 = arith.constant 5.000000e-01 : f32
    %305 = vector.broadcast %cst_132 : f32 to vector<8x128xf32>
    %306 = arith.mulf %305, %304 : vector<8x128xf32>
    %307 = math.tanh %306 : vector<8x128xf32>
    %cst_133 = arith.constant 5.000000e-01 : f32
    %308 = vector.broadcast %cst_133 : f32 to vector<8x128xf32>
    %309 = arith.mulf %308, %307 : vector<8x128xf32>
    %cst_134 = arith.constant 5.000000e-01 : f32
    %310 = vector.broadcast %cst_134 : f32 to vector<8x128xf32>
    %311 = arith.addf %309, %310 : vector<8x128xf32>
    %312 = vector.extract_strided_slice %303 {offsets = [0, 128], sizes = [8, 128], strides = [1, 1]} : vector<8x512xf32> to vector<8x128xf32>
    %cst_135 = arith.constant 5.000000e-01 : f32
    %313 = vector.broadcast %cst_135 : f32 to vector<8x128xf32>
    %314 = arith.mulf %313, %312 : vector<8x128xf32>
    %315 = math.tanh %314 : vector<8x128xf32>
    %cst_136 = arith.constant 5.000000e-01 : f32
    %316 = vector.broadcast %cst_136 : f32 to vector<8x128xf32>
    %317 = arith.mulf %316, %315 : vector<8x128xf32>
    %cst_137 = arith.constant 5.000000e-01 : f32
    %318 = vector.broadcast %cst_137 : f32 to vector<8x128xf32>
    %319 = arith.addf %317, %318 : vector<8x128xf32>
    %320 = vector.extract_strided_slice %303 {offsets = [0, 256], sizes = [8, 128], strides = [1, 1]} : vector<8x512xf32> to vector<8x128xf32>
    %321 = math.tanh %320 : vector<8x128xf32>
    %322 = vector.extract_strided_slice %303 {offsets = [0, 384], sizes = [8, 128], strides = [1, 1]} : vector<8x512xf32> to vector<8x128xf32>
    %cst_138 = arith.constant 5.000000e-01 : f32
    %323 = vector.broadcast %cst_138 : f32 to vector<8x128xf32>
    %324 = arith.mulf %323, %322 : vector<8x128xf32>
    %325 = math.tanh %324 : vector<8x128xf32>
    %cst_139 = arith.constant 5.000000e-01 : f32
    %326 = vector.broadcast %cst_139 : f32 to vector<8x128xf32>
    %327 = arith.mulf %326, %325 : vector<8x128xf32>
    %cst_140 = arith.constant 5.000000e-01 : f32
    %328 = vector.broadcast %cst_140 : f32 to vector<8x128xf32>
    %329 = arith.addf %327, %328 : vector<8x128xf32>
    %330 = arith.mulf %319, %291 : vector<8x128xf32>
    %331 = arith.mulf %311, %321 : vector<8x128xf32>
    %332 = arith.addf %330, %331 : vector<8x128xf32>
    %333 = math.tanh %332 : vector<8x128xf32>
    %334 = arith.mulf %329, %333 : vector<8x128xf32>
    %c1_i32_141 = arith.constant 1 : i32
    %335 = arith.cmpi slt, %arg0, %c1_i32_141 : i32
    %336 = arith.extui %335 : i1 to i32
    %c0_i32_142 = arith.constant 0 : i32
    %337 = arith.cmpi ne, %336, %c0_i32_142 : i32
    scf.if %337 {
      %c0_i32_145 = arith.constant 0 : i32
      %341 = arith.addi %c0_i32_145, %c7_i32 : i32
      %342 = arith.index_cast %341 : i32 to index
      %c0_146 = arith.constant 0 : index
      %c0_147 = arith.constant 0 : index
      %343 = vector.load %arg9[%342, %c0_146, %c0_147] : memref<8x8x128xf32, #tpu.memory_space<vmem>>, vector<1x8x128xf32>
      %344 = vector.shape_cast %343 : vector<1x8x128xf32> to vector<8x128xf32>
      %345 = vector.shape_cast %334 : vector<8x128xf32> to vector<1x8x128xf32>
      tpu.vector_store %arg9[%342, %c0_146, %c0_147], %345 {strides = array<i32>} : memref<8x8x128xf32, #tpu.memory_space<vmem>>, vector<1x8x128xf32>,
    } else {
    }
    %c8_i32 = arith.constant 8 : i32
    %c1_i32_143 = arith.constant 1 : i32
    %338 = arith.cmpi eq, %arg0, %c1_i32_143 : i32
    %339 = arith.extui %338 : i1 to i32
    %c0_i32_144 = arith.constant 0 : i32
    %340 = arith.cmpi ne, %339, %c0_i32_144 : i32
    scf.if %340 {
      %c0_145 = arith.constant 0 : index
      %c0_146 = arith.constant 0 : index
      %341 = vector.load %arg6[%c0_145, %c0_146] : memref<128x128xf32, #tpu.memory_space<vmem>>, vector<128x128xf32>
      %cst_147 = arith.constant dense<0.000000e+00> : vector<8x128xf32>
      %342 = tpu.matmul %334, %341, %cst_147 {dimension_numbers = #tpu.dot_dimension_numbers<[1], [0], [0], [1], [0, 0, 1, 1], [], []>} : vector<8x128xf32>, vector<128x128xf32>, vector<8x128xf32> -> vector<8x128xf32>
      %c0_148 = arith.constant 0 : index
      %c0_149 = arith.constant 0 : index
      %343 = vector.load %arg7[%c0_148, %c0_149] : memref<1x128xf32, #tpu.memory_space<vmem>>, vector<1x128xf32>
      %344 = vector.broadcast %343 : vector<1x128xf32> to vector<8x128xf32>
      %345 = arith.addf %342, %344 : vector<8x128xf32>
      %c0_150 = arith.constant 0 : index
      %c0_151 = arith.constant 0 : index
      %346 = vector.load %arg8[%c0_150, %c0_151] : memref<8x128xf32, #tpu.memory_space<vmem>>, vector<8x128xf32>
      tpu.vector_store %arg8[%c0_150, %c0_151], %345 {strides = array<i32>} : memref<8x128xf32, #tpu.memory_space<vmem>>, vector<8x128xf32>,
    } else {
    }
    return
  }
  func.func @transform_0(%arg0: i32) -> (i32, i32, i32) {
    %c0_i32 = arith.constant 0 : i32
    %c0_i32_0 = arith.constant 0 : i32
    %c0_i32_1 = arith.constant 0 : i32
    %c0_i32_2 = arith.constant 0 : i32
    return %c0_i32, %c0_i32_0, %c0_i32_1 : i32, i32, i32
  }
  func.func @transform_1(%arg0: i32) -> (i32, i32) {
    %c0_i32 = arith.constant 0 : i32
    %c0_i32_0 = arith.constant 0 : i32
    %c0_i32_1 = arith.constant 0 : i32
    return %c0_i32, %c0_i32_0 : i32, i32
  }
  func.func @transform_2(%arg0: i32) -> (i32, i32, i32) {
    %c0_i32 = arith.constant 0 : i32
    %c0_i32_0 = arith.constant 0 : i32
    %c0_i32_1 = arith.constant 0 : i32
    return %arg0, %c0_i32, %c0_i32_0 : i32, i32, i32
  }
  func.func @transform_3(%arg0: i32) -> (i32, i32, i32) {
    %c0_i32 = arith.constant 0 : i32
    %c0_i32_0 = arith.constant 0 : i32
    %c0_i32_1 = arith.constant 0 : i32
    return %arg0, %c0_i32, %c0_i32_0 : i32, i32, i32
  }
  func.func @transform_4(%arg0: i32) -> (i32, i32, i32) {
    %c0_i32 = arith.constant 0 : i32
    %c0_i32_0 = arith.constant 0 : i32
    %c0_i32_1 = arith.constant 0 : i32
    return %arg0, %c0_i32, %c0_i32_0 : i32, i32, i32
  }
  func.func @transform_5(%arg0: i32) -> (i32, i32) {
    %c0_i32 = arith.constant 0 : i32
    %c0_i32_0 = arith.constant 0 : i32
    %c0_i32_1 = arith.constant 0 : i32
    return %c0_i32, %c0_i32_0 : i32, i32
  }
  func.func @transform_6(%arg0: i32) -> (i32, i32) {
    %c0_i32 = arith.constant 0 : i32
    %c0_i32_0 = arith.constant 0 : i32
    %c0_i32_1 = arith.constant 0 : i32
    return %c0_i32, %c0_i32_0 : i32, i32
  }
  func.func @transform_7(%arg0: i32) -> (i32, i32) {
    %c0_i32 = arith.constant 0 : i32
    %c0_i32_0 = arith.constant 0 : i32
    %c0_i32_1 = arith.constant 0 : i32
    return %c0_i32, %c0_i32_0 : i32, i32
  }
}

</mosaic_0001>

<llo_original>
// kernel: predictor_forward.1
$region0: #{predictor_forward.1}
  #allocation0 [shape = 'u32[]', space=smem, size = 0x4, offset = 0x4, fixed_abs, tag = 'smem constant byte address 0x4 - core index']
  #allocation1 [shape = 'u32[144,128]{1,0:T(1,128)}', space=vmem, size = 0x12000, scoped, tag = 'internal scratch']
  #allocation2 [shape = 'f32[8,8,128]{2,1,0:T(8,128)}', space=vmem, size = 0x8000, scoped, tag = 'scratch operand']
  #allocation3 [shape = 'f32[8,8,512]{2,1,0:T(8,128)}', space=vmem, size = 0x20000, scoped, tag = 'scratch operand']
  %s0 = inlined_call_operand.vmem [shape: f32[8,8,128], index: 0, kind: input, shape index: {}]
  %s1 = inlined_call_operand.vmem [shape: f32[128,512], index: 1, kind: input, shape index: {}]
  %s2 = inlined_call_operand.vmem [shape: f32[2,128,512], index: 2, kind: input, shape index: {}]
  %s3 = inlined_call_operand.vmem [shape: f32[2,128,512], index: 3, kind: input, shape index: {}]
  %s4 = inlined_call_operand.vmem [shape: f32[2,1,512], index: 4, kind: input, shape index: {}]
  %s5 = inlined_call_operand.vmem [shape: f32[128,128], index: 5, kind: input, shape index: {}]
  %s6 = inlined_call_operand.vmem [shape: f32[1,128], index: 6, kind: input, shape index: {}]
  %s7 = inlined_call_operand.vmem [shape: f32[8,128], index: 7, kind: output, shape index: {}]
  %s8 = sld [smem:[#allocation0]]
  $region105: #{predictor_forward.1} parent=0
    _
  %s10 = ssub.s32 1, %s8
  %s11 = scalar_select 0, %s10, %s8
  loop: start=0, step=1, limit=4
  $region2: #{predictor_forward.1} parent=0 // loop_pre_header
    _
  $region3: #{predictor_forward.1} parent=0 // loop_header
    %s13 = sphi 0, %s17
    %p14 = scmp.ge.s32.totalorder %s13, 4
    %s21 = sphi 0, %s21
    %s23 = sphi 0, %s21
    %s24 = sphi 0, %s23
    %s38 = sphi 0, %s24
    %s42 = sphi 0, %s42
    %s44 = sphi 0, %s42
    %s45 = sphi 0, %s44
    %s59 = sphi 0, %s45
    %s65 = sphi 0, %s67
    %s68 = sphi 0, %s65
    %s69 = sphi 0, %s68
    %s85 = sphi 0, %s69
    %s91 = sphi 0, %s93
    %s94 = sphi 0, %s91
    %s95 = sphi 0, %s94
    %s111 = sphi 0, %s95
    %s117 = sphi 0, %s119
    %s120 = sphi 0, %s117
    %s121 = sphi 0, %s120
    %s137 = sphi 0, %s121
    %s141 = sphi 0, %s141
    %s143 = sphi 0, %s141
    %s144 = sphi 0, %s143
    %s158 = sphi 0, %s144
    %s162 = sphi 0, %s162
    %s164 = sphi 0, %s162
    %s165 = sphi 0, %s164
    %s179 = sphi 0, %s165
    %s183 = sphi 0, %s183
    %s185 = sphi 0, %s183
    %s186 = sphi 0, %s185
    %s200 = sphi 0, %s186
  $region4: #{predictor_forward.1} parent=0 // loop_header_branch
    %16 = sbr.rel (%p14) target = $region8
  $region5: #{predictor_forward.1} parent=0 // loop_body
    %s18 = ssub.s32 %s13, 1
    %s19 = ssub.s32 %s13, 2
    %s20 = sadd.s32 %s13, 1
    %s22 = sadd.s32 %s21, 1
    %p25 = scmp.eq.s32.totalorder %s13, 1
    %p26 = scmp.ne.s32.totalorder %s21, %s23
    %p27 = scmp.eq.s32.totalorder %s13, 0
    %p28 = por %p26, %p27
    %p29 = scmp.ne.s32.totalorder %s21, %s23
    %p30 = scmp.eq.s32.totalorder %s18, 1
    %p31 = por %p29, %p30
    %p32 = scmp.ne.s32.totalorder %s23, %s24
    %p33 = scmp.eq.s32.totalorder %s18, 0
    %p34 = por %p32, %p33
    %p35 = scmp.ne.s32.totalorder %s23, %s24
    %p36 = scmp.eq.s32.totalorder %s19, 1
    %p37 = por %p35, %p36
    %p39 = scmp.ne.s32.totalorder %s24, %s38
    %p40 = scmp.eq.s32.totalorder %s19, 0
    %p41 = por %p39, %p40
    %s43 = sadd.s32 %s42, 1
    %p46 = scmp.eq.s32.totalorder %s13, 1
    %p47 = scmp.ne.s32.totalorder %s42, %s44
    %p48 = scmp.eq.s32.totalorder %s13, 0
    %p49 = por %p47, %p48
    %p50 = scmp.ne.s32.totalorder %s42, %s44
    %p51 = scmp.eq.s32.totalorder %s18, 1
    %p52 = por %p50, %p51
    %p53 = scmp.ne.s32.totalorder %s44, %s45
    %p54 = scmp.eq.s32.totalorder %s18, 0
    %p55 = por %p53, %p54
    %p56 = scmp.ne.s32.totalorder %s44, %s45
    %p57 = scmp.eq.s32.totalorder %s19, 1
    %p58 = por %p56, %p57
    %p60 = scmp.ne.s32.totalorder %s45, %s59
    %p61 = scmp.eq.s32.totalorder %s19, 0
    %p62 = por %p60, %p61
    %s63 = ssub.s32 %s13, %s20
    %p64 = scmp.eq.s32.totalorder %s63, 0
    %s66 = sadd.s32 %s65, 1
    %s67 = scalar_select %p64, %s65, %s66
    %p70 = pneg %p64
    %p71 = scmp.eq.s32.totalorder %s13, 1
    %p72 = por %p70, %p71
    %p73 = scmp.ne.s32.totalorder %s65, %s68
    %p74 = scmp.eq.s32.totalorder %s13, 0
    %p75 = por %p73, %p74
    %p76 = scmp.ne.s32.totalorder %s65, %s68
    %p77 = scmp.eq.s32.totalorder %s18, 1
    %p78 = por %p76, %p77
    %p79 = scmp.ne.s32.totalorder %s68, %s69
    %p80 = scmp.eq.s32.totalorder %s18, 0
    %p81 = por %p79, %p80
    %p82 = scmp.ne.s32.totalorder %s68, %s69
    %p83 = scmp.eq.s32.totalorder %s19, 1
    %p84 = por %p82, %p83
    %p86 = scmp.ne.s32.totalorder %s69, %s85
    %p87 = scmp.eq.s32.totalorder %s19, 0
    %p88 = por %p86, %p87
    %s89 = ssub.s32 %s13, %s20
    %p90 = scmp.eq.s32.totalorder %s89, 0
    %s92 = sadd.s32 %s91, 1
    %s93 = scalar_select %p90, %s91, %s92
    %p96 = pneg %p90
    %p97 = scmp.eq.s32.totalorder %s13, 1
    %p98 = por %p96, %p97
    %p99 = scmp.ne.s32.totalorder %s91, %s94
    %p100 = scmp.eq.s32.totalorder %s13, 0
    %p101 = por %p99, %p100
    %p102 = scmp.ne.s32.totalorder %s91, %s94
    %p103 = scmp.eq.s32.totalorder %s18, 1
    %p104 = por %p102, %p103
    %p105 = scmp.ne.s32.totalorder %s94, %s95
    %p106 = scmp.eq.s32.totalorder %s18, 0
    %p107 = por %p105, %p106
    %p108 = scmp.ne.s32.totalorder %s94, %s95
    %p109 = scmp.eq.s32.totalorder %s19, 1
    %p110 = por %p108, %p109
    %p112 = scmp.ne.s32.totalorder %s95, %s111
    %p113 = scmp.eq.s32.totalorder %s19, 0
    %p114 = por %p112, %p113
    %s115 = ssub.s32 %s13, %s20
    %p116 = scmp.eq.s32.totalorder %s115, 0
    %s118 = sadd.s32 %s117, 1
    %s119 = scalar_select %p116, %s117, %s118
    %p122 = pneg %p116
    %p123 = scmp.eq.s32.totalorder %s13, 1
    %p124 = por %p122, %p123
    %p125 = scmp.ne.s32.totalorder %s117, %s120
    %p126 = scmp.eq.s32.totalorder %s13, 0
    %p127 = por %p125, %p126
    %p128 = scmp.ne.s32.totalorder %s117, %s120
    %p129 = scmp.eq.s32.totalorder %s18, 1
    %p130 = por %p128, %p129
    %p131 = scmp.ne.s32.totalorder %s120, %s121
    %p132 = scmp.eq.s32.totalorder %s18, 0
    %p133 = por %p131, %p132
    %p134 = scmp.ne.s32.totalorder %s120, %s121
    %p135 = scmp.eq.s32.totalorder %s19, 1
    %p136 = por %p134, %p135
    %p138 = scmp.ne.s32.totalorder %s121, %s137
    %p139 = scmp.eq.s32.totalorder %s19, 0
    %p140 = por %p138, %p139
    %s142 = sadd.s32 %s141, 1
    %p145 = scmp.eq.s32.totalorder %s13, 1
    %p146 = scmp.ne.s32.totalorder %s141, %s143
    %p147 = scmp.eq.s32.totalorder %s13, 0
    %p148 = por %p146, %p147
    %p149 = scmp.ne.s32.totalorder %s141, %s143
    %p150 = scmp.eq.s32.totalorder %s18, 1
    %p151 = por %p149, %p150
    %p152 = scmp.ne.s32.totalorder %s143, %s144
    %p153 = scmp.eq.s32.totalorder %s18, 0
    %p154 = por %p152, %p153
    %p155 = scmp.ne.s32.totalorder %s143, %s144
    %p156 = scmp.eq.s32.totalorder %s19, 1
    %p157 = por %p155, %p156
    %p159 = scmp.ne.s32.totalorder %s144, %s158
    %p160 = scmp.eq.s32.totalorder %s19, 0
    %p161 = por %p159, %p160
    %s163 = sadd.s32 %s162, 1
    %p166 = scmp.eq.s32.totalorder %s13, 1
    %p167 = scmp.ne.s32.totalorder %s162, %s164
    %p168 = scmp.eq.s32.totalorder %s13, 0
    %p169 = por %p167, %p168
    %p170 = scmp.ne.s32.totalorder %s162, %s164
    %p171 = scmp.eq.s32.totalorder %s18, 1
    %p172 = por %p170, %p171
    %p173 = scmp.ne.s32.totalorder %s164, %s165
    %p174 = scmp.eq.s32.totalorder %s18, 0
    %p175 = por %p173, %p174
    %p176 = scmp.ne.s32.totalorder %s164, %s165
    %p177 = scmp.eq.s32.totalorder %s19, 1
    %p178 = por %p176, %p177
    %p180 = scmp.ne.s32.totalorder %s165, %s179
    %p181 = scmp.eq.s32.totalorder %s19, 0
    %p182 = por %p180, %p181
    %s184 = sadd.s32 %s183, 1
    %p187 = scmp.eq.s32.totalorder %s13, 1
    %p188 = scmp.ne.s32.totalorder %s183, %s185
    %p189 = scmp.eq.s32.totalorder %s13, 0
    %p190 = por %p188, %p189
    %p191 = scmp.ne.s32.totalorder %s183, %s185
    %p192 = scmp.eq.s32.totalorder %s18, 1
    %p193 = por %p191, %p192
    %p194 = scmp.ne.s32.totalorder %s185, %s186
    %p195 = scmp.eq.s32.totalorder %s18, 0
    %p196 = por %p194, %p195
    %p197 = scmp.ne.s32.totalorder %s185, %s186
    %p198 = scmp.eq.s32.totalorder %s19, 1
    %p199 = por %p197, %p198
    %p201 = scmp.ne.s32.totalorder %s186, %s200
    %p202 = scmp.eq.s32.totalorder %s19, 0
    %p203 = por %p201, %p202
    %p204 = scmp.le.s32.totalorder 1, %s13
    %p205 = scmp.lt.s32.totalorder %s13, 3
    %p206 = pnand %p204, %p205
    %p207 = pneg %p206
    // Predicated region
    $region9: #{predictor_forward.1} parent=5 // pred_check
      _
    $region10: #{predictor_forward.1} parent=5 // pred_check_branch
      %209 = sbr.rel (%p206) target = $region12
    $region11: #{predictor_forward.1} parent=5 // pred_region
      %s210 = ssub.s32 %s13, 1
      // Predicated region
      $region13: #{predictor_forward.1} parent=11 // pred_check
        %p211 = pneg %p34
      $region14: #{predictor_forward.1} parent=11 // pred_check_branch
        %213 = sbr.rel (%p211) target = $region16
      $region15: #{predictor_forward.1} parent=11 // pred_region
        _
      $region16: #{predictor_forward.1} parent=11 // pred_fallthru
        _
      // Predicated region
      $region17: #{predictor_forward.1} parent=11 // pred_check
        %p214 = pneg %p55
      $region18: #{predictor_forward.1} parent=11 // pred_check_branch
        %216 = sbr.rel (%p214) target = $region20
      $region19: #{predictor_forward.1} parent=11 // pred_region
        _
      $region20: #{predictor_forward.1} parent=11 // pred_fallthru
        _
      // Predicated region
      $region21: #{predictor_forward.1} parent=11 // pred_check
        %p217 = pneg %p154
      $region22: #{predictor_forward.1} parent=11 // pred_check_branch
        %219 = sbr.rel (%p217) target = $region24
      $region23: #{predictor_forward.1} parent=11 // pred_region
        _
      $region24: #{predictor_forward.1} parent=11 // pred_fallthru
        _
      // Predicated region
      $region25: #{predictor_forward.1} parent=11 // pred_check
        %p220 = pneg %p175
      $region26: #{predictor_forward.1} parent=11 // pred_check_branch
        %222 = sbr.rel (%p220) target = $region28
      $region27: #{predictor_forward.1} parent=11 // pred_region
        _
      $region28: #{predictor_forward.1} parent=11 // pred_fallthru
        _
    $region12: #{predictor_forward.1} parent=5 // pred_fallthru
      _
    %p223 = scmp.lt.s32.totalorder %s13, 2
    // Predicated region
    $region29: #{predictor_forward.1} parent=5 // pred_check
      %p224 = pneg %p223
    $region30: #{predictor_forward.1} parent=5 // pred_check_branch
      %226 = sbr.rel (%p224) target = $region32
    $region31: #{predictor_forward.1} parent=5 // pred_region
      // Predicated region
      $region33: #{predictor_forward.1} parent=31 // pred_check
        %p227 = pneg %p75
      $region34: #{predictor_forward.1} parent=31 // pred_check_branch
        %229 = sbr.rel (%p227) target = $region36
      $region35: #{predictor_forward.1} parent=31 // pred_region
        %p230 = scmp.lt.s32.totalorder %s13, 1
        %s231 = scalar_select %p230, %s13, 1
        %s232 = smul.addr %s231, 64
        %s233 = smul.addr %s232, 8
        %s234 = scalar_lea.vmem %s2, %s233
      $region36: #{predictor_forward.1} parent=31 // pred_fallthru
        _
      // Predicated region
      $region37: #{predictor_forward.1} parent=31 // pred_check
        %p235 = pneg %p101
      $region38: #{predictor_forward.1} parent=31 // pred_check_branch
        %237 = sbr.rel (%p235) target = $region40
      $region39: #{predictor_forward.1} parent=31 // pred_region
        %p238 = scmp.lt.s32.totalorder %s13, 1
        %s239 = scalar_select %p238, %s13, 1
        %s240 = smul.addr %s239, 64
        %s241 = smul.addr %s240, 8
        %s242 = scalar_lea.vmem %s3, %s241
      $region40: #{predictor_forward.1} parent=31 // pred_fallthru
        _
      // Predicated region
      $region41: #{predictor_forward.1} parent=31 // pred_check
        %p243 = pneg %p127
      $region42: #{predictor_forward.1} parent=31 // pred_check_branch
        %245 = sbr.rel (%p243) target = $region44
      $region43: #{predictor_forward.1} parent=31 // pred_region
        %p246 = scmp.lt.s32.totalorder %s13, 1
        %s247 = scalar_select %p246, %s13, 1
        %s248 = smul.addr %s247, 4
        %s249 = scalar_lea.vmem %s4, %s248
      $region44: #{predictor_forward.1} parent=31 // pred_fallthru
        _
    $region32: #{predictor_forward.1} parent=5 // pred_fallthru
      _
    %p250 = scmp.le.s32.totalorder 1, %s13
    %p251 = scmp.lt.s32.totalorder %s13, 3
    %p252 = pnand %p250, %p251
    %p253 = pneg %p252
    // Predicated region
    $region45: #{predictor_forward.1} parent=5 // pred_check
      _
    $region46: #{predictor_forward.1} parent=5 // pred_check_branch
      %255 = sbr.rel (%p252) target = $region48
    $region47: #{predictor_forward.1} parent=5 // pred_region
      %s256 = ssub.s32 %s13, 1
      %p257 = pneg %p34
      %p258 = pneg %p31
      %p259 = pneg %p55
      %p260 = pneg %p52
      %p261 = scmp.lt.s32.totalorder %s18, 1
      %s262 = scalar_select %p261, %s18, 1
      %s263 = smul.addr %s262, 64
      %s264 = smul.addr %s263, 8
      %s265 = scalar_lea.vmem %s2, %s264
      %p266 = pneg %p81
      %p267 = pneg %p78
      %p268 = scmp.lt.s32.totalorder %s18, 1
      %s269 = scalar_select %p268, %s18, 1
      %s270 = smul.addr %s269, 64
      %s271 = smul.addr %s270, 8
      %s272 = scalar_lea.vmem %s3, %s271
      %p273 = pneg %p107
      %p274 = pneg %p104
      %p275 = scmp.lt.s32.totalorder %s18, 1
      %s276 = scalar_select %p275, %s18, 1
      %s277 = smul.addr %s276, 4
      %s278 = scalar_lea.vmem %s4, %s277
      %p279 = pneg %p133
      %p280 = pneg %p130
      %p281 = pneg %p154
      %p282 = pneg %p151
      %p283 = pneg %p175
      %p284 = pneg %p172
      %p285 = pneg %p196
      %p286 = pneg %p193
      %p287 = scmp.lt.s32.totalorder %s18, 1
      %s288 = scalar_select %p287, %s18, 1
      %s289 = smul.addr %s288, 64
      %s290 = smul.addr %s289, 8
      %s291 = scalar_lea.vmem %s2, %s290
      %p292 = scmp.lt.s32.totalorder %s18, 1
      %s293 = scalar_select %p292, %s18, 1
      %s294 = smul.addr %s293, 64
      %s295 = smul.addr %s294, 8
      %s296 = scalar_lea.vmem %s3, %s295
      %p297 = scmp.lt.s32.totalorder %s18, 1
      %s298 = scalar_select %p297, %s18, 1
      %s299 = smul.addr %s298, 4
      %s300 = scalar_lea.vmem %s4, %s299
      %v301 = vld [vmem:[%s300] sm:$0xf]
      %p302 = scmp.eq.s32.totalorder %s18, 0
      // Predicated region
      $region49: #{predictor_forward.1} parent=47 // pred_check
        %p303 = pneg %p302
      $region50: #{predictor_forward.1} parent=47 // pred_check_branch
        %305 = sbr.rel (%p303) target = $region52
      $region51: #{predictor_forward.1} parent=47 // pred_region
        %v306 = vld [vmem:[%s0] sm:$0xff]
        %v307 = vld [vmem:[%s0 + $0x8] sm:$0xff]
        %v308 = vld [vmem:[%s0 + $0x10] sm:$0xff]
        %v309 = vld [vmem:[%s0 + $0x18] sm:$0xff]
        %v310 = vld [vmem:[%s0 + $0x20] sm:$0xff]
        %v311 = vld [vmem:[%s0 + $0x28] sm:$0xff]
        %v312 = vld [vmem:[%s0 + $0x30] sm:$0xff]
        %v313 = vld [vmem:[%s0 + $0x38] sm:$0xff]
        %v314 = vld [vmem:[%s1] sm:$0xff]
        %v315 = vld [vmem:[%s1 + $0x8] sm:$0xff]
        %v316 = vld [vmem:[%s1 + $0x10] sm:$0xff]
        %v317 = vld [vmem:[%s1 + $0x18] sm:$0xff]
        %v318 = vld [vmem:[%s1 + $0x20] sm:$0xff]
        %v319 = vld [vmem:[%s1 + $0x28] sm:$0xff]
        %v320 = vld [vmem:[%s1 + $0x30] sm:$0xff]
        %v321 = vld [vmem:[%s1 + $0x38] sm:$0xff]
        %v322 = vld [vmem:[%s1 + $0x40] sm:$0xff]
        %v323 = vld [vmem:[%s1 + $0x48] sm:$0xff]
        %v324 = vld [vmem:[%s1 + $0x50] sm:$0xff]
        %v325 = vld [vmem:[%s1 + $0x58] sm:$0xff]
        %v326 = vld [vmem:[%s1 + $0x60] sm:$0xff]
        %v327 = vld [vmem:[%s1 + $0x68] sm:$0xff]
        %v328 = vld [vmem:[%s1 + $0x70] sm:$0xff]
        %v329 = vld [vmem:[%s1 + $0x78] sm:$0xff]
        %v330 = vld [vmem:[%s1 + $0x80] sm:$0xff]
        %v331 = vld [vmem:[%s1 + $0x88] sm:$0xff]
        %v332 = vld [vmem:[%s1 + $0x90] sm:$0xff]
        %v333 = vld [vmem:[%s1 + $0x98] sm:$0xff]
        %v334 = vld [vmem:[%s1 + $0xa0] sm:$0xff]
        %v335 = vld [vmem:[%s1 + $0xa8] sm:$0xff]
        %v336 = vld [vmem:[%s1 + $0xb0] sm:$0xff]
        %v337 = vld [vmem:[%s1 + $0xb8] sm:$0xff]
        %v338 = vld [vmem:[%s1 + $0xc0] sm:$0xff]
        %v339 = vld [vmem:[%s1 + $0xc8] sm:$0xff]
        %v340 = vld [vmem:[%s1 + $0xd0] sm:$0xff]
        %v341 = vld [vmem:[%s1 + $0xd8] sm:$0xff]
        %v342 = vld [vmem:[%s1 + $0xe0] sm:$0xff]
        %v343 = vld [vmem:[%s1 + $0xe8] sm:$0xff]
        %v344 = vld [vmem:[%s1 + $0xf0] sm:$0xff]
        %v345 = vld [vmem:[%s1 + $0xf8] sm:$0xff]
        %v346 = vld [vmem:[%s1 + $0x100] sm:$0xff]
        %v347 = vld [vmem:[%s1 + $0x108] sm:$0xff]
        %v348 = vld [vmem:[%s1 + $0x110] sm:$0xff]
        %v349 = vld [vmem:[%s1 + $0x118] sm:$0xff]
        %v350 = vld [vmem:[%s1 + $0x120] sm:$0xff]
        %v351 = vld [vmem:[%s1 + $0x128] sm:$0xff]
        %v352 = vld [vmem:[%s1 + $0x130] sm:$0xff]
        %v353 = vld [vmem:[%s1 + $0x138] sm:$0xff]
        %v354 = vld [vmem:[%s1 + $0x140] sm:$0xff]
        %v355 = vld [vmem:[%s1 + $0x148] sm:$0xff]
        %v356 = vld [vmem:[%s1 + $0x150] sm:$0xff]
        %v357 = vld [vmem:[%s1 + $0x158] sm:$0xff]
        %v358 = vld [vmem:[%s1 + $0x160] sm:$0xff]
        %v359 = vld [vmem:[%s1 + $0x168] sm:$0xff]
        %v360 = vld [vmem:[%s1 + $0x170] sm:$0xff]
        %v361 = vld [vmem:[%s1 + $0x178] sm:$0xff]
        %v362 = vld [vmem:[%s1 + $0x180] sm:$0xff]
        %v363 = vld [vmem:[%s1 + $0x188] sm:$0xff]
        %v364 = vld [vmem:[%s1 + $0x190] sm:$0xff]
        %v365 = vld [vmem:[%s1 + $0x198] sm:$0xff]
        %v366 = vld [vmem:[%s1 + $0x1a0] sm:$0xff]
        %v367 = vld [vmem:[%s1 + $0x1a8] sm:$0xff]
        %v368 = vld [vmem:[%s1 + $0x1b0] sm:$0xff]
        %v369 = vld [vmem:[%s1 + $0x1b8] sm:$0xff]
        %v370 = vld [vmem:[%s1 + $0x1c0] sm:$0xff]
        %v371 = vld [vmem:[%s1 + $0x1c8] sm:$0xff]
        %v372 = vld [vmem:[%s1 + $0x1d0] sm:$0xff]
        %v373 = vld [vmem:[%s1 + $0x1d8] sm:$0xff]
        %v374 = vld [vmem:[%s1 + $0x1e0] sm:$0xff]
        %v375 = vld [vmem:[%s1 + $0x1e8] sm:$0xff]
        %v376 = vld [vmem:[%s1 + $0x1f0] sm:$0xff]
        %v377 = vld [vmem:[%s1 + $0x1f8] sm:$0xff]
        %v379 = vlaneseq
        %v380 = vshrl.u32 %v379, 7
        %v381 = vsub.s32 0, %v380
        %v382 = vrot.slane %v301, %v381
        %v383 = vlaneseq
        %v384 = vshrl.u32 %v383, 7
        %v385 = vsub.s32 1, %v384
        %v386 = vrot.slane %v301, %v385
        %v387 = vlaneseq
        %v388 = vshrl.u32 %v387, 7
        %v389 = vsub.s32 2, %v388
        %v390 = vrot.slane %v301, %v389
        %v391 = vlaneseq
        %v392 = vshrl.u32 %v391, 7
        %v393 = vsub.s32 3, %v392
        %v394 = vrot.slane %v301, %v393
        %399 = vmatprep.subr.mxu0 %v375
        %400 = vmatpush1.msra.mxu0 %v374
        %401 = vmatprep.subr.mxu0 %v371
        %402 = vmatpush1.msra.mxu0 %v370
        %403 = vmatprep.subr.mxu0 %v367
        %404 = vmatpush1.msra.mxu0 %v366
        %405 = vmatprep.subr.mxu0 %v363
        %406 = vmatpush1.msra.mxu0 %v362
        %407 = vmatprep.subr.mxu0 %v359
        %408 = vmatpush1.msra.mxu0 %v358
        %409 = vmatprep.subr.mxu0 %v355
        %410 = vmatpush1.msra.mxu0 %v354
        %411 = vmatprep.subr.mxu0 %v351
        %412 = vmatpush1.msra.mxu0 %v350
        %413 = vmatprep.subr.mxu0 %v347
        %414 = vmatpush1.msra.mxu0 %v346
        %415 = vmatprep.subr.mxu0 %v343
        %416 = vmatpush1.msra.mxu0 %v342
        %417 = vmatprep.subr.mxu0 %v339
        %418 = vmatpush1.msra.mxu0 %v338
        %419 = vmatprep.subr.mxu0 %v335
        %420 = vmatpush1.msra.mxu0 %v334
        %421 = vmatprep.subr.mxu0 %v331
        %422 = vmatpush1.msra.mxu0 %v330
        %423 = vmatprep.subr.mxu0 %v327
        %424 = vmatpush1.msra.mxu0 %v326
        %425 = vmatprep.subr.mxu0 %v323
        %426 = vmatpush1.msra.mxu0 %v322
        %427 = vmatprep.subr.mxu0 %v319
        %428 = vmatpush1.msra.mxu0 %v318
        %429 = vmatprep.subr.mxu0 %v315
        %430 = vmatpush1.msra.mxu0 %v314
        %431 = vmatprep.subr.mxu0 0.0
        %432 = vmatpush2.msra.mxu0 0.0
        %433 = vmatprep.subr.mxu0 0.0
        %434 = vmatpush2.msra.mxu0 0.0
        %435 = vmatprep.subr.mxu0 0.0
        %436 = vmatpush2.msra.mxu0 0.0
        %437 = vmatprep.subr.mxu0 0.0
        %438 = vmatpush2.msra.mxu0 0.0
        %439 = vmatprep.subr.mxu0 0.0
        %440 = vmatpush2.msra.mxu0 0.0
        %441 = vmatprep.subr.mxu0 0.0
        %442 = vmatpush2.msra.mxu0 0.0
        %443 = vmatprep.subr.mxu0 0.0
        %444 = vmatpush2.msra.mxu0 0.0
        %445 = vmatprep.subr.mxu0 0.0
        %446 = vmatpush2.msra.mxu0 0.0
        %447 = vmatprep.subr.mxu0 0.0
        %448 = vmatpush2.msra.mxu0 0.0
        %449 = vmatprep.subr.mxu0 0.0
        %450 = vmatpush2.msra.mxu0 0.0
        %451 = vmatprep.subr.mxu0 0.0
        %452 = vmatpush2.msra.mxu0 0.0
        %453 = vmatprep.subr.mxu0 0.0
        %454 = vmatpush2.msra.mxu0 0.0
        %455 = vmatprep.subr.mxu0 0.0
        %456 = vmatpush2.msra.mxu0 0.0
        %457 = vmatprep.subr.mxu0 0.0
        %458 = vmatpush2.msra.mxu0 0.0
        %459 = vmatprep.subr.mxu0 0.0
        %460 = vmatpush2.msra.mxu0 0.0
        %461 = vmatprep.subr.mxu0 0.0
        %462 = vmatpush2.msra.mxu0 0.0
        %463 = vmatprep.mubr.f32.mxu0 0.0
        %464 = vmatmul.mubr.f32.gmra.mxu0 %v306
        %v465 = vpop.f32.mrf.mxu0
        %v466 = vadd.f32 %v382, %v465
        %v467 = vpop.f32.mrf.mxu0
        %v468 = vadd.f32 %v386, %v467
        %469 = vmatprep.mubr.f32.mxu0 0.0
        %470 = vmatmul.mubr.f32.gmra.mxu0 %v307
        %v471 = vpop.f32.mrf.mxu0
        %v472 = vadd.f32 %v382, %v471
        %v473 = vpop.f32.mrf.mxu0
        %v474 = vadd.f32 %v386, %v473
        %475 = vmatprep.mubr.f32.mxu0 0.0
        %476 = vmatmul.mubr.f32.gmra.mxu0 %v308
        %v477 = vpop.f32.mrf.mxu0
        %v478 = vadd.f32 %v382, %v477
        %v479 = vpop.f32.mrf.mxu0
        %v480 = vadd.f32 %v386, %v479
        %481 = vmatprep.mubr.f32.mxu0 0.0
        %482 = vmatmul.mubr.f32.gmra.mxu0 %v309
        %v483 = vpop.f32.mrf.mxu0
        %v484 = vadd.f32 %v382, %v483
        %v485 = vpop.f32.mrf.mxu0
        %v486 = vadd.f32 %v386, %v485
        %487 = vmatprep.mubr.f32.mxu0 0.0
        %488 = vmatmul.mubr.f32.gmra.mxu0 %v310
        %v489 = vpop.f32.mrf.mxu0
        %v490 = vadd.f32 %v382, %v489
        %v491 = vpop.f32.mrf.mxu0
        %v492 = vadd.f32 %v386, %v491
        %493 = vmatprep.mubr.f32.mxu0 0.0
        %494 = vmatmul.mubr.f32.gmra.mxu0 %v311
        %v495 = vpop.f32.mrf.mxu0
        %v496 = vadd.f32 %v382, %v495
        %v497 = vpop.f32.mrf.mxu0
        %v498 = vadd.f32 %v386, %v497
        %499 = vmatprep.mubr.f32.mxu0 0.0
        %500 = vmatmul.mubr.f32.gmra.mxu0 %v312
        %v501 = vpop.f32.mrf.mxu0
        %v502 = vadd.f32 %v382, %v501
        %v503 = vpop.f32.mrf.mxu0
        %v504 = vadd.f32 %v386, %v503
        %505 = vmatprep.mubr.f32.mxu0 0.0
        %506 = vmatmul.mubr.f32.gmra.mxu0 %v313
        %v507 = vpop.f32.mrf.mxu0
        %v508 = vadd.f32 %v382, %v507
        %v509 = vpop.f32.mrf.mxu0
        %v510 = vadd.f32 %v386, %v509
        %511 = vdwg.mxu0
        %512 = vmatprep.subr.mxu0 %v377
        %513 = vmatpush1.msra.mxu0 %v376
        %514 = vmatprep.subr.mxu0 %v373
        %515 = vmatpush1.msra.mxu0 %v372
        %516 = vmatprep.subr.mxu0 %v369
        %517 = vmatpush1.msra.mxu0 %v368
        %518 = vmatprep.subr.mxu0 %v365
        %519 = vmatpush1.msra.mxu0 %v364
        %520 = vmatprep.subr.mxu0 %v361
        %521 = vmatpush1.msra.mxu0 %v360
        %522 = vmatprep.subr.mxu0 %v357
        %523 = vmatpush1.msra.mxu0 %v356
        %524 = vmatprep.subr.mxu0 %v353
        %525 = vmatpush1.msra.mxu0 %v352
        %526 = vmatprep.subr.mxu0 %v349
        %527 = vmatpush1.msra.mxu0 %v348
        %528 = vmatprep.subr.mxu0 %v345
        %529 = vmatpush1.msra.mxu0 %v344
        %530 = vmatprep.subr.mxu0 %v341
        %531 = vmatpush1.msra.mxu0 %v340
        %532 = vmatprep.subr.mxu0 %v337
        %533 = vmatpush1.msra.mxu0 %v336
        %534 = vmatprep.subr.mxu0 %v333
        %535 = vmatpush1.msra.mxu0 %v332
        %536 = vmatprep.subr.mxu0 %v329
        %537 = vmatpush1.msra.mxu0 %v328
        %538 = vmatprep.subr.mxu0 %v325
        %539 = vmatpush1.msra.mxu0 %v324
        %540 = vmatprep.subr.mxu0 %v321
        %541 = vmatpush1.msra.mxu0 %v320
        %542 = vmatprep.subr.mxu0 %v317
        %543 = vmatpush1.msra.mxu0 %v316
        %544 = vmatprep.subr.mxu0 0.0
        %545 = vmatpush2.msra.mxu0 0.0
        %546 = vmatprep.subr.mxu0 0.0
        %547 = vmatpush2.msra.mxu0 0.0
        %548 = vmatprep.subr.mxu0 0.0
        %549 = vmatpush2.msra.mxu0 0.0
        %550 = vmatprep.subr.mxu0 0.0
        %551 = vmatpush2.msra.mxu0 0.0
        %552 = vmatprep.subr.mxu0 0.0
        %553 = vmatpush2.msra.mxu0 0.0
        %554 = vmatprep.subr.mxu0 0.0
        %555 = vmatpush2.msra.mxu0 0.0
        %556 = vmatprep.subr.mxu0 0.0
        %557 = vmatpush2.msra.mxu0 0.0
        %558 = vmatprep.subr.mxu0 0.0
        %559 = vmatpush2.msra.mxu0 0.0
        %560 = vmatprep.subr.mxu0 0.0
        %561 = vmatpush2.msra.mxu0 0.0
        %562 = vmatprep.subr.mxu0 0.0
        %563 = vmatpush2.msra.mxu0 0.0
        %564 = vmatprep.subr.mxu0 0.0
        %565 = vmatpush2.msra.mxu0 0.0
        %566 = vmatprep.subr.mxu0 0.0
        %567 = vmatpush2.msra.mxu0 0.0
        %568 = vmatprep.subr.mxu0 0.0
        %569 = vmatpush2.msra.mxu0 0.0
        %570 = vmatprep.subr.mxu0 0.0
        %571 = vmatpush2.msra.mxu0 0.0
        %572 = vmatprep.subr.mxu0 0.0
        %573 = vmatpush2.msra.mxu0 0.0
        %574 = vmatprep.subr.mxu0 0.0
        %575 = vmatpush2.msra.mxu0 0.0
        %576 = vmatprep.mubr.f32.mxu0 0.0
        %577 = vmatmul.mubr.f32.gmra.mxu0 %v306
        %v578 = vpop.f32.mrf.mxu0
        %v579 = vadd.f32 %v390, %v578
        %v580 = vpop.f32.mrf.mxu0
        %v581 = vadd.f32 %v394, %v580
        %582 = vmatprep.mubr.f32.mxu0 0.0
        %583 = vmatmul.mubr.f32.gmra.mxu0 %v307
        %v584 = vpop.f32.mrf.mxu0
        %v585 = vadd.f32 %v390, %v584
        %v586 = vpop.f32.mrf.mxu0
        %v587 = vadd.f32 %v394, %v586
        %588 = vmatprep.mubr.f32.mxu0 0.0
        %589 = vmatmul.mubr.f32.gmra.mxu0 %v308
        %v590 = vpop.f32.mrf.mxu0
        %v591 = vadd.f32 %v390, %v590
        %v592 = vpop.f32.mrf.mxu0
        %v593 = vadd.f32 %v394, %v592
        %594 = vmatprep.mubr.f32.mxu0 0.0
        %595 = vmatmul.mubr.f32.gmra.mxu0 %v309
        %v596 = vpop.f32.mrf.mxu0
        %v597 = vadd.f32 %v390, %v596
        %v598 = vpop.f32.mrf.mxu0
        %v599 = vadd.f32 %v394, %v598
        %600 = vmatprep.mubr.f32.mxu0 0.0
        %601 = vmatmul.mubr.f32.gmra.mxu0 %v310
        %v602 = vpop.f32.mrf.mxu0
        %v603 = vadd.f32 %v390, %v602
        %v604 = vpop.f32.mrf.mxu0
        %v605 = vadd.f32 %v394, %v604
        %606 = vmatprep.mubr.f32.mxu0 0.0
        %607 = vmatmul.mubr.f32.gmra.mxu0 %v311
        %v608 = vpop.f32.mrf.mxu0
        %v609 = vadd.f32 %v390, %v608
        %v610 = vpop.f32.mrf.mxu0
        %v611 = vadd.f32 %v394, %v610
        %612 = vmatprep.mubr.f32.mxu0 0.0
        %613 = vmatmul.mubr.f32.gmra.mxu0 %v312
        %v614 = vpop.f32.mrf.mxu0
        %v615 = vadd.f32 %v390, %v614
        %v616 = vpop.f32.mrf.mxu0
        %v617 = vadd.f32 %v394, %v616
        %618 = vmatprep.mubr.f32.mxu0 0.0
        %619 = vmatmul.mubr.f32.gmra.mxu0 %v313
        %v620 = vpop.f32.mrf.mxu0
        %v621 = vadd.f32 %v390, %v620
        %v622 = vpop.f32.mrf.mxu0
        %v623 = vadd.f32 %v394, %v622
        %624 = vdwg.mxu0
        %625 = vst [vmem:[#allocation3] sm:$0xff] %v466
        %626 = vst [vmem:[#allocation3 + $0x8] sm:$0xff] %v468
        %627 = vst [vmem:[#allocation3 + $0x10] sm:$0xff] %v579
        %628 = vst [vmem:[#allocation3 + $0x18] sm:$0xff] %v581
        %629 = vst [vmem:[#allocation3 + $0x20] sm:$0xff] %v472
        %630 = vst [vmem:[#allocation3 + $0x28] sm:$0xff] %v474
        %631 = vst [vmem:[#allocation3 + $0x30] sm:$0xff] %v585
        %632 = vst [vmem:[#allocation3 + $0x38] sm:$0xff] %v587
        %633 = vst [vmem:[#allocation3 + $0x40] sm:$0xff] %v478
        %634 = vst [vmem:[#allocation3 + $0x48] sm:$0xff] %v480
        %635 = vst [vmem:[#allocation3 + $0x50] sm:$0xff] %v591
        %636 = vst [vmem:[#allocation3 + $0x58] sm:$0xff] %v593
        %637 = vst [vmem:[#allocation3 + $0x60] sm:$0xff] %v484
        %638 = vst [vmem:[#allocation3 + $0x68] sm:$0xff] %v486
        %639 = vst [vmem:[#allocation3 + $0x70] sm:$0xff] %v597
        %640 = vst [vmem:[#allocation3 + $0x78] sm:$0xff] %v599
        %641 = vst [vmem:[#allocation3 + $0x80] sm:$0xff] %v490
        %642 = vst [vmem:[#allocation3 + $0x88] sm:$0xff] %v492
        %643 = vst [vmem:[#allocation3 + $0x90] sm:$0xff] %v603
        %644 = vst [vmem:[#allocation3 + $0x98] sm:$0xff] %v605
        %645 = vst [vmem:[#allocation3 + $0xa0] sm:$0xff] %v496
        %646 = vst [vmem:[#allocation3 + $0xa8] sm:$0xff] %v498
        %647 = vst [vmem:[#allocation3 + $0xb0] sm:$0xff] %v609
        %648 = vst [vmem:[#allocation3 + $0xb8] sm:$0xff] %v611
        %649 = vst [vmem:[#allocation3 + $0xc0] sm:$0xff] %v502
        %650 = vst [vmem:[#allocation3 + $0xc8] sm:$0xff] %v504
        %651 = vst [vmem:[#allocation3 + $0xd0] sm:$0xff] %v615
        %652 = vst [vmem:[#allocation3 + $0xd8] sm:$0xff] %v617
        %653 = vst [vmem:[#allocation3 + $0xe0] sm:$0xff] %v508
        %654 = vst [vmem:[#allocation3 + $0xe8] sm:$0xff] %v510
        %655 = vst [vmem:[#allocation3 + $0xf0] sm:$0xff] %v621
        %656 = vst [vmem:[#allocation3 + $0xf8] sm:$0xff] %v623
      $region52: #{predictor_forward.1} parent=47 // pred_fallthru
        _
      %p657 = scmp.gt.s32.totalorder %s18, 0
      // Predicated region
      $region53: #{predictor_forward.1} parent=47 // pred_check
        %p658 = pneg %p657
      $region54: #{predictor_forward.1} parent=47 // pred_check_branch
        %660 = sbr.rel (%p658) target = $region56
      $region55: #{predictor_forward.1} parent=47 // pred_region
        %v661 = vld [vmem:[#allocation2] sm:$0xff]
        %v662 = vld [vmem:[#allocation2 + $0x8] sm:$0xff]
        %v663 = vld [vmem:[#allocation2 + $0x10] sm:$0xff]
        %v664 = vld [vmem:[#allocation2 + $0x18] sm:$0xff]
        %v665 = vld [vmem:[#allocation2 + $0x20] sm:$0xff]
        %v666 = vld [vmem:[#allocation2 + $0x28] sm:$0xff]
        %v667 = vld [vmem:[#allocation2 + $0x30] sm:$0xff]
        %v668 = vld [vmem:[#allocation2 + $0x38] sm:$0xff]
        %v669 = vld [vmem:[%s291] sm:$0xff]
        %v670 = vld [vmem:[%s291 + $0x8] sm:$0xff]
        %v671 = vld [vmem:[%s291 + $0x10] sm:$0xff]
        %v672 = vld [vmem:[%s291 + $0x18] sm:$0xff]
        %v673 = vld [vmem:[%s291 + $0x20] sm:$0xff]
        %v674 = vld [vmem:[%s291 + $0x28] sm:$0xff]
        %v675 = vld [vmem:[%s291 + $0x30] sm:$0xff]
        %v676 = vld [vmem:[%s291 + $0x38] sm:$0xff]
        %v677 = vld [vmem:[%s291 + $0x40] sm:$0xff]
        %v678 = vld [vmem:[%s291 + $0x48] sm:$0xff]
        %v679 = vld [vmem:[%s291 + $0x50] sm:$0xff]
        %v680 = vld [vmem:[%s291 + $0x58] sm:$0xff]
        %v681 = vld [vmem:[%s291 + $0x60] sm:$0xff]
        %v682 = vld [vmem:[%s291 + $0x68] sm:$0xff]
        %v683 = vld [vmem:[%s291 + $0x70] sm:$0xff]
        %v684 = vld [vmem:[%s291 + $0x78] sm:$0xff]
        %v685 = vld [vmem:[%s291 + $0x80] sm:$0xff]
        %v686 = vld [vmem:[%s291 + $0x88] sm:$0xff]
        %v687 = vld [vmem:[%s291 + $0x90] sm:$0xff]
        %v688 = vld [vmem:[%s291 + $0x98] sm:$0xff]
        %v689 = vld [vmem:[%s291 + $0xa0] sm:$0xff]
        %v690 = vld [vmem:[%s291 + $0xa8] sm:$0xff]
        %v691 = vld [vmem:[%s291 + $0xb0] sm:$0xff]
        %v692 = vld [vmem:[%s291 + $0xb8] sm:$0xff]
        %v693 = vld [vmem:[%s291 + $0xc0] sm:$0xff]
        %v694 = vld [vmem:[%s291 + $0xc8] sm:$0xff]
        %v695 = vld [vmem:[%s291 + $0xd0] sm:$0xff]
        %v696 = vld [vmem:[%s291 + $0xd8] sm:$0xff]
        %v697 = vld [vmem:[%s291 + $0xe0] sm:$0xff]
        %v698 = vld [vmem:[%s291 + $0xe8] sm:$0xff]
        %v699 = vld [vmem:[%s291 + $0xf0] sm:$0xff]
        %v700 = vld [vmem:[%s291 + $0xf8] sm:$0xff]
        %v701 = vld [vmem:[%s291 + $0x100] sm:$0xff]
        %v702 = vld [vmem:[%s291 + $0x108] sm:$0xff]
        %v703 = vld [vmem:[%s291 + $0x110] sm:$0xff]
        %v704 = vld [vmem:[%s291 + $0x118] sm:$0xff]
        %v705 = vld [vmem:[%s291 + $0x120] sm:$0xff]
        %v706 = vld [vmem:[%s291 + $0x128] sm:$0xff]
        %v707 = vld [vmem:[%s291 + $0x130] sm:$0xff]
        %v708 = vld [vmem:[%s291 + $0x138] sm:$0xff]
        %v709 = vld [vmem:[%s291 + $0x140] sm:$0xff]
        %v710 = vld [vmem:[%s291 + $0x148] sm:$0xff]
        %v711 = vld [vmem:[%s291 + $0x150] sm:$0xff]
        %v712 = vld [vmem:[%s291 + $0x158] sm:$0xff]
        %v713 = vld [vmem:[%s291 + $0x160] sm:$0xff]
        %v714 = vld [vmem:[%s291 + $0x168] sm:$0xff]
        %v715 = vld [vmem:[%s291 + $0x170] sm:$0xff]
        %v716 = vld [vmem:[%s291 + $0x178] sm:$0xff]
        %v717 = vld [vmem:[%s291 + $0x180] sm:$0xff]
        %v718 = vld [vmem:[%s291 + $0x188] sm:$0xff]
        %v719 = vld [vmem:[%s291 + $0x190] sm:$0xff]
        %v720 = vld [vmem:[%s291 + $0x198] sm:$0xff]
        %v721 = vld [vmem:[%s291 + $0x1a0] sm:$0xff]
        %v722 = vld [vmem:[%s291 + $0x1a8] sm:$0xff]
        %v723 = vld [vmem:[%s291 + $0x1b0] sm:$0xff]
        %v724 = vld [vmem:[%s291 + $0x1b8] sm:$0xff]
        %v725 = vld [vmem:[%s291 + $0x1c0] sm:$0xff]
        %v726 = vld [vmem:[%s291 + $0x1c8] sm:$0xff]
        %v727 = vld [vmem:[%s291 + $0x1d0] sm:$0xff]
        %v728 = vld [vmem:[%s291 + $0x1d8] sm:$0xff]
        %v729 = vld [vmem:[%s291 + $0x1e0] sm:$0xff]
        %v730 = vld [vmem:[%s291 + $0x1e8] sm:$0xff]
        %v731 = vld [vmem:[%s291 + $0x1f0] sm:$0xff]
        %v732 = vld [vmem:[%s291 + $0x1f8] sm:$0xff]
        %v734 = vlaneseq
        %v735 = vshrl.u32 %v734, 7
        %v736 = vsub.s32 0, %v735
        %v737 = vrot.slane %v301, %v736
        %v738 = vlaneseq
        %v739 = vshrl.u32 %v738, 7
        %v740 = vsub.s32 1, %v739
        %v741 = vrot.slane %v301, %v740
        %v742 = vlaneseq
        %v743 = vshrl.u32 %v742, 7
        %v744 = vsub.s32 2, %v743
        %v745 = vrot.slane %v301, %v744
        %v746 = vlaneseq
        %v747 = vshrl.u32 %v746, 7
        %v748 = vsub.s32 3, %v747
        %v749 = vrot.slane %v301, %v748
        %754 = vmatprep.subr.mxu0 %v730
        %755 = vmatpush1.msra.mxu0 %v729
        %756 = vmatprep.subr.mxu0 %v726
        %757 = vmatpush1.msra.mxu0 %v725
        %758 = vmatprep.subr.mxu0 %v722
        %759 = vmatpush1.msra.mxu0 %v721
        %760 = vmatprep.subr.mxu0 %v718
        %761 = vmatpush1.msra.mxu0 %v717
        %762 = vmatprep.subr.mxu0 %v714
        %763 = vmatpush1.msra.mxu0 %v713
        %764 = vmatprep.subr.mxu0 %v710
        %765 = vmatpush1.msra.mxu0 %v709
        %766 = vmatprep.subr.mxu0 %v706
        %767 = vmatpush1.msra.mxu0 %v705
        %768 = vmatprep.subr.mxu0 %v702
        %769 = vmatpush1.msra.mxu0 %v701
        %770 = vmatprep.subr.mxu0 %v698
        %771 = vmatpush1.msra.mxu0 %v697
        %772 = vmatprep.subr.mxu0 %v694
        %773 = vmatpush1.msra.mxu0 %v693
        %774 = vmatprep.subr.mxu0 %v690
        %775 = vmatpush1.msra.mxu0 %v689
        %776 = vmatprep.subr.mxu0 %v686
        %777 = vmatpush1.msra.mxu0 %v685
        %778 = vmatprep.subr.mxu0 %v682
        %779 = vmatpush1.msra.mxu0 %v681
        %780 = vmatprep.subr.mxu0 %v678
        %781 = vmatpush1.msra.mxu0 %v677
        %782 = vmatprep.subr.mxu0 %v674
        %783 = vmatpush1.msra.mxu0 %v673
        %784 = vmatprep.subr.mxu0 %v670
        %785 = vmatpush1.msra.mxu0 %v669
        %786 = vmatprep.subr.mxu0 0.0
        %787 = vmatpush2.msra.mxu0 0.0
        %788 = vmatprep.subr.mxu0 0.0
        %789 = vmatpush2.msra.mxu0 0.0
        %790 = vmatprep.subr.mxu0 0.0
        %791 = vmatpush2.msra.mxu0 0.0
        %792 = vmatprep.subr.mxu0 0.0
        %793 = vmatpush2.msra.mxu0 0.0
        %794 = vmatprep.subr.mxu0 0.0
        %795 = vmatpush2.msra.mxu0 0.0
        %796 = vmatprep.subr.mxu0 0.0
        %797 = vmatpush2.msra.mxu0 0.0
        %798 = vmatprep.subr.mxu0 0.0
        %799 = vmatpush2.msra.mxu0 0.0
        %800 = vmatprep.subr.mxu0 0.0
        %801 = vmatpush2.msra.mxu0 0.0
        %802 = vmatprep.subr.mxu0 0.0
        %803 = vmatpush2.msra.mxu0 0.0
        %804 = vmatprep.subr.mxu0 0.0
        %805 = vmatpush2.msra.mxu0 0.0
        %806 = vmatprep.subr.mxu0 0.0
        %807 = vmatpush2.msra.mxu0 0.0
        %808 = vmatprep.subr.mxu0 0.0
        %809 = vmatpush2.msra.mxu0 0.0
        %810 = vmatprep.subr.mxu0 0.0
        %811 = vmatpush2.msra.mxu0 0.0
        %812 = vmatprep.subr.mxu0 0.0
        %813 = vmatpush2.msra.mxu0 0.0
        %814 = vmatprep.subr.mxu0 0.0
        %815 = vmatpush2.msra.mxu0 0.0
        %816 = vmatprep.subr.mxu0 0.0
        %817 = vmatpush2.msra.mxu0 0.0
        %818 = vmatprep.mubr.f32.mxu0 0.0
        %819 = vmatmul.mubr.f32.gmra.mxu0 %v661
        %v820 = vpop.f32.mrf.mxu0
        %v821 = vadd.f32 %v737, %v820
        %v822 = vpop.f32.mrf.mxu0
        %v823 = vadd.f32 %v741, %v822
        %824 = vmatprep.mubr.f32.mxu0 0.0
        %825 = vmatmul.mubr.f32.gmra.mxu0 %v662
        %v826 = vpop.f32.mrf.mxu0
        %v827 = vadd.f32 %v737, %v826
        %v828 = vpop.f32.mrf.mxu0
        %v829 = vadd.f32 %v741, %v828
        %830 = vmatprep.mubr.f32.mxu0 0.0
        %831 = vmatmul.mubr.f32.gmra.mxu0 %v663
        %v832 = vpop.f32.mrf.mxu0
        %v833 = vadd.f32 %v737, %v832
        %v834 = vpop.f32.mrf.mxu0
        %v835 = vadd.f32 %v741, %v834
        %836 = vmatprep.mubr.f32.mxu0 0.0
        %837 = vmatmul.mubr.f32.gmra.mxu0 %v664
        %v838 = vpop.f32.mrf.mxu0
        %v839 = vadd.f32 %v737, %v838
        %v840 = vpop.f32.mrf.mxu0
        %v841 = vadd.f32 %v741, %v840
        %842 = vmatprep.mubr.f32.mxu0 0.0
        %843 = vmatmul.mubr.f32.gmra.mxu0 %v665
        %v844 = vpop.f32.mrf.mxu0
        %v845 = vadd.f32 %v737, %v844
        %v846 = vpop.f32.mrf.mxu0
        %v847 = vadd.f32 %v741, %v846
        %848 = vmatprep.mubr.f32.mxu0 0.0
        %849 = vmatmul.mubr.f32.gmra.mxu0 %v666
        %v850 = vpop.f32.mrf.mxu0
        %v851 = vadd.f32 %v737, %v850
        %v852 = vpop.f32.mrf.mxu0
        %v853 = vadd.f32 %v741, %v852
        %854 = vmatprep.mubr.f32.mxu0 0.0
        %855 = vmatmul.mubr.f32.gmra.mxu0 %v667
        %v856 = vpop.f32.mrf.mxu0
        %v857 = vadd.f32 %v737, %v856
        %v858 = vpop.f32.mrf.mxu0
        %v859 = vadd.f32 %v741, %v858
        %860 = vmatprep.mubr.f32.mxu0 0.0
        %861 = vmatmul.mubr.f32.gmra.mxu0 %v668
        %v862 = vpop.f32.mrf.mxu0
        %v863 = vadd.f32 %v737, %v862
        %v864 = vpop.f32.mrf.mxu0
        %v865 = vadd.f32 %v741, %v864
        %866 = vdwg.mxu0
        %867 = vmatprep.subr.mxu0 %v732
        %868 = vmatpush1.msra.mxu0 %v731
        %869 = vmatprep.subr.mxu0 %v728
        %870 = vmatpush1.msra.mxu0 %v727
        %871 = vmatprep.subr.mxu0 %v724
        %872 = vmatpush1.msra.mxu0 %v723
        %873 = vmatprep.subr.mxu0 %v720
        %874 = vmatpush1.msra.mxu0 %v719
        %875 = vmatprep.subr.mxu0 %v716
        %876 = vmatpush1.msra.mxu0 %v715
        %877 = vmatprep.subr.mxu0 %v712
        %878 = vmatpush1.msra.mxu0 %v711
        %879 = vmatprep.subr.mxu0 %v708
        %880 = vmatpush1.msra.mxu0 %v707
        %881 = vmatprep.subr.mxu0 %v704
        %882 = vmatpush1.msra.mxu0 %v703
        %883 = vmatprep.subr.mxu0 %v700
        %884 = vmatpush1.msra.mxu0 %v699
        %885 = vmatprep.subr.mxu0 %v696
        %886 = vmatpush1.msra.mxu0 %v695
        %887 = vmatprep.subr.mxu0 %v692
        %888 = vmatpush1.msra.mxu0 %v691
        %889 = vmatprep.subr.mxu0 %v688
        %890 = vmatpush1.msra.mxu0 %v687
        %891 = vmatprep.subr.mxu0 %v684
        %892 = vmatpush1.msra.mxu0 %v683
        %893 = vmatprep.subr.mxu0 %v680
        %894 = vmatpush1.msra.mxu0 %v679
        %895 = vmatprep.subr.mxu0 %v676
        %896 = vmatpush1.msra.mxu0 %v675
        %897 = vmatprep.subr.mxu0 %v672
        %898 = vmatpush1.msra.mxu0 %v671
        %899 = vmatprep.subr.mxu0 0.0
        %900 = vmatpush2.msra.mxu0 0.0
        %901 = vmatprep.subr.mxu0 0.0
        %902 = vmatpush2.msra.mxu0 0.0
        %903 = vmatprep.subr.mxu0 0.0
        %904 = vmatpush2.msra.mxu0 0.0
        %905 = vmatprep.subr.mxu0 0.0
        %906 = vmatpush2.msra.mxu0 0.0
        %907 = vmatprep.subr.mxu0 0.0
        %908 = vmatpush2.msra.mxu0 0.0
        %909 = vmatprep.subr.mxu0 0.0
        %910 = vmatpush2.msra.mxu0 0.0
        %911 = vmatprep.subr.mxu0 0.0
        %912 = vmatpush2.msra.mxu0 0.0
        %913 = vmatprep.subr.mxu0 0.0
        %914 = vmatpush2.msra.mxu0 0.0
        %915 = vmatprep.subr.mxu0 0.0
        %916 = vmatpush2.msra.mxu0 0.0
        %917 = vmatprep.subr.mxu0 0.0
        %918 = vmatpush2.msra.mxu0 0.0
        %919 = vmatprep.subr.mxu0 0.0
        %920 = vmatpush2.msra.mxu0 0.0
        %921 = vmatprep.subr.mxu0 0.0
        %922 = vmatpush2.msra.mxu0 0.0
        %923 = vmatprep.subr.mxu0 0.0
        %924 = vmatpush2.msra.mxu0 0.0
        %925 = vmatprep.subr.mxu0 0.0
        %926 = vmatpush2.msra.mxu0 0.0
        %927 = vmatprep.subr.mxu0 0.0
        %928 = vmatpush2.msra.mxu0 0.0
        %929 = vmatprep.subr.mxu0 0.0
        %930 = vmatpush2.msra.mxu0 0.0
        %931 = vmatprep.mubr.f32.mxu0 0.0
        %932 = vmatmul.mubr.f32.gmra.mxu0 %v661
        %v933 = vpop.f32.mrf.mxu0
        %v934 = vadd.f32 %v745, %v933
        %v935 = vpop.f32.mrf.mxu0
        %v936 = vadd.f32 %v749, %v935
        %937 = vmatprep.mubr.f32.mxu0 0.0
        %938 = vmatmul.mubr.f32.gmra.mxu0 %v662
        %v939 = vpop.f32.mrf.mxu0
        %v940 = vadd.f32 %v745, %v939
        %v941 = vpop.f32.mrf.mxu0
        %v942 = vadd.f32 %v749, %v941
        %943 = vmatprep.mubr.f32.mxu0 0.0
        %944 = vmatmul.mubr.f32.gmra.mxu0 %v663
        %v945 = vpop.f32.mrf.mxu0
        %v946 = vadd.f32 %v745, %v945
        %v947 = vpop.f32.mrf.mxu0
        %v948 = vadd.f32 %v749, %v947
        %949 = vmatprep.mubr.f32.mxu0 0.0
        %950 = vmatmul.mubr.f32.gmra.mxu0 %v664
        %v951 = vpop.f32.mrf.mxu0
        %v952 = vadd.f32 %v745, %v951
        %v953 = vpop.f32.mrf.mxu0
        %v954 = vadd.f32 %v749, %v953
        %955 = vmatprep.mubr.f32.mxu0 0.0
        %956 = vmatmul.mubr.f32.gmra.mxu0 %v665
        %v957 = vpop.f32.mrf.mxu0
        %v958 = vadd.f32 %v745, %v957
        %v959 = vpop.f32.mrf.mxu0
        %v960 = vadd.f32 %v749, %v959
        %961 = vmatprep.mubr.f32.mxu0 0.0
        %962 = vmatmul.mubr.f32.gmra.mxu0 %v666
        %v963 = vpop.f32.mrf.mxu0
        %v964 = vadd.f32 %v745, %v963
        %v965 = vpop.f32.mrf.mxu0
        %v966 = vadd.f32 %v749, %v965
        %967 = vmatprep.mubr.f32.mxu0 0.0
        %968 = vmatmul.mubr.f32.gmra.mxu0 %v667
        %v969 = vpop.f32.mrf.mxu0
        %v970 = vadd.f32 %v745, %v969
        %v971 = vpop.f32.mrf.mxu0
        %v972 = vadd.f32 %v749, %v971
        %973 = vmatprep.mubr.f32.mxu0 0.0
        %974 = vmatmul.mubr.f32.gmra.mxu0 %v668
        %v975 = vpop.f32.mrf.mxu0
        %v976 = vadd.f32 %v745, %v975
        %v977 = vpop.f32.mrf.mxu0
        %v978 = vadd.f32 %v749, %v977
        %979 = vdwg.mxu0
        %980 = vst [vmem:[#allocation3] sm:$0xff] %v821
        %981 = vst [vmem:[#allocation3 + $0x8] sm:$0xff] %v823
        %982 = vst [vmem:[#allocation3 + $0x10] sm:$0xff] %v934
        %983 = vst [vmem:[#allocation3 + $0x18] sm:$0xff] %v936
        %984 = vst [vmem:[#allocation3 + $0x20] sm:$0xff] %v827
        %985 = vst [vmem:[#allocation3 + $0x28] sm:$0xff] %v829
        %986 = vst [vmem:[#allocation3 + $0x30] sm:$0xff] %v940
        %987 = vst [vmem:[#allocation3 + $0x38] sm:$0xff] %v942
        %988 = vst [vmem:[#allocation3 + $0x40] sm:$0xff] %v833
        %989 = vst [vmem:[#allocation3 + $0x48] sm:$0xff] %v835
        %990 = vst [vmem:[#allocation3 + $0x50] sm:$0xff] %v946
        %991 = vst [vmem:[#allocation3 + $0x58] sm:$0xff] %v948
        %992 = vst [vmem:[#allocation3 + $0x60] sm:$0xff] %v839
        %993 = vst [vmem:[#allocation3 + $0x68] sm:$0xff] %v841
        %994 = vst [vmem:[#allocation3 + $0x70] sm:$0xff] %v952
        %995 = vst [vmem:[#allocation3 + $0x78] sm:$0xff] %v954
        %996 = vst [vmem:[#allocation3 + $0x80] sm:$0xff] %v845
        %997 = vst [vmem:[#allocation3 + $0x88] sm:$0xff] %v847
        %998 = vst [vmem:[#allocation3 + $0x90] sm:$0xff] %v958
        %999 = vst [vmem:[#allocation3 + $0x98] sm:$0xff] %v960
        %1000 = vst [vmem:[#allocation3 + $0xa0] sm:$0xff] %v851
        %1001 = vst [vmem:[#allocation3 + $0xa8] sm:$0xff] %v853
        %1002 = vst [vmem:[#allocation3 + $0xb0] sm:$0xff] %v964
        %1003 = vst [vmem:[#allocation3 + $0xb8] sm:$0xff] %v966
        %1004 = vst [vmem:[#allocation3 + $0xc0] sm:$0xff] %v857
        %1005 = vst [vmem:[#allocation3 + $0xc8] sm:$0xff] %v859
        %1006 = vst [vmem:[#allocation3 + $0xd0] sm:$0xff] %v970
        %1007 = vst [vmem:[#allocation3 + $0xd8] sm:$0xff] %v972
        %1008 = vst [vmem:[#allocation3 + $0xe0] sm:$0xff] %v863
        %1009 = vst [vmem:[#allocation3 + $0xe8] sm:$0xff] %v865
        %1010 = vst [vmem:[#allocation3 + $0xf0] sm:$0xff] %v976
        %1011 = vst [vmem:[#allocation3 + $0xf8] sm:$0xff] %v978
      $region56: #{predictor_forward.1} parent=47 // pred_fallthru
        _
      %v1012 = vld [vmem:[#allocation3] sm:$0xff]
      %v1013 = vld [vmem:[#allocation3 + $0x8] sm:$0xff]
      %v1014 = vld [vmem:[#allocation3 + $0x10] sm:$0xff]
      %v1015 = vld [vmem:[#allocation3 + $0x18] sm:$0xff]
      %v1016 = vld [vmem:[%s296] sm:$0xff]
      %v1017 = vld [vmem:[%s296 + $0x8] sm:$0xff]
      %v1018 = vld [vmem:[%s296 + $0x10] sm:$0xff]
      %v1019 = vld [vmem:[%s296 + $0x18] sm:$0xff]
      %v1020 = vld [vmem:[%s296 + $0x20] sm:$0xff]
      %v1021 = vld [vmem:[%s296 + $0x28] sm:$0xff]
      %v1022 = vld [vmem:[%s296 + $0x30] sm:$0xff]
      %v1023 = vld [vmem:[%s296 + $0x38] sm:$0xff]
      %v1024 = vld [vmem:[%s296 + $0x40] sm:$0xff]
      %v1025 = vld [vmem:[%s296 + $0x48] sm:$0xff]
      %v1026 = vld [vmem:[%s296 + $0x50] sm:$0xff]
      %v1027 = vld [vmem:[%s296 + $0x58] sm:$0xff]
      %v1028 = vld [vmem:[%s296 + $0x60] sm:$0xff]
      %v1029 = vld [vmem:[%s296 + $0x68] sm:$0xff]
      %v1030 = vld [vmem:[%s296 + $0x70] sm:$0xff]
      %v1031 = vld [vmem:[%s296 + $0x78] sm:$0xff]
      %v1032 = vld [vmem:[%s296 + $0x80] sm:$0xff]
      %v1033 = vld [vmem:[%s296 + $0x88] sm:$0xff]
      %v1034 = vld [vmem:[%s296 + $0x90] sm:$0xff]
      %v1035 = vld [vmem:[%s296 + $0x98] sm:$0xff]
      %v1036 = vld [vmem:[%s296 + $0xa0] sm:$0xff]
      %v1037 = vld [vmem:[%s296 + $0xa8] sm:$0xff]
      %v1038 = vld [vmem:[%s296 + $0xb0] sm:$0xff]
      %v1039 = vld [vmem:[%s296 + $0xb8] sm:$0xff]
      %v1040 = vld [vmem:[%s296 + $0xc0] sm:$0xff]
      %v1041 = vld [vmem:[%s296 + $0xc8] sm:$0xff]
      %v1042 = vld [vmem:[%s296 + $0xd0] sm:$0xff]
      %v1043 = vld [vmem:[%s296 + $0xd8] sm:$0xff]
      %v1044 = vld [vmem:[%s296 + $0xe0] sm:$0xff]
      %v1045 = vld [vmem:[%s296 + $0xe8] sm:$0xff]
      %v1046 = vld [vmem:[%s296 + $0xf0] sm:$0xff]
      %v1047 = vld [vmem:[%s296 + $0xf8] sm:$0xff]
      %v1048 = vld [vmem:[%s296 + $0x100] sm:$0xff]
      %v1049 = vld [vmem:[%s296 + $0x108] sm:$0xff]
      %v1050 = vld [vmem:[%s296 + $0x110] sm:$0xff]
      %v1051 = vld [vmem:[%s296 + $0x118] sm:$0xff]
      %v1052 = vld [vmem:[%s296 + $0x120] sm:$0xff]
      %v1053 = vld [vmem:[%s296 + $0x128] sm:$0xff]
      %v1054 = vld [vmem:[%s296 + $0x130] sm:$0xff]
      %v1055 = vld [vmem:[%s296 + $0x138] sm:$0xff]
      %v1056 = vld [vmem:[%s296 + $0x140] sm:$0xff]
      %v1057 = vld [vmem:[%s296 + $0x148] sm:$0xff]
      %v1058 = vld [vmem:[%s296 + $0x150] sm:$0xff]
      %v1059 = vld [vmem:[%s296 + $0x158] sm:$0xff]
      %v1060 = vld [vmem:[%s296 + $0x160] sm:$0xff]
      %v1061 = vld [vmem:[%s296 + $0x168] sm:$0xff]
      %v1062 = vld [vmem:[%s296 + $0x170] sm:$0xff]
      %v1063 = vld [vmem:[%s296 + $0x178] sm:$0xff]
      %v1064 = vld [vmem:[%s296 + $0x180] sm:$0xff]
      %v1065 = vld [vmem:[%s296 + $0x188] sm:$0xff]
      %v1066 = vld [vmem:[%s296 + $0x190] sm:$0xff]
      %v1067 = vld [vmem:[%s296 + $0x198] sm:$0xff]
      %v1068 = vld [vmem:[%s296 + $0x1a0] sm:$0xff]
      %v1069 = vld [vmem:[%s296 + $0x1a8] sm:$0xff]
      %v1070 = vld [vmem:[%s296 + $0x1b0] sm:$0xff]
      %v1071 = vld [vmem:[%s296 + $0x1b8] sm:$0xff]
      %v1072 = vld [vmem:[%s296 + $0x1c0] sm:$0xff]
      %v1073 = vld [vmem:[%s296 + $0x1c8] sm:$0xff]
      %v1074 = vld [vmem:[%s296 + $0x1d0] sm:$0xff]
      %v1075 = vld [vmem:[%s296 + $0x1d8] sm:$0xff]
      %v1076 = vld [vmem:[%s296 + $0x1e0] sm:$0xff]
      %v1077 = vld [vmem:[%s296 + $0x1e8] sm:$0xff]
      %v1078 = vld [vmem:[%s296 + $0x1f0] sm:$0xff]
      %v1079 = vld [vmem:[%s296 + $0x1f8] sm:$0xff]
      %1080 = vmatprep.subr.mxu0 %v1077
      %1081 = vmatpush1.msra.mxu0 %v1076
      %1082 = vmatprep.subr.mxu0 %v1073
      %1083 = vmatpush1.msra.mxu0 %v1072
      %1084 = vmatprep.subr.mxu0 %v1069
      %1085 = vmatpush1.msra.mxu0 %v1068
      %1086 = vmatprep.subr.mxu0 %v1065
      %1087 = vmatpush1.msra.mxu0 %v1064
      %1088 = vmatprep.subr.mxu0 %v1061
      %1089 = vmatpush1.msra.mxu0 %v1060
      %1090 = vmatprep.subr.mxu0 %v1057
      %1091 = vmatpush1.msra.mxu0 %v1056
      %1092 = vmatprep.subr.mxu0 %v1053
      %1093 = vmatpush1.msra.mxu0 %v1052
      %1094 = vmatprep.subr.mxu0 %v1049
      %1095 = vmatpush1.msra.mxu0 %v1048
      %1096 = vmatprep.subr.mxu0 %v1045
      %1097 = vmatpush1.msra.mxu0 %v1044
      %1098 = vmatprep.subr.mxu0 %v1041
      %1099 = vmatpush1.msra.mxu0 %v1040
      %1100 = vmatprep.subr.mxu0 %v1037
      %1101 = vmatpush1.msra.mxu0 %v1036
      %1102 = vmatprep.subr.mxu0 %v1033
      %1103 = vmatpush1.msra.mxu0 %v1032
      %1104 = vmatprep.subr.mxu0 %v1029
      %1105 = vmatpush1.msra.mxu0 %v1028
      %1106 = vmatprep.subr.mxu0 %v1025
      %1107 = vmatpush1.msra.mxu0 %v1024
      %1108 = vmatprep.subr.mxu0 %v1021
      %1109 = vmatpush1.msra.mxu0 %v1020
      %1110 = vmatprep.subr.mxu0 %v1017
      %1111 = vmatpush1.msra.mxu0 %v1016
      %1112 = vmatprep.subr.mxu0 0.0
      %1113 = vmatpush2.msra.mxu0 0.0
      %1114 = vmatprep.subr.mxu0 0.0
      %1115 = vmatpush2.msra.mxu0 0.0
      %1116 = vmatprep.subr.mxu0 0.0
      %1117 = vmatpush2.msra.mxu0 0.0
      %1118 = vmatprep.subr.mxu0 0.0
      %1119 = vmatpush2.msra.mxu0 0.0
      %1120 = vmatprep.subr.mxu0 0.0
      %1121 = vmatpush2.msra.mxu0 0.0
      %1122 = vmatprep.subr.mxu0 0.0
      %1123 = vmatpush2.msra.mxu0 0.0
      %1124 = vmatprep.subr.mxu0 0.0
      %1125 = vmatpush2.msra.mxu0 0.0
      %1126 = vmatprep.subr.mxu0 0.0
      %1127 = vmatpush2.msra.mxu0 0.0
      %1128 = vmatprep.subr.mxu0 0.0
      %1129 = vmatpush2.msra.mxu0 0.0
      %1130 = vmatprep.subr.mxu0 0.0
      %1131 = vmatpush2.msra.mxu0 0.0
      %1132 = vmatprep.subr.mxu0 0.0
      %1133 = vmatpush2.msra.mxu0 0.0
      %1134 = vmatprep.subr.mxu0 0.0
      %1135 = vmatpush2.msra.mxu0 0.0
      %1136 = vmatprep.subr.mxu0 0.0
      %1137 = vmatpush2.msra.mxu0 0.0
      %1138 = vmatprep.subr.mxu0 0.0
      %1139 = vmatpush2.msra.mxu0 0.0
      %1140 = vmatprep.subr.mxu0 0.0
      %1141 = vmatpush2.msra.mxu0 0.0
      %1142 = vmatprep.subr.mxu0 0.0
      %1143 = vmatpush2.msra.mxu0 0.0
      %1144 = vmatprep.mubr.f32.mxu0 0.0
      %1145 = vmatmul.mubr.f32.gmra.mxu0 0.0
      %v1146 = vpop.f32.mrf.mxu0
      %v1147 = vadd.f32 0.0, %v1146
      %v1148 = vpop.f32.mrf.mxu0
      %v1149 = vadd.f32 0.0, %v1148
      %1150 = vdwg.mxu0
      %1151 = vmatprep.subr.mxu0 %v1079
      %1152 = vmatpush1.msra.mxu0 %v1078
      %1153 = vmatprep.subr.mxu0 %v1075
      %1154 = vmatpush1.msra.mxu0 %v1074
      %1155 = vmatprep.subr.mxu0 %v1071
      %1156 = vmatpush1.msra.mxu0 %v1070
      %1157 = vmatprep.subr.mxu0 %v1067
      %1158 = vmatpush1.msra.mxu0 %v1066
      %1159 = vmatprep.subr.mxu0 %v1063
      %1160 = vmatpush1.msra.mxu0 %v1062
      %1161 = vmatprep.subr.mxu0 %v1059
      %1162 = vmatpush1.msra.mxu0 %v1058
      %1163 = vmatprep.subr.mxu0 %v1055
      %1164 = vmatpush1.msra.mxu0 %v1054
      %1165 = vmatprep.subr.mxu0 %v1051
      %1166 = vmatpush1.msra.mxu0 %v1050
      %1167 = vmatprep.subr.mxu0 %v1047
      %1168 = vmatpush1.msra.mxu0 %v1046
      %1169 = vmatprep.subr.mxu0 %v1043
      %1170 = vmatpush1.msra.mxu0 %v1042
      %1171 = vmatprep.subr.mxu0 %v1039
      %1172 = vmatpush1.msra.mxu0 %v1038
      %1173 = vmatprep.subr.mxu0 %v1035
      %1174 = vmatpush1.msra.mxu0 %v1034
      %1175 = vmatprep.subr.mxu0 %v1031
      %1176 = vmatpush1.msra.mxu0 %v1030
      %1177 = vmatprep.subr.mxu0 %v1027
      %1178 = vmatpush1.msra.mxu0 %v1026
      %1179 = vmatprep.subr.mxu0 %v1023
      %1180 = vmatpush1.msra.mxu0 %v1022
      %1181 = vmatprep.subr.mxu0 %v1019
      %1182 = vmatpush1.msra.mxu0 %v1018
      %1183 = vmatprep.subr.mxu0 0.0
      %1184 = vmatpush2.msra.mxu0 0.0
      %1185 = vmatprep.subr.mxu0 0.0
      %1186 = vmatpush2.msra.mxu0 0.0
      %1187 = vmatprep.subr.mxu0 0.0
      %1188 = vmatpush2.msra.mxu0 0.0
      %1189 = vmatprep.subr.mxu0 0.0
      %1190 = vmatpush2.msra.mxu0 0.0
      %1191 = vmatprep.subr.mxu0 0.0
      %1192 = vmatpush2.msra.mxu0 0.0
      %1193 = vmatprep.subr.mxu0 0.0
      %1194 = vmatpush2.msra.mxu0 0.0
      %1195 = vmatprep.subr.mxu0 0.0
      %1196 = vmatpush2.msra.mxu0 0.0
      %1197 = vmatprep.subr.mxu0 0.0
      %1198 = vmatpush2.msra.mxu0 0.0
      %1199 = vmatprep.subr.mxu0 0.0
      %1200 = vmatpush2.msra.mxu0 0.0
      %1201 = vmatprep.subr.mxu0 0.0
      %1202 = vmatpush2.msra.mxu0 0.0
      %1203 = vmatprep.subr.mxu0 0.0
      %1204 = vmatpush2.msra.mxu0 0.0
      %1205 = vmatprep.subr.mxu0 0.0
      %1206 = vmatpush2.msra.mxu0 0.0
      %1207 = vmatprep.subr.mxu0 0.0
      %1208 = vmatpush2.msra.mxu0 0.0
      %1209 = vmatprep.subr.mxu0 0.0
      %1210 = vmatpush2.msra.mxu0 0.0
      %1211 = vmatprep.subr.mxu0 0.0
      %1212 = vmatpush2.msra.mxu0 0.0
      %1213 = vmatprep.subr.mxu0 0.0
      %1214 = vmatpush2.msra.mxu0 0.0
      %1215 = vmatprep.mubr.f32.mxu0 0.0
      %1216 = vmatmul.mubr.f32.gmra.mxu0 0.0
      %v1217 = vpop.f32.mrf.mxu0
      %v1218 = vadd.f32 0.0, %v1217
      %v1219 = vpop.f32.mrf.mxu0
      %v1220 = vadd.f32 0.0, %v1219
      %1221 = vdwg.mxu0
      %v1222 = vadd.f32 %v1012, %v1147
      %v1223 = vadd.f32 %v1013, %v1149
      %v1224 = vadd.f32 %v1014, %v1218
      %v1225 = vadd.f32 %v1015, %v1220
      %v1226 = vmul.f32 %v1222, 0.5
      %v1227 = vtanh.pop %v1226
      %v1228 = vmul.f32 %v1227, 0.5
      %v1229 = vadd.f32 %v1228, 0.5
      %v1230 = vmul.f32 %v1223, 0.5
      %v1231 = vtanh.pop %v1230
      %v1232 = vmul.f32 %v1231, 0.5
      %v1233 = vadd.f32 %v1232, 0.5
      %v1234 = vtanh.pop %v1224
      %v1235 = vmul.f32 %v1225, 0.5
      %v1236 = vtanh.pop %v1235
      %v1237 = vmul.f32 %v1236, 0.5
      %v1238 = vadd.f32 %v1237, 0.5
      %v1239 = vmul.f32 %v1233, 0.0
      %v1240 = vmul.f32 %v1229, %v1234
      %v1241 = vadd.f32 %v1239, %v1240
      %v1242 = vtanh.pop %v1241
      %v1243 = vmul.f32 %v1238, %v1242
      %p1244 = scmp.lt.s32.totalorder %s18, 1
      // Predicated region
      $region57: #{predictor_forward.1} parent=47 // pred_check
        %p1245 = pneg %p1244
      $region58: #{predictor_forward.1} parent=47 // pred_check_branch
        %1247 = sbr.rel (%p1245) target = $region60
      $region59: #{predictor_forward.1} parent=47 // pred_region
        %1248 = vst [vmem:[#allocation2] sm:$0xff] %v1243
      $region60: #{predictor_forward.1} parent=47 // pred_fallthru
        _
      %s1249 = scalar_lea.vmem [#allocation3], 32
      %v1250 = vld [vmem:[%s1249] sm:$0xff]
      %v1251 = vld [vmem:[%s1249 + $0x8] sm:$0xff]
      %v1252 = vld [vmem:[%s1249 + $0x10] sm:$0xff]
      %v1253 = vld [vmem:[%s1249 + $0x18] sm:$0xff]
      %v1254 = vld [vmem:[%s296] sm:$0xff]
      %v1255 = vld [vmem:[%s296 + $0x8] sm:$0xff]
      %v1256 = vld [vmem:[%s296 + $0x10] sm:$0xff]
      %v1257 = vld [vmem:[%s296 + $0x18] sm:$0xff]
      %v1258 = vld [vmem:[%s296 + $0x20] sm:$0xff]
      %v1259 = vld [vmem:[%s296 + $0x28] sm:$0xff]
      %v1260 = vld [vmem:[%s296 + $0x30] sm:$0xff]
      %v1261 = vld [vmem:[%s296 + $0x38] sm:$0xff]
      %v1262 = vld [vmem:[%s296 + $0x40] sm:$0xff]
      %v1263 = vld [vmem:[%s296 + $0x48] sm:$0xff]
      %v1264 = vld [vmem:[%s296 + $0x50] sm:$0xff]
      %v1265 = vld [vmem:[%s296 + $0x58] sm:$0xff]
      %v1266 = vld [vmem:[%s296 + $0x60] sm:$0xff]
      %v1267 = vld [vmem:[%s296 + $0x68] sm:$0xff]
      %v1268 = vld [vmem:[%s296 + $0x70] sm:$0xff]
      %v1269 = vld [vmem:[%s296 + $0x78] sm:$0xff]
      %v1270 = vld [vmem:[%s296 + $0x80] sm:$0xff]
      %v1271 = vld [vmem:[%s296 + $0x88] sm:$0xff]
      %v1272 = vld [vmem:[%s296 + $0x90] sm:$0xff]
      %v1273 = vld [vmem:[%s296 + $0x98] sm:$0xff]
      %v1274 = vld [vmem:[%s296 + $0xa0] sm:$0xff]
      %v1275 = vld [vmem:[%s296 + $0xa8] sm:$0xff]
      %v1276 = vld [vmem:[%s296 + $0xb0] sm:$0xff]
      %v1277 = vld [vmem:[%s296 + $0xb8] sm:$0xff]
      %v1278 = vld [vmem:[%s296 + $0xc0] sm:$0xff]
      %v1279 = vld [vmem:[%s296 + $0xc8] sm:$0xff]
      %v1280 = vld [vmem:[%s296 + $0xd0] sm:$0xff]
      %v1281 = vld [vmem:[%s296 + $0xd8] sm:$0xff]
      %v1282 = vld [vmem:[%s296 + $0xe0] sm:$0xff]
      %v1283 = vld [vmem:[%s296 + $0xe8] sm:$0xff]
      %v1284 = vld [vmem:[%s296 + $0xf0] sm:$0xff]
      %v1285 = vld [vmem:[%s296 + $0xf8] sm:$0xff]
      %v1286 = vld [vmem:[%s296 + $0x100] sm:$0xff]
      %v1287 = vld [vmem:[%s296 + $0x108] sm:$0xff]
      %v1288 = vld [vmem:[%s296 + $0x110] sm:$0xff]
      %v1289 = vld [vmem:[%s296 + $0x118] sm:$0xff]
      %v1290 = vld [vmem:[%s296 + $0x120] sm:$0xff]
      %v1291 = vld [vmem:[%s296 + $0x128] sm:$0xff]
      %v1292 = vld [vmem:[%s296 + $0x130] sm:$0xff]
      %v1293 = vld [vmem:[%s296 + $0x138] sm:$0xff]
      %v1294 = vld [vmem:[%s296 + $0x140] sm:$0xff]
      %v1295 = vld [vmem:[%s296 + $0x148] sm:$0xff]
      %v1296 = vld [vmem:[%s296 + $0x150] sm:$0xff]
      %v1297 = vld [vmem:[%s296 + $0x158] sm:$0xff]
      %v1298 = vld [vmem:[%s296 + $0x160] sm:$0xff]
      %v1299 = vld [vmem:[%s296 + $0x168] sm:$0xff]
      %v1300 = vld [vmem:[%s296 + $0x170] sm:$0xff]
      %v1301 = vld [vmem:[%s296 + $0x178] sm:$0xff]
      %v1302 = vld [vmem:[%s296 + $0x180] sm:$0xff]
      %v1303 = vld [vmem:[%s296 + $0x188] sm:$0xff]
      %v1304 = vld [vmem:[%s296 + $0x190] sm:$0xff]
      %v1305 = vld [vmem:[%s296 + $0x198] sm:$0xff]
      %v1306 = vld [vmem:[%s296 + $0x1a0] sm:$0xff]
      %v1307 = vld [vmem:[%s296 + $0x1a8] sm:$0xff]
      %v1308 = vld [vmem:[%s296 + $0x1b0] sm:$0xff]
      %v1309 = vld [vmem:[%s296 + $0x1b8] sm:$0xff]
      %v1310 = vld [vmem:[%s296 + $0x1c0] sm:$0xff]
      %v1311 = vld [vmem:[%s296 + $0x1c8] sm:$0xff]
      %v1312 = vld [vmem:[%s296 + $0x1d0] sm:$0xff]
      %v1313 = vld [vmem:[%s296 + $0x1d8] sm:$0xff]
      %v1314 = vld [vmem:[%s296 + $0x1e0] sm:$0xff]
      %v1315 = vld [vmem:[%s296 + $0x1e8] sm:$0xff]
      %v1316 = vld [vmem:[%s296 + $0x1f0] sm:$0xff]
      %v1317 = vld [vmem:[%s296 + $0x1f8] sm:$0xff]
      %1318 = vmatprep.subr.mxu0 %v1315
      %1319 = vmatpush1.msra.mxu0 %v1314
      %1320 = vmatprep.subr.mxu0 %v1311
      %1321 = vmatpush1.msra.mxu0 %v1310
      %1322 = vmatprep.subr.mxu0 %v1307
      %1323 = vmatpush1.msra.mxu0 %v1306
      %1324 = vmatprep.subr.mxu0 %v1303
      %1325 = vmatpush1.msra.mxu0 %v1302
      %1326 = vmatprep.subr.mxu0 %v1299
      %1327 = vmatpush1.msra.mxu0 %v1298
      %1328 = vmatprep.subr.mxu0 %v1295
      %1329 = vmatpush1.msra.mxu0 %v1294
      %1330 = vmatprep.subr.mxu0 %v1291
      %1331 = vmatpush1.msra.mxu0 %v1290
      %1332 = vmatprep.subr.mxu0 %v1287
      %1333 = vmatpush1.msra.mxu0 %v1286
      %1334 = vmatprep.subr.mxu0 %v1283
      %1335 = vmatpush1.msra.mxu0 %v1282
      %1336 = vmatprep.subr.mxu0 %v1279
      %1337 = vmatpush1.msra.mxu0 %v1278
      %1338 = vmatprep.subr.mxu0 %v1275
      %1339 = vmatpush1.msra.mxu0 %v1274
      %1340 = vmatprep.subr.mxu0 %v1271
      %1341 = vmatpush1.msra.mxu0 %v1270
      %1342 = vmatprep.subr.mxu0 %v1267
      %1343 = vmatpush1.msra.mxu0 %v1266
      %1344 = vmatprep.subr.mxu0 %v1263
      %1345 = vmatpush1.msra.mxu0 %v1262
      %1346 = vmatprep.subr.mxu0 %v1259
      %1347 = vmatpush1.msra.mxu0 %v1258
      %1348 = vmatprep.subr.mxu0 %v1255
      %1349 = vmatpush1.msra.mxu0 %v1254
      %1350 = vmatprep.subr.mxu0 0.0
      %1351 = vmatpush2.msra.mxu0 0.0
      %1352 = vmatprep.subr.mxu0 0.0
      %1353 = vmatpush2.msra.mxu0 0.0
      %1354 = vmatprep.subr.mxu0 0.0
      %1355 = vmatpush2.msra.mxu0 0.0
      %1356 = vmatprep.subr.mxu0 0.0
      %1357 = vmatpush2.msra.mxu0 0.0
      %1358 = vmatprep.subr.mxu0 0.0
      %1359 = vmatpush2.msra.mxu0 0.0
      %1360 = vmatprep.subr.mxu0 0.0
      %1361 = vmatpush2.msra.mxu0 0.0
      %1362 = vmatprep.subr.mxu0 0.0
      %1363 = vmatpush2.msra.mxu0 0.0
      %1364 = vmatprep.subr.mxu0 0.0
      %1365 = vmatpush2.msra.mxu0 0.0
      %1366 = vmatprep.subr.mxu0 0.0
      %1367 = vmatpush2.msra.mxu0 0.0
      %1368 = vmatprep.subr.mxu0 0.0
      %1369 = vmatpush2.msra.mxu0 0.0
      %1370 = vmatprep.subr.mxu0 0.0
      %1371 = vmatpush2.msra.mxu0 0.0
      %1372 = vmatprep.subr.mxu0 0.0
      %1373 = vmatpush2.msra.mxu0 0.0
      %1374 = vmatprep.subr.mxu0 0.0
      %1375 = vmatpush2.msra.mxu0 0.0
      %1376 = vmatprep.subr.mxu0 0.0
      %1377 = vmatpush2.msra.mxu0 0.0
      %1378 = vmatprep.subr.mxu0 0.0
      %1379 = vmatpush2.msra.mxu0 0.0
      %1380 = vmatprep.subr.mxu0 0.0
      %1381 = vmatpush2.msra.mxu0 0.0
      %1382 = vmatprep.mubr.f32.mxu0 0.0
      %1383 = vmatmul.mubr.f32.gmra.mxu0 %v1243
      %v1384 = vpop.f32.mrf.mxu0
      %v1385 = vadd.f32 0.0, %v1384
      %v1386 = vpop.f32.mrf.mxu0
      %v1387 = vadd.f32 0.0, %v1386
      %1388 = vdwg.mxu0
      %1389 = vmatprep.subr.mxu0 %v1317
      %1390 = vmatpush1.msra.mxu0 %v1316
      %1391 = vmatprep.subr.mxu0 %v1313
      %1392 = vmatpush1.msra.mxu0 %v1312
      %1393 = vmatprep.subr.mxu0 %v1309
      %1394 = vmatpush1.msra.mxu0 %v1308
      %1395 = vmatprep.subr.mxu0 %v1305
      %1396 = vmatpush1.msra.mxu0 %v1304
      %1397 = vmatprep.subr.mxu0 %v1301
      %1398 = vmatpush1.msra.mxu0 %v1300
      %1399 = vmatprep.subr.mxu0 %v1297
      %1400 = vmatpush1.msra.mxu0 %v1296
      %1401 = vmatprep.subr.mxu0 %v1293
      %1402 = vmatpush1.msra.mxu0 %v1292
      %1403 = vmatprep.subr.mxu0 %v1289
      %1404 = vmatpush1.msra.mxu0 %v1288
      %1405 = vmatprep.subr.mxu0 %v1285
      %1406 = vmatpush1.msra.mxu0 %v1284
      %1407 = vmatprep.subr.mxu0 %v1281
      %1408 = vmatpush1.msra.mxu0 %v1280
      %1409 = vmatprep.subr.mxu0 %v1277
      %1410 = vmatpush1.msra.mxu0 %v1276
      %1411 = vmatprep.subr.mxu0 %v1273
      %1412 = vmatpush1.msra.mxu0 %v1272
      %1413 = vmatprep.subr.mxu0 %v1269
      %1414 = vmatpush1.msra.mxu0 %v1268
      %1415 = vmatprep.subr.mxu0 %v1265
      %1416 = vmatpush1.msra.mxu0 %v1264
      %1417 = vmatprep.subr.mxu0 %v1261
      %1418 = vmatpush1.msra.mxu0 %v1260
      %1419 = vmatprep.subr.mxu0 %v1257
      %1420 = vmatpush1.msra.mxu0 %v1256
      %1421 = vmatprep.subr.mxu0 0.0
      %1422 = vmatpush2.msra.mxu0 0.0
      %1423 = vmatprep.subr.mxu0 0.0
      %1424 = vmatpush2.msra.mxu0 0.0
      %1425 = vmatprep.subr.mxu0 0.0
      %1426 = vmatpush2.msra.mxu0 0.0
      %1427 = vmatprep.subr.mxu0 0.0
      %1428 = vmatpush2.msra.mxu0 0.0
      %1429 = vmatprep.subr.mxu0 0.0
      %1430 = vmatpush2.msra.mxu0 0.0
      %1431 = vmatprep.subr.mxu0 0.0
      %1432 = vmatpush2.msra.mxu0 0.0
      %1433 = vmatprep.subr.mxu0 0.0
      %1434 = vmatpush2.msra.mxu0 0.0
      %1435 = vmatprep.subr.mxu0 0.0
      %1436 = vmatpush2.msra.mxu0 0.0
      %1437 = vmatprep.subr.mxu0 0.0
      %1438 = vmatpush2.msra.mxu0 0.0
      %1439 = vmatprep.subr.mxu0 0.0
      %1440 = vmatpush2.msra.mxu0 0.0
      %1441 = vmatprep.subr.mxu0 0.0
      %1442 = vmatpush2.msra.mxu0 0.0
      %1443 = vmatprep.subr.mxu0 0.0
      %1444 = vmatpush2.msra.mxu0 0.0
      %1445 = vmatprep.subr.mxu0 0.0
      %1446 = vmatpush2.msra.mxu0 0.0
      %1447 = vmatprep.subr.mxu0 0.0
      %1448 = vmatpush2.msra.mxu0 0.0
      %1449 = vmatprep.subr.mxu0 0.0
      %1450 = vmatpush2.msra.mxu0 0.0
      %1451 = vmatprep.subr.mxu0 0.0
      %1452 = vmatpush2.msra.mxu0 0.0
      %1453 = vmatprep.mubr.f32.mxu0 0.0
      %1454 = vmatmul.mubr.f32.gmra.mxu0 %v1243
      %v1455 = vpop.f32.mrf.mxu0
      %v1456 = vadd.f32 0.0, %v1455
      %v1457 = vpop.f32.mrf.mxu0
      %v1458 = vadd.f32 0.0, %v1457
      %1459 = vdwg.mxu0
      %v1460 = vadd.f32 %v1250, %v1385
      %v1461 = vadd.f32 %v1251, %v1387
      %v1462 = vadd.f32 %v1252, %v1456
      %v1463 = vadd.f32 %v1253, %v1458
      %v1464 = vmul.f32 %v1460, 0.5
      %v1465 = vtanh.pop %v1464
      %v1466 = vmul.f32 %v1465, 0.5
      %v1467 = vadd.f32 %v1466, 0.5
      %v1468 = vmul.f32 %v1461, 0.5
      %v1469 = vtanh.pop %v1468
      %v1470 = vmul.f32 %v1469, 0.5
      %v1471 = vadd.f32 %v1470, 0.5
      %v1472 = vtanh.pop %v1462
      %v1473 = vmul.f32 %v1463, 0.5
      %v1474 = vtanh.pop %v1473
      %v1475 = vmul.f32 %v1474, 0.5
      %v1476 = vadd.f32 %v1475, 0.5
      %v1477 = vmul.f32 %v1471, %v1241
      %v1478 = vmul.f32 %v1467, %v1472
      %v1479 = vadd.f32 %v1477, %v1478
      %v1480 = vtanh.pop %v1479
      %v1481 = vmul.f32 %v1476, %v1480
      // Predicated region
      $region61: #{predictor_forward.1} parent=47 // pred_check
        %p1482 = pneg %p1244
      $region62: #{predictor_forward.1} parent=47 // pred_check_branch
        %1484 = sbr.rel (%p1482) target = $region64
      $region63: #{predictor_forward.1} parent=47 // pred_region
        %s1485 = scalar_lea.vmem [#allocation2], 8
        %1486 = vst [vmem:[%s1485] sm:$0xff] %v1481
      $region64: #{predictor_forward.1} parent=47 // pred_fallthru
        _
      %s1487 = scalar_lea.vmem [#allocation3], 64
      %v1488 = vld [vmem:[%s1487] sm:$0xff]
      %v1489 = vld [vmem:[%s1487 + $0x8] sm:$0xff]
      %v1490 = vld [vmem:[%s1487 + $0x10] sm:$0xff]
      %v1491 = vld [vmem:[%s1487 + $0x18] sm:$0xff]
      %v1492 = vld [vmem:[%s296] sm:$0xff]
      %v1493 = vld [vmem:[%s296 + $0x8] sm:$0xff]
      %v1494 = vld [vmem:[%s296 + $0x10] sm:$0xff]
      %v1495 = vld [vmem:[%s296 + $0x18] sm:$0xff]
      %v1496 = vld [vmem:[%s296 + $0x20] sm:$0xff]
      %v1497 = vld [vmem:[%s296 + $0x28] sm:$0xff]
      %v1498 = vld [vmem:[%s296 + $0x30] sm:$0xff]
      %v1499 = vld [vmem:[%s296 + $0x38] sm:$0xff]
      %v1500 = vld [vmem:[%s296 + $0x40] sm:$0xff]
      %v1501 = vld [vmem:[%s296 + $0x48] sm:$0xff]
      %v1502 = vld [vmem:[%s296 + $0x50] sm:$0xff]
      %v1503 = vld [vmem:[%s296 + $0x58] sm:$0xff]
      %v1504 = vld [vmem:[%s296 + $0x60] sm:$0xff]
      %v1505 = vld [vmem:[%s296 + $0x68] sm:$0xff]
      %v1506 = vld [vmem:[%s296 + $0x70] sm:$0xff]
      %v1507 = vld [vmem:[%s296 + $0x78] sm:$0xff]
      %v1508 = vld [vmem:[%s296 + $0x80] sm:$0xff]
      %v1509 = vld [vmem:[%s296 + $0x88] sm:$0xff]
      %v1510 = vld [vmem:[%s296 + $0x90] sm:$0xff]
      %v1511 = vld [vmem:[%s296 + $0x98] sm:$0xff]
      %v1512 = vld [vmem:[%s296 + $0xa0] sm:$0xff]
      %v1513 = vld [vmem:[%s296 + $0xa8] sm:$0xff]
      %v1514 = vld [vmem:[%s296 + $0xb0] sm:$0xff]
      %v1515 = vld [vmem:[%s296 + $0xb8] sm:$0xff]
      %v1516 = vld [vmem:[%s296 + $0xc0] sm:$0xff]
      %v1517 = vld [vmem:[%s296 + $0xc8] sm:$0xff]
      %v1518 = vld [vmem:[%s296 + $0xd0] sm:$0xff]
      %v1519 = vld [vmem:[%s296 + $0xd8] sm:$0xff]
      %v1520 = vld [vmem:[%s296 + $0xe0] sm:$0xff]
      %v1521 = vld [vmem:[%s296 + $0xe8] sm:$0xff]
      %v1522 = vld [vmem:[%s296 + $0xf0] sm:$0xff]
      %v1523 = vld [vmem:[%s296 + $0xf8] sm:$0xff]
      %v1524 = vld [vmem:[%s296 + $0x100] sm:$0xff]
      %v1525 = vld [vmem:[%s296 + $0x108] sm:$0xff]
      %v1526 = vld [vmem:[%s296 + $0x110] sm:$0xff]
      %v1527 = vld [vmem:[%s296 + $0x118] sm:$0xff]
      %v1528 = vld [vmem:[%s296 + $0x120] sm:$0xff]
      %v1529 = vld [vmem:[%s296 + $0x128] sm:$0xff]
      %v1530 = vld [vmem:[%s296 + $0x130] sm:$0xff]
      %v1531 = vld [vmem:[%s296 + $0x138] sm:$0xff]
      %v1532 = vld [vmem:[%s296 + $0x140] sm:$0xff]
      %v1533 = vld [vmem:[%s296 + $0x148] sm:$0xff]
      %v1534 = vld [vmem:[%s296 + $0x150] sm:$0xff]
      %v1535 = vld [vmem:[%s296 + $0x158] sm:$0xff]
      %v1536 = vld [vmem:[%s296 + $0x160] sm:$0xff]
      %v1537 = vld [vmem:[%s296 + $0x168] sm:$0xff]
      %v1538 = vld [vmem:[%s296 + $0x170] sm:$0xff]
      %v1539 = vld [vmem:[%s296 + $0x178] sm:$0xff]
      %v1540 = vld [vmem:[%s296 + $0x180] sm:$0xff]
      %v1541 = vld [vmem:[%s296 + $0x188] sm:$0xff]
      %v1542 = vld [vmem:[%s296 + $0x190] sm:$0xff]
      %v1543 = vld [vmem:[%s296 + $0x198] sm:$0xff]
      %v1544 = vld [vmem:[%s296 + $0x1a0] sm:$0xff]
      %v1545 = vld [vmem:[%s296 + $0x1a8] sm:$0xff]
      %v1546 = vld [vmem:[%s296 + $0x1b0] sm:$0xff]
      %v1547 = vld [vmem:[%s296 + $0x1b8] sm:$0xff]
      %v1548 = vld [vmem:[%s296 + $0x1c0] sm:$0xff]
      %v1549 = vld [vmem:[%s296 + $0x1c8] sm:$0xff]
      %v1550 = vld [vmem:[%s296 + $0x1d0] sm:$0xff]
      %v1551 = vld [vmem:[%s296 + $0x1d8] sm:$0xff]
      %v1552 = vld [vmem:[%s296 + $0x1e0] sm:$0xff]
      %v1553 = vld [vmem:[%s296 + $0x1e8] sm:$0xff]
      %v1554 = vld [vmem:[%s296 + $0x1f0] sm:$0xff]
      %v1555 = vld [vmem:[%s296 + $0x1f8] sm:$0xff]
      %1556 = vmatprep.subr.mxu0 %v1553
      %1557 = vmatpush1.msra.mxu0 %v1552
      %1558 = vmatprep.subr.mxu0 %v1549
      %1559 = vmatpush1.msra.mxu0 %v1548
      %1560 = vmatprep.subr.mxu0 %v1545
      %1561 = vmatpush1.msra.mxu0 %v1544
      %1562 = vmatprep.subr.mxu0 %v1541
      %1563 = vmatpush1.msra.mxu0 %v1540
      %1564 = vmatprep.subr.mxu0 %v1537
      %1565 = vmatpush1.msra.mxu0 %v1536
      %1566 = vmatprep.subr.mxu0 %v1533
      %1567 = vmatpush1.msra.mxu0 %v1532
      %1568 = vmatprep.subr.mxu0 %v1529
      %1569 = vmatpush1.msra.mxu0 %v1528
      %1570 = vmatprep.subr.mxu0 %v1525
      %1571 = vmatpush1.msra.mxu0 %v1524
      %1572 = vmatprep.subr.mxu0 %v1521
      %1573 = vmatpush1.msra.mxu0 %v1520
      %1574 = vmatprep.subr.mxu0 %v1517
      %1575 = vmatpush1.msra.mxu0 %v1516
      %1576 = vmatprep.subr.mxu0 %v1513
      %1577 = vmatpush1.msra.mxu0 %v1512
      %1578 = vmatprep.subr.mxu0 %v1509
      %1579 = vmatpush1.msra.mxu0 %v1508
      %1580 = vmatprep.subr.mxu0 %v1505
      %1581 = vmatpush1.msra.mxu0 %v1504
      %1582 = vmatprep.subr.mxu0 %v1501
      %1583 = vmatpush1.msra.mxu0 %v1500
      %1584 = vmatprep.subr.mxu0 %v1497
      %1585 = vmatpush1.msra.mxu0 %v1496
      %1586 = vmatprep.subr.mxu0 %v1493
      %1587 = vmatpush1.msra.mxu0 %v1492
      %1588 = vmatprep.subr.mxu0 0.0
      %1589 = vmatpush2.msra.mxu0 0.0
      %1590 = vmatprep.subr.mxu0 0.0
      %1591 = vmatpush2.msra.mxu0 0.0
      %1592 = vmatprep.subr.mxu0 0.0
      %1593 = vmatpush2.msra.mxu0 0.0
      %1594 = vmatprep.subr.mxu0 0.0
      %1595 = vmatpush2.msra.mxu0 0.0
      %1596 = vmatprep.subr.mxu0 0.0
      %1597 = vmatpush2.msra.mxu0 0.0
      %1598 = vmatprep.subr.mxu0 0.0
      %1599 = vmatpush2.msra.mxu0 0.0
      %1600 = vmatprep.subr.mxu0 0.0
      %1601 = vmatpush2.msra.mxu0 0.0
      %1602 = vmatprep.subr.mxu0 0.0
      %1603 = vmatpush2.msra.mxu0 0.0
      %1604 = vmatprep.subr.mxu0 0.0
      %1605 = vmatpush2.msra.mxu0 0.0
      %1606 = vmatprep.subr.mxu0 0.0
      %1607 = vmatpush2.msra.mxu0 0.0
      %1608 = vmatprep.subr.mxu0 0.0
      %1609 = vmatpush2.msra.mxu0 0.0
      %1610 = vmatprep.subr.mxu0 0.0
      %1611 = vmatpush2.msra.mxu0 0.0
      %1612 = vmatprep.subr.mxu0 0.0
      %1613 = vmatpush2.msra.mxu0 0.0
      %1614 = vmatprep.subr.mxu0 0.0
      %1615 = vmatpush2.msra.mxu0 0.0
      %1616 = vmatprep.subr.mxu0 0.0
      %1617 = vmatpush2.msra.mxu0 0.0
      %1618 = vmatprep.subr.mxu0 0.0
      %1619 = vmatpush2.msra.mxu0 0.0
      %1620 = vmatprep.mubr.f32.mxu0 0.0
      %1621 = vmatmul.mubr.f32.gmra.mxu0 %v1481
      %v1622 = vpop.f32.mrf.mxu0
      %v1623 = vadd.f32 0.0, %v1622
      %v1624 = vpop.f32.mrf.mxu0
      %v1625 = vadd.f32 0.0, %v1624
      %1626 = vdwg.mxu0
      %1627 = vmatprep.subr.mxu0 %v1555
      %1628 = vmatpush1.msra.mxu0 %v1554
      %1629 = vmatprep.subr.mxu0 %v1551
      %1630 = vmatpush1.msra.mxu0 %v1550
      %1631 = vmatprep.subr.mxu0 %v1547
      %1632 = vmatpush1.msra.mxu0 %v1546
      %1633 = vmatprep.subr.mxu0 %v1543
      %1634 = vmatpush1.msra.mxu0 %v1542
      %1635 = vmatprep.subr.mxu0 %v1539
      %1636 = vmatpush1.msra.mxu0 %v1538
      %1637 = vmatprep.subr.mxu0 %v1535
      %1638 = vmatpush1.msra.mxu0 %v1534
      %1639 = vmatprep.subr.mxu0 %v1531
      %1640 = vmatpush1.msra.mxu0 %v1530
      %1641 = vmatprep.subr.mxu0 %v1527
      %1642 = vmatpush1.msra.mxu0 %v1526
      %1643 = vmatprep.subr.mxu0 %v1523
      %1644 = vmatpush1.msra.mxu0 %v1522
      %1645 = vmatprep.subr.mxu0 %v1519
      %1646 = vmatpush1.msra.mxu0 %v1518
      %1647 = vmatprep.subr.mxu0 %v1515
      %1648 = vmatpush1.msra.mxu0 %v1514
      %1649 = vmatprep.subr.mxu0 %v1511
      %1650 = vmatpush1.msra.mxu0 %v1510
      %1651 = vmatprep.subr.mxu0 %v1507
      %1652 = vmatpush1.msra.mxu0 %v1506
      %1653 = vmatprep.subr.mxu0 %v1503
      %1654 = vmatpush1.msra.mxu0 %v1502
      %1655 = vmatprep.subr.mxu0 %v1499
      %1656 = vmatpush1.msra.mxu0 %v1498
      %1657 = vmatprep.subr.mxu0 %v1495
      %1658 = vmatpush1.msra.mxu0 %v1494
      %1659 = vmatprep.subr.mxu0 0.0
      %1660 = vmatpush2.msra.mxu0 0.0
      %1661 = vmatprep.subr.mxu0 0.0
      %1662 = vmatpush2.msra.mxu0 0.0
      %1663 = vmatprep.subr.mxu0 0.0
      %1664 = vmatpush2.msra.mxu0 0.0
      %1665 = vmatprep.subr.mxu0 0.0
      %1666 = vmatpush2.msra.mxu0 0.0
      %1667 = vmatprep.subr.mxu0 0.0
      %1668 = vmatpush2.msra.mxu0 0.0
      %1669 = vmatprep.subr.mxu0 0.0
      %1670 = vmatpush2.msra.mxu0 0.0
      %1671 = vmatprep.subr.mxu0 0.0
      %1672 = vmatpush2.msra.mxu0 0.0
      %1673 = vmatprep.subr.mxu0 0.0
      %1674 = vmatpush2.msra.mxu0 0.0
      %1675 = vmatprep.subr.mxu0 0.0
      %1676 = vmatpush2.msra.mxu0 0.0
      %1677 = vmatprep.subr.mxu0 0.0
      %1678 = vmatpush2.msra.mxu0 0.0
      %1679 = vmatprep.subr.mxu0 0.0
      %1680 = vmatpush2.msra.mxu0 0.0
      %1681 = vmatprep.subr.mxu0 0.0
      %1682 = vmatpush2.msra.mxu0 0.0
      %1683 = vmatprep.subr.mxu0 0.0
      %1684 = vmatpush2.msra.mxu0 0.0
      %1685 = vmatprep.subr.mxu0 0.0
      %1686 = vmatpush2.msra.mxu0 0.0
      %1687 = vmatprep.subr.mxu0 0.0
      %1688 = vmatpush2.msra.mxu0 0.0
      %1689 = vmatprep.subr.mxu0 0.0
      %1690 = vmatpush2.msra.mxu0 0.0
      %1691 = vmatprep.mubr.f32.mxu0 0.0
      %1692 = vmatmul.mubr.f32.gmra.mxu0 %v1481
      %v1693 = vpop.f32.mrf.mxu0
      %v1694 = vadd.f32 0.0, %v1693
      %v1695 = vpop.f32.mrf.mxu0
      %v1696 = vadd.f32 0.0, %v1695
      %1697 = vdwg.mxu0
      %v1698 = vadd.f32 %v1488, %v1623
      %v1699 = vadd.f32 %v1489, %v1625
      %v1700 = vadd.f32 %v1490, %v1694
      %v1701 = vadd.f32 %v1491, %v1696
      %v1702 = vmul.f32 %v1698, 0.5
      %v1703 = vtanh.pop %v1702
      %v1704 = vmul.f32 %v1703, 0.5
      %v1705 = vadd.f32 %v1704, 0.5
      %v1706 = vmul.f32 %v1699, 0.5
      %v1707 = vtanh.pop %v1706
      %v1708 = vmul.f32 %v1707, 0.5
      %v1709 = vadd.f32 %v1708, 0.5
      %v1710 = vtanh.pop %v1700
      %v1711 = vmul.f32 %v1701, 0.5
      %v1712 = vtanh.pop %v1711
      %v1713 = vmul.f32 %v1712, 0.5
      %v1714 = vadd.f32 %v1713, 0.5
      %v1715 = vmul.f32 %v1709, %v1479
      %v1716 = vmul.f32 %v1705, %v1710
      %v1717 = vadd.f32 %v1715, %v1716
      %v1718 = vtanh.pop %v1717
      %v1719 = vmul.f32 %v1714, %v1718
      // Predicated region
      $region65: #{predictor_forward.1} parent=47 // pred_check
        %p1720 = pneg %p1244
      $region66: #{predictor_forward.1} parent=47 // pred_check_branch
        %1722 = sbr.rel (%p1720) target = $region68
      $region67: #{predictor_forward.1} parent=47 // pred_region
        %s1723 = scalar_lea.vmem [#allocation2], 16
        %1724 = vst [vmem:[%s1723] sm:$0xff] %v1719
      $region68: #{predictor_forward.1} parent=47 // pred_fallthru
        _
      %s1725 = scalar_lea.vmem [#allocation3], 96
      %v1726 = vld [vmem:[%s1725] sm:$0xff]
      %v1727 = vld [vmem:[%s1725 + $0x8] sm:$0xff]
      %v1728 = vld [vmem:[%s1725 + $0x10] sm:$0xff]
      %v1729 = vld [vmem:[%s1725 + $0x18] sm:$0xff]
      %v1730 = vld [vmem:[%s296] sm:$0xff]
      %v1731 = vld [vmem:[%s296 + $0x8] sm:$0xff]
      %v1732 = vld [vmem:[%s296 + $0x10] sm:$0xff]
      %v1733 = vld [vmem:[%s296 + $0x18] sm:$0xff]
      %v1734 = vld [vmem:[%s296 + $0x20] sm:$0xff]
      %v1735 = vld [vmem:[%s296 + $0x28] sm:$0xff]
      %v1736 = vld [vmem:[%s296 + $0x30] sm:$0xff]
      %v1737 = vld [vmem:[%s296 + $0x38] sm:$0xff]
      %v1738 = vld [vmem:[%s296 + $0x40] sm:$0xff]
      %v1739 = vld [vmem:[%s296 + $0x48] sm:$0xff]
      %v1740 = vld [vmem:[%s296 + $0x50] sm:$0xff]
      %v1741 = vld [vmem:[%s296 + $0x58] sm:$0xff]
      %v1742 = vld [vmem:[%s296 + $0x60] sm:$0xff]
      %v1743 = vld [vmem:[%s296 + $0x68] sm:$0xff]
      %v1744 = vld [vmem:[%s296 + $0x70] sm:$0xff]
      %v1745 = vld [vmem:[%s296 + $0x78] sm:$0xff]
      %v1746 = vld [vmem:[%s296 + $0x80] sm:$0xff]
      %v1747 = vld [vmem:[%s296 + $0x88] sm:$0xff]
      %v1748 = vld [vmem:[%s296 + $0x90] sm:$0xff]
      %v1749 = vld [vmem:[%s296 + $0x98] sm:$0xff]
      %v1750 = vld [vmem:[%s296 + $0xa0] sm:$0xff]
      %v1751 = vld [vmem:[%s296 + $0xa8] sm:$0xff]
      %v1752 = vld [vmem:[%s296 + $0xb0] sm:$0xff]
      %v1753 = vld [vmem:[%s296 + $0xb8] sm:$0xff]
      %v1754 = vld [vmem:[%s296 + $0xc0] sm:$0xff]
      %v1755 = vld [vmem:[%s296 + $0xc8] sm:$0xff]
      %v1756 = vld [vmem:[%s296 + $0xd0] sm:$0xff]
      %v1757 = vld [vmem:[%s296 + $0xd8] sm:$0xff]
      %v1758 = vld [vmem:[%s296 + $0xe0] sm:$0xff]
      %v1759 = vld [vmem:[%s296 + $0xe8] sm:$0xff]
      %v1760 = vld [vmem:[%s296 + $0xf0] sm:$0xff]
      %v1761 = vld [vmem:[%s296 + $0xf8] sm:$0xff]
      %v1762 = vld [vmem:[%s296 + $0x100] sm:$0xff]
      %v1763 = vld [vmem:[%s296 + $0x108] sm:$0xff]
      %v1764 = vld [vmem:[%s296 + $0x110] sm:$0xff]
      %v1765 = vld [vmem:[%s296 + $0x118] sm:$0xff]
      %v1766 = vld [vmem:[%s296 + $0x120] sm:$0xff]
      %v1767 = vld [vmem:[%s296 + $0x128] sm:$0xff]
      %v1768 = vld [vmem:[%s296 + $0x130] sm:$0xff]
      %v1769 = vld [vmem:[%s296 + $0x138] sm:$0xff]
      %v1770 = vld [vmem:[%s296 + $0x140] sm:$0xff]
      %v1771 = vld [vmem:[%s296 + $0x148] sm:$0xff]
      %v1772 = vld [vmem:[%s296 + $0x150] sm:$0xff]
      %v1773 = vld [vmem:[%s296 + $0x158] sm:$0xff]
      %v1774 = vld [vmem:[%s296 + $0x160] sm:$0xff]
      %v1775 = vld [vmem:[%s296 + $0x168] sm:$0xff]
      %v1776 = vld [vmem:[%s296 + $0x170] sm:$0xff]
      %v1777 = vld [vmem:[%s296 + $0x178] sm:$0xff]
      %v1778 = vld [vmem:[%s296 + $0x180] sm:$0xff]
      %v1779 = vld [vmem:[%s296 + $0x188] sm:$0xff]
      %v1780 = vld [vmem:[%s296 + $0x190] sm:$0xff]
      %v1781 = vld [vmem:[%s296 + $0x198] sm:$0xff]
      %v1782 = vld [vmem:[%s296 + $0x1a0] sm:$0xff]
      %v1783 = vld [vmem:[%s296 + $0x1a8] sm:$0xff]
      %v1784 = vld [vmem:[%s296 + $0x1b0] sm:$0xff]
      %v1785 = vld [vmem:[%s296 + $0x1b8] sm:$0xff]
      %v1786 = vld [vmem:[%s296 + $0x1c0] sm:$0xff]
      %v1787 = vld [vmem:[%s296 + $0x1c8] sm:$0xff]
      %v1788 = vld [vmem:[%s296 + $0x1d0] sm:$0xff]
      %v1789 = vld [vmem:[%s296 + $0x1d8] sm:$0xff]
      %v1790 = vld [vmem:[%s296 + $0x1e0] sm:$0xff]
      %v1791 = vld [vmem:[%s296 + $0x1e8] sm:$0xff]
      %v1792 = vld [vmem:[%s296 + $0x1f0] sm:$0xff]
      %v1793 = vld [vmem:[%s296 + $0x1f8] sm:$0xff]
      %1794 = vmatprep.subr.mxu0 %v1791
      %1795 = vmatpush1.msra.mxu0 %v1790
      %1796 = vmatprep.subr.mxu0 %v1787
      %1797 = vmatpush1.msra.mxu0 %v1786
      %1798 = vmatprep.subr.mxu0 %v1783
      %1799 = vmatpush1.msra.mxu0 %v1782
      %1800 = vmatprep.subr.mxu0 %v1779
      %1801 = vmatpush1.msra.mxu0 %v1778
      %1802 = vmatprep.subr.mxu0 %v1775
      %1803 = vmatpush1.msra.mxu0 %v1774
      %1804 = vmatprep.subr.mxu0 %v1771
      %1805 = vmatpush1.msra.mxu0 %v1770
      %1806 = vmatprep.subr.mxu0 %v1767
      %1807 = vmatpush1.msra.mxu0 %v1766
      %1808 = vmatprep.subr.mxu0 %v1763
      %1809 = vmatpush1.msra.mxu0 %v1762
      %1810 = vmatprep.subr.mxu0 %v1759
      %1811 = vmatpush1.msra.mxu0 %v1758
      %1812 = vmatprep.subr.mxu0 %v1755
      %1813 = vmatpush1.msra.mxu0 %v1754
      %1814 = vmatprep.subr.mxu0 %v1751
      %1815 = vmatpush1.msra.mxu0 %v1750
      %1816 = vmatprep.subr.mxu0 %v1747
      %1817 = vmatpush1.msra.mxu0 %v1746
      %1818 = vmatprep.subr.mxu0 %v1743
      %1819 = vmatpush1.msra.mxu0 %v1742
      %1820 = vmatprep.subr.mxu0 %v1739
      %1821 = vmatpush1.msra.mxu0 %v1738
      %1822 = vmatprep.subr.mxu0 %v1735
      %1823 = vmatpush1.msra.mxu0 %v1734
      %1824 = vmatprep.subr.mxu0 %v1731
      %1825 = vmatpush1.msra.mxu0 %v1730
      %1826 = vmatprep.subr.mxu0 0.0
      %1827 = vmatpush2.msra.mxu0 0.0
      %1828 = vmatprep.subr.mxu0 0.0
      %1829 = vmatpush2.msra.mxu0 0.0
      %1830 = vmatprep.subr.mxu0 0.0
      %1831 = vmatpush2.msra.mxu0 0.0
      %1832 = vmatprep.subr.mxu0 0.0
      %1833 = vmatpush2.msra.mxu0 0.0
      %1834 = vmatprep.subr.mxu0 0.0
      %1835 = vmatpush2.msra.mxu0 0.0
      %1836 = vmatprep.subr.mxu0 0.0
      %1837 = vmatpush2.msra.mxu0 0.0
      %1838 = vmatprep.subr.mxu0 0.0
      %1839 = vmatpush2.msra.mxu0 0.0
      %1840 = vmatprep.subr.mxu0 0.0
      %1841 = vmatpush2.msra.mxu0 0.0
      %1842 = vmatprep.subr.mxu0 0.0
      %1843 = vmatpush2.msra.mxu0 0.0
      %1844 = vmatprep.subr.mxu0 0.0
      %1845 = vmatpush2.msra.mxu0 0.0
      %1846 = vmatprep.subr.mxu0 0.0
      %1847 = vmatpush2.msra.mxu0 0.0
      %1848 = vmatprep.subr.mxu0 0.0
      %1849 = vmatpush2.msra.mxu0 0.0
      %1850 = vmatprep.subr.mxu0 0.0
      %1851 = vmatpush2.msra.mxu0 0.0
      %1852 = vmatprep.subr.mxu0 0.0
      %1853 = vmatpush2.msra.mxu0 0.0
      %1854 = vmatprep.subr.mxu0 0.0
      %1855 = vmatpush2.msra.mxu0 0.0
      %1856 = vmatprep.subr.mxu0 0.0
      %1857 = vmatpush2.msra.mxu0 0.0
      %1858 = vmatprep.mubr.f32.mxu0 0.0
      %1859 = vmatmul.mubr.f32.gmra.mxu0 %v1719
      %v1860 = vpop.f32.mrf.mxu0
      %v1861 = vadd.f32 0.0, %v1860
      %v1862 = vpop.f32.mrf.mxu0
      %v1863 = vadd.f32 0.0, %v1862
      %1864 = vdwg.mxu0
      %1865 = vmatprep.subr.mxu0 %v1793
      %1866 = vmatpush1.msra.mxu0 %v1792
      %1867 = vmatprep.subr.mxu0 %v1789
      %1868 = vmatpush1.msra.mxu0 %v1788
      %1869 = vmatprep.subr.mxu0 %v1785
      %1870 = vmatpush1.msra.mxu0 %v1784
      %1871 = vmatprep.subr.mxu0 %v1781
      %1872 = vmatpush1.msra.mxu0 %v1780
      %1873 = vmatprep.subr.mxu0 %v1777
      %1874 = vmatpush1.msra.mxu0 %v1776
      %1875 = vmatprep.subr.mxu0 %v1773
      %1876 = vmatpush1.msra.mxu0 %v1772
      %1877 = vmatprep.subr.mxu0 %v1769
      %1878 = vmatpush1.msra.mxu0 %v1768
      %1879 = vmatprep.subr.mxu0 %v1765
      %1880 = vmatpush1.msra.mxu0 %v1764
      %1881 = vmatprep.subr.mxu0 %v1761
      %1882 = vmatpush1.msra.mxu0 %v1760
      %1883 = vmatprep.subr.mxu0 %v1757
      %1884 = vmatpush1.msra.mxu0 %v1756
      %1885 = vmatprep.subr.mxu0 %v1753
      %1886 = vmatpush1.msra.mxu0 %v1752
      %1887 = vmatprep.subr.mxu0 %v1749
      %1888 = vmatpush1.msra.mxu0 %v1748
      %1889 = vmatprep.subr.mxu0 %v1745
      %1890 = vmatpush1.msra.mxu0 %v1744
      %1891 = vmatprep.subr.mxu0 %v1741
      %1892 = vmatpush1.msra.mxu0 %v1740
      %1893 = vmatprep.subr.mxu0 %v1737
      %1894 = vmatpush1.msra.mxu0 %v1736
      %1895 = vmatprep.subr.mxu0 %v1733
      %1896 = vmatpush1.msra.mxu0 %v1732
      %1897 = vmatprep.subr.mxu0 0.0
      %1898 = vmatpush2.msra.mxu0 0.0
      %1899 = vmatprep.subr.mxu0 0.0
      %1900 = vmatpush2.msra.mxu0 0.0
      %1901 = vmatprep.subr.mxu0 0.0
      %1902 = vmatpush2.msra.mxu0 0.0
      %1903 = vmatprep.subr.mxu0 0.0
      %1904 = vmatpush2.msra.mxu0 0.0
      %1905 = vmatprep.subr.mxu0 0.0
      %1906 = vmatpush2.msra.mxu0 0.0
      %1907 = vmatprep.subr.mxu0 0.0
      %1908 = vmatpush2.msra.mxu0 0.0
      %1909 = vmatprep.subr.mxu0 0.0
      %1910 = vmatpush2.msra.mxu0 0.0
      %1911 = vmatprep.subr.mxu0 0.0
      %1912 = vmatpush2.msra.mxu0 0.0
      %1913 = vmatprep.subr.mxu0 0.0
      %1914 = vmatpush2.msra.mxu0 0.0
      %1915 = vmatprep.subr.mxu0 0.0
      %1916 = vmatpush2.msra.mxu0 0.0
      %1917 = vmatprep.subr.mxu0 0.0
      %1918 = vmatpush2.msra.mxu0 0.0
      %1919 = vmatprep.subr.mxu0 0.0
      %1920 = vmatpush2.msra.mxu0 0.0
      %1921 = vmatprep.subr.mxu0 0.0
      %1922 = vmatpush2.msra.mxu0 0.0
      %1923 = vmatprep.subr.mxu0 0.0
      %1924 = vmatpush2.msra.mxu0 0.0
      %1925 = vmatprep.subr.mxu0 0.0
      %1926 = vmatpush2.msra.mxu0 0.0
      %1927 = vmatprep.subr.mxu0 0.0
      %1928 = vmatpush2.msra.mxu0 0.0
      %1929 = vmatprep.mubr.f32.mxu0 0.0
      %1930 = vmatmul.mubr.f32.gmra.mxu0 %v1719
      %v1931 = vpop.f32.mrf.mxu0
      %v1932 = vadd.f32 0.0, %v1931
      %v1933 = vpop.f32.mrf.mxu0
      %v1934 = vadd.f32 0.0, %v1933
      %1935 = vdwg.mxu0
      %v1936 = vadd.f32 %v1726, %v1861
      %v1937 = vadd.f32 %v1727, %v1863
      %v1938 = vadd.f32 %v1728, %v1932
      %v1939 = vadd.f32 %v1729, %v1934
      %v1940 = vmul.f32 %v1936, 0.5
      %v1941 = vtanh.pop %v1940
      %v1942 = vmul.f32 %v1941, 0.5
      %v1943 = vadd.f32 %v1942, 0.5
      %v1944 = vmul.f32 %v1937, 0.5
      %v1945 = vtanh.pop %v1944
      %v1946 = vmul.f32 %v1945, 0.5
      %v1947 = vadd.f32 %v1946, 0.5
      %v1948 = vtanh.pop %v1938
      %v1949 = vmul.f32 %v1939, 0.5
      %v1950 = vtanh.pop %v1949
      %v1951 = vmul.f32 %v1950, 0.5
      %v1952 = vadd.f32 %v1951, 0.5
      %v1953 = vmul.f32 %v1947, %v1717
      %v1954 = vmul.f32 %v1943, %v1948
      %v1955 = vadd.f32 %v1953, %v1954
      %v1956 = vtanh.pop %v1955
      %v1957 = vmul.f32 %v1952, %v1956
      // Predicated region
      $region69: #{predictor_forward.1} parent=47 // pred_check
        %p1958 = pneg %p1244
      $region70: #{predictor_forward.1} parent=47 // pred_check_branch
        %1960 = sbr.rel (%p1958) target = $region72
      $region71: #{predictor_forward.1} parent=47 // pred_region
        %s1961 = scalar_lea.vmem [#allocation2], 24
        %1962 = vst [vmem:[%s1961] sm:$0xff] %v1957
      $region72: #{predictor_forward.1} parent=47 // pred_fallthru
        _
      %s1963 = scalar_lea.vmem [#allocation3], 128
      %v1964 = vld [vmem:[%s1963] sm:$0xff]
      %v1965 = vld [vmem:[%s1963 + $0x8] sm:$0xff]
      %v1966 = vld [vmem:[%s1963 + $0x10] sm:$0xff]
      %v1967 = vld [vmem:[%s1963 + $0x18] sm:$0xff]
      %v1968 = vld [vmem:[%s296] sm:$0xff]
      %v1969 = vld [vmem:[%s296 + $0x8] sm:$0xff]
      %v1970 = vld [vmem:[%s296 + $0x10] sm:$0xff]
      %v1971 = vld [vmem:[%s296 + $0x18] sm:$0xff]
      %v1972 = vld [vmem:[%s296 + $0x20] sm:$0xff]
      %v1973 = vld [vmem:[%s296 + $0x28] sm:$0xff]
      %v1974 = vld [vmem:[%s296 + $0x30] sm:$0xff]
      %v1975 = vld [vmem:[%s296 + $0x38] sm:$0xff]
      %v1976 = vld [vmem:[%s296 + $0x40] sm:$0xff]
      %v1977 = vld [vmem:[%s296 + $0x48] sm:$0xff]
      %v1978 = vld [vmem:[%s296 + $0x50] sm:$0xff]
      %v1979 = vld [vmem:[%s296 + $0x58] sm:$0xff]
      %v1980 = vld [vmem:[%s296 + $0x60] sm:$0xff]
      %v1981 = vld [vmem:[%s296 + $0x68] sm:$0xff]
      %v1982 = vld [vmem:[%s296 + $0x70] sm:$0xff]
      %v1983 = vld [vmem:[%s296 + $0x78] sm:$0xff]
      %v1984 = vld [vmem:[%s296 + $0x80] sm:$0xff]
      %v1985 = vld [vmem:[%s296 + $0x88] sm:$0xff]
      %v1986 = vld [vmem:[%s296 + $0x90] sm:$0xff]
      %v1987 = vld [vmem:[%s296 + $0x98] sm:$0xff]
      %v1988 = vld [vmem:[%s296 + $0xa0] sm:$0xff]
      %v1989 = vld [vmem:[%s296 + $0xa8] sm:$0xff]
      %v1990 = vld [vmem:[%s296 + $0xb0] sm:$0xff]
      %v1991 = vld [vmem:[%s296 + $0xb8] sm:$0xff]
      %v1992 = vld [vmem:[%s296 + $0xc0] sm:$0xff]
      %v1993 = vld [vmem:[%s296 + $0xc8] sm:$0xff]
      %v1994 = vld [vmem:[%s296 + $0xd0] sm:$0xff]
      %v1995 = vld [vmem:[%s296 + $0xd8] sm:$0xff]
      %v1996 = vld [vmem:[%s296 + $0xe0] sm:$0xff]
      %v1997 = vld [vmem:[%s296 + $0xe8] sm:$0xff]
      %v1998 = vld [vmem:[%s296 + $0xf0] sm:$0xff]
      %v1999 = vld [vmem:[%s296 + $0xf8] sm:$0xff]
      %v2000 = vld [vmem:[%s296 + $0x100] sm:$0xff]
      %v2001 = vld [vmem:[%s296 + $0x108] sm:$0xff]
      %v2002 = vld [vmem:[%s296 + $0x110] sm:$0xff]
      %v2003 = vld [vmem:[%s296 + $0x118] sm:$0xff]
      %v2004 = vld [vmem:[%s296 + $0x120] sm:$0xff]
      %v2005 = vld [vmem:[%s296 + $0x128] sm:$0xff]
      %v2006 = vld [vmem:[%s296 + $0x130] sm:$0xff]
      %v2007 = vld [vmem:[%s296 + $0x138] sm:$0xff]
      %v2008 = vld [vmem:[%s296 + $0x140] sm:$0xff]
      %v2009 = vld [vmem:[%s296 + $0x148] sm:$0xff]
      %v2010 = vld [vmem:[%s296 + $0x150] sm:$0xff]
      %v2011 = vld [vmem:[%s296 + $0x158] sm:$0xff]
      %v2012 = vld [vmem:[%s296 + $0x160] sm:$0xff]
      %v2013 = vld [vmem:[%s296 + $0x168] sm:$0xff]
      %v2014 = vld [vmem:[%s296 + $0x170] sm:$0xff]
      %v2015 = vld [vmem:[%s296 + $0x178] sm:$0xff]
      %v2016 = vld [vmem:[%s296 + $0x180] sm:$0xff]
      %v2017 = vld [vmem:[%s296 + $0x188] sm:$0xff]
      %v2018 = vld [vmem:[%s296 + $0x190] sm:$0xff]
      %v2019 = vld [vmem:[%s296 + $0x198] sm:$0xff]
      %v2020 = vld [vmem:[%s296 + $0x1a0] sm:$0xff]
      %v2021 = vld [vmem:[%s296 + $0x1a8] sm:$0xff]
      %v2022 = vld [vmem:[%s296 + $0x1b0] sm:$0xff]
      %v2023 = vld [vmem:[%s296 + $0x1b8] sm:$0xff]
      %v2024 = vld [vmem:[%s296 + $0x1c0] sm:$0xff]
      %v2025 = vld [vmem:[%s296 + $0x1c8] sm:$0xff]
      %v2026 = vld [vmem:[%s296 + $0x1d0] sm:$0xff]
      %v2027 = vld [vmem:[%s296 + $0x1d8] sm:$0xff]
      %v2028 = vld [vmem:[%s296 + $0x1e0] sm:$0xff]
      %v2029 = vld [vmem:[%s296 + $0x1e8] sm:$0xff]
      %v2030 = vld [vmem:[%s296 + $0x1f0] sm:$0xff]
      %v2031 = vld [vmem:[%s296 + $0x1f8] sm:$0xff]
      %2032 = vmatprep.subr.mxu0 %v2029
      %2033 = vmatpush1.msra.mxu0 %v2028
      %2034 = vmatprep.subr.mxu0 %v2025
      %2035 = vmatpush1.msra.mxu0 %v2024
      %2036 = vmatprep.subr.mxu0 %v2021
      %2037 = vmatpush1.msra.mxu0 %v2020
      %2038 = vmatprep.subr.mxu0 %v2017
      %2039 = vmatpush1.msra.mxu0 %v2016
      %2040 = vmatprep.subr.mxu0 %v2013
      %2041 = vmatpush1.msra.mxu0 %v2012
      %2042 = vmatprep.subr.mxu0 %v2009
      %2043 = vmatpush1.msra.mxu0 %v2008
      %2044 = vmatprep.subr.mxu0 %v2005
      %2045 = vmatpush1.msra.mxu0 %v2004
      %2046 = vmatprep.subr.mxu0 %v2001
      %2047 = vmatpush1.msra.mxu0 %v2000
      %2048 = vmatprep.subr.mxu0 %v1997
      %2049 = vmatpush1.msra.mxu0 %v1996
      %2050 = vmatprep.subr.mxu0 %v1993
      %2051 = vmatpush1.msra.mxu0 %v1992
      %2052 = vmatprep.subr.mxu0 %v1989
      %2053 = vmatpush1.msra.mxu0 %v1988
      %2054 = vmatprep.subr.mxu0 %v1985
      %2055 = vmatpush1.msra.mxu0 %v1984
      %2056 = vmatprep.subr.mxu0 %v1981
      %2057 = vmatpush1.msra.mxu0 %v1980
      %2058 = vmatprep.subr.mxu0 %v1977
      %2059 = vmatpush1.msra.mxu0 %v1976
      %2060 = vmatprep.subr.mxu0 %v1973
      %2061 = vmatpush1.msra.mxu0 %v1972
      %2062 = vmatprep.subr.mxu0 %v1969
      %2063 = vmatpush1.msra.mxu0 %v1968
      %2064 = vmatprep.subr.mxu0 0.0
      %2065 = vmatpush2.msra.mxu0 0.0
      %2066 = vmatprep.subr.mxu0 0.0
      %2067 = vmatpush2.msra.mxu0 0.0
      %2068 = vmatprep.subr.mxu0 0.0
      %2069 = vmatpush2.msra.mxu0 0.0
      %2070 = vmatprep.subr.mxu0 0.0
      %2071 = vmatpush2.msra.mxu0 0.0
      %2072 = vmatprep.subr.mxu0 0.0
      %2073 = vmatpush2.msra.mxu0 0.0
      %2074 = vmatprep.subr.mxu0 0.0
      %2075 = vmatpush2.msra.mxu0 0.0
      %2076 = vmatprep.subr.mxu0 0.0
      %2077 = vmatpush2.msra.mxu0 0.0
      %2078 = vmatprep.subr.mxu0 0.0
      %2079 = vmatpush2.msra.mxu0 0.0
      %2080 = vmatprep.subr.mxu0 0.0
      %2081 = vmatpush2.msra.mxu0 0.0
      %2082 = vmatprep.subr.mxu0 0.0
      %2083 = vmatpush2.msra.mxu0 0.0
      %2084 = vmatprep.subr.mxu0 0.0
      %2085 = vmatpush2.msra.mxu0 0.0
      %2086 = vmatprep.subr.mxu0 0.0
      %2087 = vmatpush2.msra.mxu0 0.0
      %2088 = vmatprep.subr.mxu0 0.0
      %2089 = vmatpush2.msra.mxu0 0.0
      %2090 = vmatprep.subr.mxu0 0.0
      %2091 = vmatpush2.msra.mxu0 0.0
      %2092 = vmatprep.subr.mxu0 0.0
      %2093 = vmatpush2.msra.mxu0 0.0
      %2094 = vmatprep.subr.mxu0 0.0
      %2095 = vmatpush2.msra.mxu0 0.0
      %2096 = vmatprep.mubr.f32.mxu0 0.0
      %2097 = vmatmul.mubr.f32.gmra.mxu0 %v1957
      %v2098 = vpop.f32.mrf.mxu0
      %v2099 = vadd.f32 0.0, %v2098
      %v2100 = vpop.f32.mrf.mxu0
      %v2101 = vadd.f32 0.0, %v2100
      %2102 = vdwg.mxu0
      %2103 = vmatprep.subr.mxu0 %v2031
      %2104 = vmatpush1.msra.mxu0 %v2030
      %2105 = vmatprep.subr.mxu0 %v2027
      %2106 = vmatpush1.msra.mxu0 %v2026
      %2107 = vmatprep.subr.mxu0 %v2023
      %2108 = vmatpush1.msra.mxu0 %v2022
      %2109 = vmatprep.subr.mxu0 %v2019
      %2110 = vmatpush1.msra.mxu0 %v2018
      %2111 = vmatprep.subr.mxu0 %v2015
      %2112 = vmatpush1.msra.mxu0 %v2014
      %2113 = vmatprep.subr.mxu0 %v2011
      %2114 = vmatpush1.msra.mxu0 %v2010
      %2115 = vmatprep.subr.mxu0 %v2007
      %2116 = vmatpush1.msra.mxu0 %v2006
      %2117 = vmatprep.subr.mxu0 %v2003
      %2118 = vmatpush1.msra.mxu0 %v2002
      %2119 = vmatprep.subr.mxu0 %v1999
      %2120 = vmatpush1.msra.mxu0 %v1998
      %2121 = vmatprep.subr.mxu0 %v1995
      %2122 = vmatpush1.msra.mxu0 %v1994
      %2123 = vmatprep.subr.mxu0 %v1991
      %2124 = vmatpush1.msra.mxu0 %v1990
      %2125 = vmatprep.subr.mxu0 %v1987
      %2126 = vmatpush1.msra.mxu0 %v1986
      %2127 = vmatprep.subr.mxu0 %v1983
      %2128 = vmatpush1.msra.mxu0 %v1982
      %2129 = vmatprep.subr.mxu0 %v1979
      %2130 = vmatpush1.msra.mxu0 %v1978
      %2131 = vmatprep.subr.mxu0 %v1975
      %2132 = vmatpush1.msra.mxu0 %v1974
      %2133 = vmatprep.subr.mxu0 %v1971
      %2134 = vmatpush1.msra.mxu0 %v1970
      %2135 = vmatprep.subr.mxu0 0.0
      %2136 = vmatpush2.msra.mxu0 0.0
      %2137 = vmatprep.subr.mxu0 0.0
      %2138 = vmatpush2.msra.mxu0 0.0
      %2139 = vmatprep.subr.mxu0 0.0
      %2140 = vmatpush2.msra.mxu0 0.0
      %2141 = vmatprep.subr.mxu0 0.0
      %2142 = vmatpush2.msra.mxu0 0.0
      %2143 = vmatprep.subr.mxu0 0.0
      %2144 = vmatpush2.msra.mxu0 0.0
      %2145 = vmatprep.subr.mxu0 0.0
      %2146 = vmatpush2.msra.mxu0 0.0
      %2147 = vmatprep.subr.mxu0 0.0
      %2148 = vmatpush2.msra.mxu0 0.0
      %2149 = vmatprep.subr.mxu0 0.0
      %2150 = vmatpush2.msra.mxu0 0.0
      %2151 = vmatprep.subr.mxu0 0.0
      %2152 = vmatpush2.msra.mxu0 0.0
      %2153 = vmatprep.subr.mxu0 0.0
      %2154 = vmatpush2.msra.mxu0 0.0
      %2155 = vmatprep.subr.mxu0 0.0
      %2156 = vmatpush2.msra.mxu0 0.0
      %2157 = vmatprep.subr.mxu0 0.0
      %2158 = vmatpush2.msra.mxu0 0.0
      %2159 = vmatprep.subr.mxu0 0.0
      %2160 = vmatpush2.msra.mxu0 0.0
      %2161 = vmatprep.subr.mxu0 0.0
      %2162 = vmatpush2.msra.mxu0 0.0
      %2163 = vmatprep.subr.mxu0 0.0
      %2164 = vmatpush2.msra.mxu0 0.0
      %2165 = vmatprep.subr.mxu0 0.0
      %2166 = vmatpush2.msra.mxu0 0.0
      %2167 = vmatprep.mubr.f32.mxu0 0.0
      %2168 = vmatmul.mubr.f32.gmra.mxu0 %v1957
      %v2169 = vpop.f32.mrf.mxu0
      %v2170 = vadd.f32 0.0, %v2169
      %v2171 = vpop.f32.mrf.mxu0
      %v2172 = vadd.f32 0.0, %v2171
      %2173 = vdwg.mxu0
      %v2174 = vadd.f32 %v1964, %v2099
      %v2175 = vadd.f32 %v1965, %v2101
      %v2176 = vadd.f32 %v1966, %v2170
      %v2177 = vadd.f32 %v1967, %v2172
      %v2178 = vmul.f32 %v2174, 0.5
      %v2179 = vtanh.pop %v2178
      %v2180 = vmul.f32 %v2179, 0.5
      %v2181 = vadd.f32 %v2180, 0.5
      %v2182 = vmul.f32 %v2175, 0.5
      %v2183 = vtanh.pop %v2182
      %v2184 = vmul.f32 %v2183, 0.5
      %v2185 = vadd.f32 %v2184, 0.5
      %v2186 = vtanh.pop %v2176
      %v2187 = vmul.f32 %v2177, 0.5
      %v2188 = vtanh.pop %v2187
      %v2189 = vmul.f32 %v2188, 0.5
      %v2190 = vadd.f32 %v2189, 0.5
      %v2191 = vmul.f32 %v2185, %v1955
      %v2192 = vmul.f32 %v2181, %v2186
      %v2193 = vadd.f32 %v2191, %v2192
      %v2194 = vtanh.pop %v2193
      %v2195 = vmul.f32 %v2190, %v2194
      // Predicated region
      $region73: #{predictor_forward.1} parent=47 // pred_check
        %p2196 = pneg %p1244
      $region74: #{predictor_forward.1} parent=47 // pred_check_branch
        %2198 = sbr.rel (%p2196) target = $region76
      $region75: #{predictor_forward.1} parent=47 // pred_region
        %s2199 = scalar_lea.vmem [#allocation2], 32
        %2200 = vst [vmem:[%s2199] sm:$0xff] %v2195
      $region76: #{predictor_forward.1} parent=47 // pred_fallthru
        _
      %s2201 = scalar_lea.vmem [#allocation3], 160
      %v2202 = vld [vmem:[%s2201] sm:$0xff]
      %v2203 = vld [vmem:[%s2201 + $0x8] sm:$0xff]
      %v2204 = vld [vmem:[%s2201 + $0x10] sm:$0xff]
      %v2205 = vld [vmem:[%s2201 + $0x18] sm:$0xff]
      %v2206 = vld [vmem:[%s296] sm:$0xff]
      %v2207 = vld [vmem:[%s296 + $0x8] sm:$0xff]
      %v2208 = vld [vmem:[%s296 + $0x10] sm:$0xff]
      %v2209 = vld [vmem:[%s296 + $0x18] sm:$0xff]
      %v2210 = vld [vmem:[%s296 + $0x20] sm:$0xff]
      %v2211 = vld [vmem:[%s296 + $0x28] sm:$0xff]
      %v2212 = vld [vmem:[%s296 + $0x30] sm:$0xff]
      %v2213 = vld [vmem:[%s296 + $0x38] sm:$0xff]
      %v2214 = vld [vmem:[%s296 + $0x40] sm:$0xff]
      %v2215 = vld [vmem:[%s296 + $0x48] sm:$0xff]
      %v2216 = vld [vmem:[%s296 + $0x50] sm:$0xff]
      %v2217 = vld [vmem:[%s296 + $0x58] sm:$0xff]
      %v2218 = vld [vmem:[%s296 + $0x60] sm:$0xff]
      %v2219 = vld [vmem:[%s296 + $0x68] sm:$0xff]
      %v2220 = vld [vmem:[%s296 + $0x70] sm:$0xff]
      %v2221 = vld [vmem:[%s296 + $0x78] sm:$0xff]
      %v2222 = vld [vmem:[%s296 + $0x80] sm:$0xff]
      %v2223 = vld [vmem:[%s296 + $0x88] sm:$0xff]
      %v2224 = vld [vmem:[%s296 + $0x90] sm:$0xff]
      %v2225 = vld [vmem:[%s296 + $0x98] sm:$0xff]
      %v2226 = vld [vmem:[%s296 + $0xa0] sm:$0xff]
      %v2227 = vld [vmem:[%s296 + $0xa8] sm:$0xff]
      %v2228 = vld [vmem:[%s296 + $0xb0] sm:$0xff]
      %v2229 = vld [vmem:[%s296 + $0xb8] sm:$0xff]
      %v2230 = vld [vmem:[%s296 + $0xc0] sm:$0xff]
      %v2231 = vld [vmem:[%s296 + $0xc8] sm:$0xff]
      %v2232 = vld [vmem:[%s296 + $0xd0] sm:$0xff]
      %v2233 = vld [vmem:[%s296 + $0xd8] sm:$0xff]
      %v2234 = vld [vmem:[%s296 + $0xe0] sm:$0xff]
      %v2235 = vld [vmem:[%s296 + $0xe8] sm:$0xff]
      %v2236 = vld [vmem:[%s296 + $0xf0] sm:$0xff]
      %v2237 = vld [vmem:[%s296 + $0xf8] sm:$0xff]
      %v2238 = vld [vmem:[%s296 + $0x100] sm:$0xff]
      %v2239 = vld [vmem:[%s296 + $0x108] sm:$0xff]
      %v2240 = vld [vmem:[%s296 + $0x110] sm:$0xff]
      %v2241 = vld [vmem:[%s296 + $0x118] sm:$0xff]
      %v2242 = vld [vmem:[%s296 + $0x120] sm:$0xff]
      %v2243 = vld [vmem:[%s296 + $0x128] sm:$0xff]
      %v2244 = vld [vmem:[%s296 + $0x130] sm:$0xff]
      %v2245 = vld [vmem:[%s296 + $0x138] sm:$0xff]
      %v2246 = vld [vmem:[%s296 + $0x140] sm:$0xff]
      %v2247 = vld [vmem:[%s296 + $0x148] sm:$0xff]
      %v2248 = vld [vmem:[%s296 + $0x150] sm:$0xff]
      %v2249 = vld [vmem:[%s296 + $0x158] sm:$0xff]
      %v2250 = vld [vmem:[%s296 + $0x160] sm:$0xff]
      %v2251 = vld [vmem:[%s296 + $0x168] sm:$0xff]
      %v2252 = vld [vmem:[%s296 + $0x170] sm:$0xff]
      %v2253 = vld [vmem:[%s296 + $0x178] sm:$0xff]
      %v2254 = vld [vmem:[%s296 + $0x180] sm:$0xff]
      %v2255 = vld [vmem:[%s296 + $0x188] sm:$0xff]
      %v2256 = vld [vmem:[%s296 + $0x190] sm:$0xff]
      %v2257 = vld [vmem:[%s296 + $0x198] sm:$0xff]
      %v2258 = vld [vmem:[%s296 + $0x1a0] sm:$0xff]
      %v2259 = vld [vmem:[%s296 + $0x1a8] sm:$0xff]
      %v2260 = vld [vmem:[%s296 + $0x1b0] sm:$0xff]
      %v2261 = vld [vmem:[%s296 + $0x1b8] sm:$0xff]
      %v2262 = vld [vmem:[%s296 + $0x1c0] sm:$0xff]
      %v2263 = vld [vmem:[%s296 + $0x1c8] sm:$0xff]
      %v2264 = vld [vmem:[%s296 + $0x1d0] sm:$0xff]
      %v2265 = vld [vmem:[%s296 + $0x1d8] sm:$0xff]
      %v2266 = vld [vmem:[%s296 + $0x1e0] sm:$0xff]
      %v2267 = vld [vmem:[%s296 + $0x1e8] sm:$0xff]
      %v2268 = vld [vmem:[%s296 + $0x1f0] sm:$0xff]
      %v2269 = vld [vmem:[%s296 + $0x1f8] sm:$0xff]
      %2270 = vmatprep.subr.mxu0 %v2267
      %2271 = vmatpush1.msra.mxu0 %v2266
      %2272 = vmatprep.subr.mxu0 %v2263
      %2273 = vmatpush1.msra.mxu0 %v2262
      %2274 = vmatprep.subr.mxu0 %v2259
      %2275 = vmatpush1.msra.mxu0 %v2258
      %2276 = vmatprep.subr.mxu0 %v2255
      %2277 = vmatpush1.msra.mxu0 %v2254
      %2278 = vmatprep.subr.mxu0 %v2251
      %2279 = vmatpush1.msra.mxu0 %v2250
      %2280 = vmatprep.subr.mxu0 %v2247
      %2281 = vmatpush1.msra.mxu0 %v2246
      %2282 = vmatprep.subr.mxu0 %v2243
      %2283 = vmatpush1.msra.mxu0 %v2242
      %2284 = vmatprep.subr.mxu0 %v2239
      %2285 = vmatpush1.msra.mxu0 %v2238
      %2286 = vmatprep.subr.mxu0 %v2235
      %2287 = vmatpush1.msra.mxu0 %v2234
      %2288 = vmatprep.subr.mxu0 %v2231
      %2289 = vmatpush1.msra.mxu0 %v2230
      %2290 = vmatprep.subr.mxu0 %v2227
      %2291 = vmatpush1.msra.mxu0 %v2226
      %2292 = vmatprep.subr.mxu0 %v2223
      %2293 = vmatpush1.msra.mxu0 %v2222
      %2294 = vmatprep.subr.mxu0 %v2219
      %2295 = vmatpush1.msra.mxu0 %v2218
      %2296 = vmatprep.subr.mxu0 %v2215
      %2297 = vmatpush1.msra.mxu0 %v2214
      %2298 = vmatprep.subr.mxu0 %v2211
      %2299 = vmatpush1.msra.mxu0 %v2210
      %2300 = vmatprep.subr.mxu0 %v2207
      %2301 = vmatpush1.msra.mxu0 %v2206
      %2302 = vmatprep.subr.mxu0 0.0
      %2303 = vmatpush2.msra.mxu0 0.0
      %2304 = vmatprep.subr.mxu0 0.0
      %2305 = vmatpush2.msra.mxu0 0.0
      %2306 = vmatprep.subr.mxu0 0.0
      %2307 = vmatpush2.msra.mxu0 0.0
      %2308 = vmatprep.subr.mxu0 0.0
      %2309 = vmatpush2.msra.mxu0 0.0
      %2310 = vmatprep.subr.mxu0 0.0
      %2311 = vmatpush2.msra.mxu0 0.0
      %2312 = vmatprep.subr.mxu0 0.0
      %2313 = vmatpush2.msra.mxu0 0.0
      %2314 = vmatprep.subr.mxu0 0.0
      %2315 = vmatpush2.msra.mxu0 0.0
      %2316 = vmatprep.subr.mxu0 0.0
      %2317 = vmatpush2.msra.mxu0 0.0
      %2318 = vmatprep.subr.mxu0 0.0
      %2319 = vmatpush2.msra.mxu0 0.0
      %2320 = vmatprep.subr.mxu0 0.0
      %2321 = vmatpush2.msra.mxu0 0.0
      %2322 = vmatprep.subr.mxu0 0.0
      %2323 = vmatpush2.msra.mxu0 0.0
      %2324 = vmatprep.subr.mxu0 0.0
      %2325 = vmatpush2.msra.mxu0 0.0
      %2326 = vmatprep.subr.mxu0 0.0
      %2327 = vmatpush2.msra.mxu0 0.0
      %2328 = vmatprep.subr.mxu0 0.0
      %2329 = vmatpush2.msra.mxu0 0.0
      %2330 = vmatprep.subr.mxu0 0.0
      %2331 = vmatpush2.msra.mxu0 0.0
      %2332 = vmatprep.subr.mxu0 0.0
      %2333 = vmatpush2.msra.mxu0 0.0
      %2334 = vmatprep.mubr.f32.mxu0 0.0
      %2335 = vmatmul.mubr.f32.gmra.mxu0 %v2195
      %v2336 = vpop.f32.mrf.mxu0
      %v2337 = vadd.f32 0.0, %v2336
      %v2338 = vpop.f32.mrf.mxu0
      %v2339 = vadd.f32 0.0, %v2338
      %2340 = vdwg.mxu0
      %2341 = vmatprep.subr.mxu0 %v2269
      %2342 = vmatpush1.msra.mxu0 %v2268
      %2343 = vmatprep.subr.mxu0 %v2265
      %2344 = vmatpush1.msra.mxu0 %v2264
      %2345 = vmatprep.subr.mxu0 %v2261
      %2346 = vmatpush1.msra.mxu0 %v2260
      %2347 = vmatprep.subr.mxu0 %v2257
      %2348 = vmatpush1.msra.mxu0 %v2256
      %2349 = vmatprep.subr.mxu0 %v2253
      %2350 = vmatpush1.msra.mxu0 %v2252
      %2351 = vmatprep.subr.mxu0 %v2249
      %2352 = vmatpush1.msra.mxu0 %v2248
      %2353 = vmatprep.subr.mxu0 %v2245
      %2354 = vmatpush1.msra.mxu0 %v2244
      %2355 = vmatprep.subr.mxu0 %v2241
      %2356 = vmatpush1.msra.mxu0 %v2240
      %2357 = vmatprep.subr.mxu0 %v2237
      %2358 = vmatpush1.msra.mxu0 %v2236
      %2359 = vmatprep.subr.mxu0 %v2233
      %2360 = vmatpush1.msra.mxu0 %v2232
      %2361 = vmatprep.subr.mxu0 %v2229
      %2362 = vmatpush1.msra.mxu0 %v2228
      %2363 = vmatprep.subr.mxu0 %v2225
      %2364 = vmatpush1.msra.mxu0 %v2224
      %2365 = vmatprep.subr.mxu0 %v2221
      %2366 = vmatpush1.msra.mxu0 %v2220
      %2367 = vmatprep.subr.mxu0 %v2217
      %2368 = vmatpush1.msra.mxu0 %v2216
      %2369 = vmatprep.subr.mxu0 %v2213
      %2370 = vmatpush1.msra.mxu0 %v2212
      %2371 = vmatprep.subr.mxu0 %v2209
      %2372 = vmatpush1.msra.mxu0 %v2208
      %2373 = vmatprep.subr.mxu0 0.0
      %2374 = vmatpush2.msra.mxu0 0.0
      %2375 = vmatprep.subr.mxu0 0.0
      %2376 = vmatpush2.msra.mxu0 0.0
      %2377 = vmatprep.subr.mxu0 0.0
      %2378 = vmatpush2.msra.mxu0 0.0
      %2379 = vmatprep.subr.mxu0 0.0
      %2380 = vmatpush2.msra.mxu0 0.0
      %2381 = vmatprep.subr.mxu0 0.0
      %2382 = vmatpush2.msra.mxu0 0.0
      %2383 = vmatprep.subr.mxu0 0.0
      %2384 = vmatpush2.msra.mxu0 0.0
      %2385 = vmatprep.subr.mxu0 0.0
      %2386 = vmatpush2.msra.mxu0 0.0
      %2387 = vmatprep.subr.mxu0 0.0
      %2388 = vmatpush2.msra.mxu0 0.0
      %2389 = vmatprep.subr.mxu0 0.0
      %2390 = vmatpush2.msra.mxu0 0.0
      %2391 = vmatprep.subr.mxu0 0.0
      %2392 = vmatpush2.msra.mxu0 0.0
      %2393 = vmatprep.subr.mxu0 0.0
      %2394 = vmatpush2.msra.mxu0 0.0
      %2395 = vmatprep.subr.mxu0 0.0
      %2396 = vmatpush2.msra.mxu0 0.0
      %2397 = vmatprep.subr.mxu0 0.0
      %2398 = vmatpush2.msra.mxu0 0.0
      %2399 = vmatprep.subr.mxu0 0.0
      %2400 = vmatpush2.msra.mxu0 0.0
      %2401 = vmatprep.subr.mxu0 0.0
      %2402 = vmatpush2.msra.mxu0 0.0
      %2403 = vmatprep.subr.mxu0 0.0
      %2404 = vmatpush2.msra.mxu0 0.0
      %2405 = vmatprep.mubr.f32.mxu0 0.0
      %2406 = vmatmul.mubr.f32.gmra.mxu0 %v2195
      %v2407 = vpop.f32.mrf.mxu0
      %v2408 = vadd.f32 0.0, %v2407
      %v2409 = vpop.f32.mrf.mxu0
      %v2410 = vadd.f32 0.0, %v2409
      %2411 = vdwg.mxu0
      %v2412 = vadd.f32 %v2202, %v2337
      %v2413 = vadd.f32 %v2203, %v2339
      %v2414 = vadd.f32 %v2204, %v2408
      %v2415 = vadd.f32 %v2205, %v2410
      %v2416 = vmul.f32 %v2412, 0.5
      %v2417 = vtanh.pop %v2416
      %v2418 = vmul.f32 %v2417, 0.5
      %v2419 = vadd.f32 %v2418, 0.5
      %v2420 = vmul.f32 %v2413, 0.5
      %v2421 = vtanh.pop %v2420
      %v2422 = vmul.f32 %v2421, 0.5
      %v2423 = vadd.f32 %v2422, 0.5
      %v2424 = vtanh.pop %v2414
      %v2425 = vmul.f32 %v2415, 0.5
      %v2426 = vtanh.pop %v2425
      %v2427 = vmul.f32 %v2426, 0.5
      %v2428 = vadd.f32 %v2427, 0.5
      %v2429 = vmul.f32 %v2423, %v2193
      %v2430 = vmul.f32 %v2419, %v2424
      %v2431 = vadd.f32 %v2429, %v2430
      %v2432 = vtanh.pop %v2431
      %v2433 = vmul.f32 %v2428, %v2432
      // Predicated region
      $region77: #{predictor_forward.1} parent=47 // pred_check
        %p2434 = pneg %p1244
      $region78: #{predictor_forward.1} parent=47 // pred_check_branch
        %2436 = sbr.rel (%p2434) target = $region80
      $region79: #{predictor_forward.1} parent=47 // pred_region
        %s2437 = scalar_lea.vmem [#allocation2], 40
        %2438 = vst [vmem:[%s2437] sm:$0xff] %v2433
      $region80: #{predictor_forward.1} parent=47 // pred_fallthru
        _
      %s2439 = scalar_lea.vmem [#allocation3], 192
      %v2440 = vld [vmem:[%s2439] sm:$0xff]
      %v2441 = vld [vmem:[%s2439 + $0x8] sm:$0xff]
      %v2442 = vld [vmem:[%s2439 + $0x10] sm:$0xff]
      %v2443 = vld [vmem:[%s2439 + $0x18] sm:$0xff]
      %v2444 = vld [vmem:[%s296] sm:$0xff]
      %v2445 = vld [vmem:[%s296 + $0x8] sm:$0xff]
      %v2446 = vld [vmem:[%s296 + $0x10] sm:$0xff]
      %v2447 = vld [vmem:[%s296 + $0x18] sm:$0xff]
      %v2448 = vld [vmem:[%s296 + $0x20] sm:$0xff]
      %v2449 = vld [vmem:[%s296 + $0x28] sm:$0xff]
      %v2450 = vld [vmem:[%s296 + $0x30] sm:$0xff]
      %v2451 = vld [vmem:[%s296 + $0x38] sm:$0xff]
      %v2452 = vld [vmem:[%s296 + $0x40] sm:$0xff]
      %v2453 = vld [vmem:[%s296 + $0x48] sm:$0xff]
      %v2454 = vld [vmem:[%s296 + $0x50] sm:$0xff]
      %v2455 = vld [vmem:[%s296 + $0x58] sm:$0xff]
      %v2456 = vld [vmem:[%s296 + $0x60] sm:$0xff]
      %v2457 = vld [vmem:[%s296 + $0x68] sm:$0xff]
      %v2458 = vld [vmem:[%s296 + $0x70] sm:$0xff]
      %v2459 = vld [vmem:[%s296 + $0x78] sm:$0xff]
      %v2460 = vld [vmem:[%s296 + $0x80] sm:$0xff]
      %v2461 = vld [vmem:[%s296 + $0x88] sm:$0xff]
      %v2462 = vld [vmem:[%s296 + $0x90] sm:$0xff]
      %v2463 = vld [vmem:[%s296 + $0x98] sm:$0xff]
      %v2464 = vld [vmem:[%s296 + $0xa0] sm:$0xff]
      %v2465 = vld [vmem:[%s296 + $0xa8] sm:$0xff]
      %v2466 = vld [vmem:[%s296 + $0xb0] sm:$0xff]
      %v2467 = vld [vmem:[%s296 + $0xb8] sm:$0xff]
      %v2468 = vld [vmem:[%s296 + $0xc0] sm:$0xff]
      %v2469 = vld [vmem:[%s296 + $0xc8] sm:$0xff]
      %v2470 = vld [vmem:[%s296 + $0xd0] sm:$0xff]
      %v2471 = vld [vmem:[%s296 + $0xd8] sm:$0xff]
      %v2472 = vld [vmem:[%s296 + $0xe0] sm:$0xff]
      %v2473 = vld [vmem:[%s296 + $0xe8] sm:$0xff]
      %v2474 = vld [vmem:[%s296 + $0xf0] sm:$0xff]
      %v2475 = vld [vmem:[%s296 + $0xf8] sm:$0xff]
      %v2476 = vld [vmem:[%s296 + $0x100] sm:$0xff]
      %v2477 = vld [vmem:[%s296 + $0x108] sm:$0xff]
      %v2478 = vld [vmem:[%s296 + $0x110] sm:$0xff]
      %v2479 = vld [vmem:[%s296 + $0x118] sm:$0xff]
      %v2480 = vld [vmem:[%s296 + $0x120] sm:$0xff]
      %v2481 = vld [vmem:[%s296 + $0x128] sm:$0xff]
      %v2482 = vld [vmem:[%s296 + $0x130] sm:$0xff]
      %v2483 = vld [vmem:[%s296 + $0x138] sm:$0xff]
      %v2484 = vld [vmem:[%s296 + $0x140] sm:$0xff]
      %v2485 = vld [vmem:[%s296 + $0x148] sm:$0xff]
      %v2486 = vld [vmem:[%s296 + $0x150] sm:$0xff]
      %v2487 = vld [vmem:[%s296 + $0x158] sm:$0xff]
      %v2488 = vld [vmem:[%s296 + $0x160] sm:$0xff]
      %v2489 = vld [vmem:[%s296 + $0x168] sm:$0xff]
      %v2490 = vld [vmem:[%s296 + $0x170] sm:$0xff]
      %v2491 = vld [vmem:[%s296 + $0x178] sm:$0xff]
      %v2492 = vld [vmem:[%s296 + $0x180] sm:$0xff]
      %v2493 = vld [vmem:[%s296 + $0x188] sm:$0xff]
      %v2494 = vld [vmem:[%s296 + $0x190] sm:$0xff]
      %v2495 = vld [vmem:[%s296 + $0x198] sm:$0xff]
      %v2496 = vld [vmem:[%s296 + $0x1a0] sm:$0xff]
      %v2497 = vld [vmem:[%s296 + $0x1a8] sm:$0xff]
      %v2498 = vld [vmem:[%s296 + $0x1b0] sm:$0xff]
      %v2499 = vld [vmem:[%s296 + $0x1b8] sm:$0xff]
      %v2500 = vld [vmem:[%s296 + $0x1c0] sm:$0xff]
      %v2501 = vld [vmem:[%s296 + $0x1c8] sm:$0xff]
      %v2502 = vld [vmem:[%s296 + $0x1d0] sm:$0xff]
      %v2503 = vld [vmem:[%s296 + $0x1d8] sm:$0xff]
      %v2504 = vld [vmem:[%s296 + $0x1e0] sm:$0xff]
      %v2505 = vld [vmem:[%s296 + $0x1e8] sm:$0xff]
      %v2506 = vld [vmem:[%s296 + $0x1f0] sm:$0xff]
      %v2507 = vld [vmem:[%s296 + $0x1f8] sm:$0xff]
      %2508 = vmatprep.subr.mxu0 %v2505
      %2509 = vmatpush1.msra.mxu0 %v2504
      %2510 = vmatprep.subr.mxu0 %v2501
      %2511 = vmatpush1.msra.mxu0 %v2500
      %2512 = vmatprep.subr.mxu0 %v2497
      %2513 = vmatpush1.msra.mxu0 %v2496
      %2514 = vmatprep.subr.mxu0 %v2493
      %2515 = vmatpush1.msra.mxu0 %v2492
      %2516 = vmatprep.subr.mxu0 %v2489
      %2517 = vmatpush1.msra.mxu0 %v2488
      %2518 = vmatprep.subr.mxu0 %v2485
      %2519 = vmatpush1.msra.mxu0 %v2484
      %2520 = vmatprep.subr.mxu0 %v2481
      %2521 = vmatpush1.msra.mxu0 %v2480
      %2522 = vmatprep.subr.mxu0 %v2477
      %2523 = vmatpush1.msra.mxu0 %v2476
      %2524 = vmatprep.subr.mxu0 %v2473
      %2525 = vmatpush1.msra.mxu0 %v2472
      %2526 = vmatprep.subr.mxu0 %v2469
      %2527 = vmatpush1.msra.mxu0 %v2468
      %2528 = vmatprep.subr.mxu0 %v2465
      %2529 = vmatpush1.msra.mxu0 %v2464
      %2530 = vmatprep.subr.mxu0 %v2461
      %2531 = vmatpush1.msra.mxu0 %v2460
      %2532 = vmatprep.subr.mxu0 %v2457
      %2533 = vmatpush1.msra.mxu0 %v2456
      %2534 = vmatprep.subr.mxu0 %v2453
      %2535 = vmatpush1.msra.mxu0 %v2452
      %2536 = vmatprep.subr.mxu0 %v2449
      %2537 = vmatpush1.msra.mxu0 %v2448
      %2538 = vmatprep.subr.mxu0 %v2445
      %2539 = vmatpush1.msra.mxu0 %v2444
      %2540 = vmatprep.subr.mxu0 0.0
      %2541 = vmatpush2.msra.mxu0 0.0
      %2542 = vmatprep.subr.mxu0 0.0
      %2543 = vmatpush2.msra.mxu0 0.0
      %2544 = vmatprep.subr.mxu0 0.0
      %2545 = vmatpush2.msra.mxu0 0.0
      %2546 = vmatprep.subr.mxu0 0.0
      %2547 = vmatpush2.msra.mxu0 0.0
      %2548 = vmatprep.subr.mxu0 0.0
      %2549 = vmatpush2.msra.mxu0 0.0
      %2550 = vmatprep.subr.mxu0 0.0
      %2551 = vmatpush2.msra.mxu0 0.0
      %2552 = vmatprep.subr.mxu0 0.0
      %2553 = vmatpush2.msra.mxu0 0.0
      %2554 = vmatprep.subr.mxu0 0.0
      %2555 = vmatpush2.msra.mxu0 0.0
      %2556 = vmatprep.subr.mxu0 0.0
      %2557 = vmatpush2.msra.mxu0 0.0
      %2558 = vmatprep.subr.mxu0 0.0
      %2559 = vmatpush2.msra.mxu0 0.0
      %2560 = vmatprep.subr.mxu0 0.0
      %2561 = vmatpush2.msra.mxu0 0.0
      %2562 = vmatprep.subr.mxu0 0.0
      %2563 = vmatpush2.msra.mxu0 0.0
      %2564 = vmatprep.subr.mxu0 0.0
      %2565 = vmatpush2.msra.mxu0 0.0
      %2566 = vmatprep.subr.mxu0 0.0
      %2567 = vmatpush2.msra.mxu0 0.0
      %2568 = vmatprep.subr.mxu0 0.0
      %2569 = vmatpush2.msra.mxu0 0.0
      %2570 = vmatprep.subr.mxu0 0.0
      %2571 = vmatpush2.msra.mxu0 0.0
      %2572 = vmatprep.mubr.f32.mxu0 0.0
      %2573 = vmatmul.mubr.f32.gmra.mxu0 %v2433
      %v2574 = vpop.f32.mrf.mxu0
      %v2575 = vadd.f32 0.0, %v2574
      %v2576 = vpop.f32.mrf.mxu0
      %v2577 = vadd.f32 0.0, %v2576
      %2578 = vdwg.mxu0
      %2579 = vmatprep.subr.mxu0 %v2507
      %2580 = vmatpush1.msra.mxu0 %v2506
      %2581 = vmatprep.subr.mxu0 %v2503
      %2582 = vmatpush1.msra.mxu0 %v2502
      %2583 = vmatprep.subr.mxu0 %v2499
      %2584 = vmatpush1.msra.mxu0 %v2498
      %2585 = vmatprep.subr.mxu0 %v2495
      %2586 = vmatpush1.msra.mxu0 %v2494
      %2587 = vmatprep.subr.mxu0 %v2491
      %2588 = vmatpush1.msra.mxu0 %v2490
      %2589 = vmatprep.subr.mxu0 %v2487
      %2590 = vmatpush1.msra.mxu0 %v2486
      %2591 = vmatprep.subr.mxu0 %v2483
      %2592 = vmatpush1.msra.mxu0 %v2482
      %2593 = vmatprep.subr.mxu0 %v2479
      %2594 = vmatpush1.msra.mxu0 %v2478
      %2595 = vmatprep.subr.mxu0 %v2475
      %2596 = vmatpush1.msra.mxu0 %v2474
      %2597 = vmatprep.subr.mxu0 %v2471
      %2598 = vmatpush1.msra.mxu0 %v2470
      %2599 = vmatprep.subr.mxu0 %v2467
      %2600 = vmatpush1.msra.mxu0 %v2466
      %2601 = vmatprep.subr.mxu0 %v2463
      %2602 = vmatpush1.msra.mxu0 %v2462
      %2603 = vmatprep.subr.mxu0 %v2459
      %2604 = vmatpush1.msra.mxu0 %v2458
      %2605 = vmatprep.subr.mxu0 %v2455
      %2606 = vmatpush1.msra.mxu0 %v2454
      %2607 = vmatprep.subr.mxu0 %v2451
      %2608 = vmatpush1.msra.mxu0 %v2450
      %2609 = vmatprep.subr.mxu0 %v2447
      %2610 = vmatpush1.msra.mxu0 %v2446
      %2611 = vmatprep.subr.mxu0 0.0
      %2612 = vmatpush2.msra.mxu0 0.0
      %2613 = vmatprep.subr.mxu0 0.0
      %2614 = vmatpush2.msra.mxu0 0.0
      %2615 = vmatprep.subr.mxu0 0.0
      %2616 = vmatpush2.msra.mxu0 0.0
      %2617 = vmatprep.subr.mxu0 0.0
      %2618 = vmatpush2.msra.mxu0 0.0
      %2619 = vmatprep.subr.mxu0 0.0
      %2620 = vmatpush2.msra.mxu0 0.0
      %2621 = vmatprep.subr.mxu0 0.0
      %2622 = vmatpush2.msra.mxu0 0.0
      %2623 = vmatprep.subr.mxu0 0.0
      %2624 = vmatpush2.msra.mxu0 0.0
      %2625 = vmatprep.subr.mxu0 0.0
      %2626 = vmatpush2.msra.mxu0 0.0
      %2627 = vmatprep.subr.mxu0 0.0
      %2628 = vmatpush2.msra.mxu0 0.0
      %2629 = vmatprep.subr.mxu0 0.0
      %2630 = vmatpush2.msra.mxu0 0.0
      %2631 = vmatprep.subr.mxu0 0.0
      %2632 = vmatpush2.msra.mxu0 0.0
      %2633 = vmatprep.subr.mxu0 0.0
      %2634 = vmatpush2.msra.mxu0 0.0
      %2635 = vmatprep.subr.mxu0 0.0
      %2636 = vmatpush2.msra.mxu0 0.0
      %2637 = vmatprep.subr.mxu0 0.0
      %2638 = vmatpush2.msra.mxu0 0.0
      %2639 = vmatprep.subr.mxu0 0.0
      %2640 = vmatpush2.msra.mxu0 0.0
      %2641 = vmatprep.subr.mxu0 0.0
      %2642 = vmatpush2.msra.mxu0 0.0
      %2643 = vmatprep.mubr.f32.mxu0 0.0
      %2644 = vmatmul.mubr.f32.gmra.mxu0 %v2433
      %v2645 = vpop.f32.mrf.mxu0
      %v2646 = vadd.f32 0.0, %v2645
      %v2647 = vpop.f32.mrf.mxu0
      %v2648 = vadd.f32 0.0, %v2647
      %2649 = vdwg.mxu0
      %v2650 = vadd.f32 %v2440, %v2575
      %v2651 = vadd.f32 %v2441, %v2577
      %v2652 = vadd.f32 %v2442, %v2646
      %v2653 = vadd.f32 %v2443, %v2648
      %v2654 = vmul.f32 %v2650, 0.5
      %v2655 = vtanh.pop %v2654
      %v2656 = vmul.f32 %v2655, 0.5
      %v2657 = vadd.f32 %v2656, 0.5
      %v2658 = vmul.f32 %v2651, 0.5
      %v2659 = vtanh.pop %v2658
      %v2660 = vmul.f32 %v2659, 0.5
      %v2661 = vadd.f32 %v2660, 0.5
      %v2662 = vtanh.pop %v2652
      %v2663 = vmul.f32 %v2653, 0.5
      %v2664 = vtanh.pop %v2663
      %v2665 = vmul.f32 %v2664, 0.5
      %v2666 = vadd.f32 %v2665, 0.5
      %v2667 = vmul.f32 %v2661, %v2431
      %v2668 = vmul.f32 %v2657, %v2662
      %v2669 = vadd.f32 %v2667, %v2668
      %v2670 = vtanh.pop %v2669
      %v2671 = vmul.f32 %v2666, %v2670
      // Predicated region
      $region81: #{predictor_forward.1} parent=47 // pred_check
        %p2672 = pneg %p1244
      $region82: #{predictor_forward.1} parent=47 // pred_check_branch
        %2674 = sbr.rel (%p2672) target = $region84
      $region83: #{predictor_forward.1} parent=47 // pred_region
        %s2675 = scalar_lea.vmem [#allocation2], 48
        %2676 = vst [vmem:[%s2675] sm:$0xff] %v2671
      $region84: #{predictor_forward.1} parent=47 // pred_fallthru
        _
      %s2677 = scalar_lea.vmem [#allocation3], 224
      %v2678 = vld [vmem:[%s2677] sm:$0xff]
      %v2679 = vld [vmem:[%s2677 + $0x8] sm:$0xff]
      %v2680 = vld [vmem:[%s2677 + $0x10] sm:$0xff]
      %v2681 = vld [vmem:[%s2677 + $0x18] sm:$0xff]
      %v2682 = vld [vmem:[%s296] sm:$0xff]
      %v2683 = vld [vmem:[%s296 + $0x8] sm:$0xff]
      %v2684 = vld [vmem:[%s296 + $0x10] sm:$0xff]
      %v2685 = vld [vmem:[%s296 + $0x18] sm:$0xff]
      %v2686 = vld [vmem:[%s296 + $0x20] sm:$0xff]
      %v2687 = vld [vmem:[%s296 + $0x28] sm:$0xff]
      %v2688 = vld [vmem:[%s296 + $0x30] sm:$0xff]
      %v2689 = vld [vmem:[%s296 + $0x38] sm:$0xff]
      %v2690 = vld [vmem:[%s296 + $0x40] sm:$0xff]
      %v2691 = vld [vmem:[%s296 + $0x48] sm:$0xff]
      %v2692 = vld [vmem:[%s296 + $0x50] sm:$0xff]
      %v2693 = vld [vmem:[%s296 + $0x58] sm:$0xff]
      %v2694 = vld [vmem:[%s296 + $0x60] sm:$0xff]
      %v2695 = vld [vmem:[%s296 + $0x68] sm:$0xff]
      %v2696 = vld [vmem:[%s296 + $0x70] sm:$0xff]
      %v2697 = vld [vmem:[%s296 + $0x78] sm:$0xff]
      %v2698 = vld [vmem:[%s296 + $0x80] sm:$0xff]
      %v2699 = vld [vmem:[%s296 + $0x88] sm:$0xff]
      %v2700 = vld [vmem:[%s296 + $0x90] sm:$0xff]
      %v2701 = vld [vmem:[%s296 + $0x98] sm:$0xff]
      %v2702 = vld [vmem:[%s296 + $0xa0] sm:$0xff]
      %v2703 = vld [vmem:[%s296 + $0xa8] sm:$0xff]
      %v2704 = vld [vmem:[%s296 + $0xb0] sm:$0xff]
      %v2705 = vld [vmem:[%s296 + $0xb8] sm:$0xff]
      %v2706 = vld [vmem:[%s296 + $0xc0] sm:$0xff]
      %v2707 = vld [vmem:[%s296 + $0xc8] sm:$0xff]
      %v2708 = vld [vmem:[%s296 + $0xd0] sm:$0xff]
      %v2709 = vld [vmem:[%s296 + $0xd8] sm:$0xff]
      %v2710 = vld [vmem:[%s296 + $0xe0] sm:$0xff]
      %v2711 = vld [vmem:[%s296 + $0xe8] sm:$0xff]
      %v2712 = vld [vmem:[%s296 + $0xf0] sm:$0xff]
      %v2713 = vld [vmem:[%s296 + $0xf8] sm:$0xff]
      %v2714 = vld [vmem:[%s296 + $0x100] sm:$0xff]
      %v2715 = vld [vmem:[%s296 + $0x108] sm:$0xff]
      %v2716 = vld [vmem:[%s296 + $0x110] sm:$0xff]
      %v2717 = vld [vmem:[%s296 + $0x118] sm:$0xff]
      %v2718 = vld [vmem:[%s296 + $0x120] sm:$0xff]
      %v2719 = vld [vmem:[%s296 + $0x128] sm:$0xff]
      %v2720 = vld [vmem:[%s296 + $0x130] sm:$0xff]
      %v2721 = vld [vmem:[%s296 + $0x138] sm:$0xff]
      %v2722 = vld [vmem:[%s296 + $0x140] sm:$0xff]
      %v2723 = vld [vmem:[%s296 + $0x148] sm:$0xff]
      %v2724 = vld [vmem:[%s296 + $0x150] sm:$0xff]
      %v2725 = vld [vmem:[%s296 + $0x158] sm:$0xff]
      %v2726 = vld [vmem:[%s296 + $0x160] sm:$0xff]
      %v2727 = vld [vmem:[%s296 + $0x168] sm:$0xff]
      %v2728 = vld [vmem:[%s296 + $0x170] sm:$0xff]
      %v2729 = vld [vmem:[%s296 + $0x178] sm:$0xff]
      %v2730 = vld [vmem:[%s296 + $0x180] sm:$0xff]
      %v2731 = vld [vmem:[%s296 + $0x188] sm:$0xff]
      %v2732 = vld [vmem:[%s296 + $0x190] sm:$0xff]
      %v2733 = vld [vmem:[%s296 + $0x198] sm:$0xff]
      %v2734 = vld [vmem:[%s296 + $0x1a0] sm:$0xff]
      %v2735 = vld [vmem:[%s296 + $0x1a8] sm:$0xff]
      %v2736 = vld [vmem:[%s296 + $0x1b0] sm:$0xff]
      %v2737 = vld [vmem:[%s296 + $0x1b8] sm:$0xff]
      %v2738 = vld [vmem:[%s296 + $0x1c0] sm:$0xff]
      %v2739 = vld [vmem:[%s296 + $0x1c8] sm:$0xff]
      %v2740 = vld [vmem:[%s296 + $0x1d0] sm:$0xff]
      %v2741 = vld [vmem:[%s296 + $0x1d8] sm:$0xff]
      %v2742 = vld [vmem:[%s296 + $0x1e0] sm:$0xff]
      %v2743 = vld [vmem:[%s296 + $0x1e8] sm:$0xff]
      %v2744 = vld [vmem:[%s296 + $0x1f0] sm:$0xff]
      %v2745 = vld [vmem:[%s296 + $0x1f8] sm:$0xff]
      %2746 = vmatprep.subr.mxu0 %v2743
      %2747 = vmatpush1.msra.mxu0 %v2742
      %2748 = vmatprep.subr.mxu0 %v2739
      %2749 = vmatpush1.msra.mxu0 %v2738
      %2750 = vmatprep.subr.mxu0 %v2735
      %2751 = vmatpush1.msra.mxu0 %v2734
      %2752 = vmatprep.subr.mxu0 %v2731
      %2753 = vmatpush1.msra.mxu0 %v2730
      %2754 = vmatprep.subr.mxu0 %v2727
      %2755 = vmatpush1.msra.mxu0 %v2726
      %2756 = vmatprep.subr.mxu0 %v2723
      %2757 = vmatpush1.msra.mxu0 %v2722
      %2758 = vmatprep.subr.mxu0 %v2719
      %2759 = vmatpush1.msra.mxu0 %v2718
      %2760 = vmatprep.subr.mxu0 %v2715
      %2761 = vmatpush1.msra.mxu0 %v2714
      %2762 = vmatprep.subr.mxu0 %v2711
      %2763 = vmatpush1.msra.mxu0 %v2710
      %2764 = vmatprep.subr.mxu0 %v2707
      %2765 = vmatpush1.msra.mxu0 %v2706
      %2766 = vmatprep.subr.mxu0 %v2703
      %2767 = vmatpush1.msra.mxu0 %v2702
      %2768 = vmatprep.subr.mxu0 %v2699
      %2769 = vmatpush1.msra.mxu0 %v2698
      %2770 = vmatprep.subr.mxu0 %v2695
      %2771 = vmatpush1.msra.mxu0 %v2694
      %2772 = vmatprep.subr.mxu0 %v2691
      %2773 = vmatpush1.msra.mxu0 %v2690
      %2774 = vmatprep.subr.mxu0 %v2687
      %2775 = vmatpush1.msra.mxu0 %v2686
      %2776 = vmatprep.subr.mxu0 %v2683
      %2777 = vmatpush1.msra.mxu0 %v2682
      %2778 = vmatprep.subr.mxu0 0.0
      %2779 = vmatpush2.msra.mxu0 0.0
      %2780 = vmatprep.subr.mxu0 0.0
      %2781 = vmatpush2.msra.mxu0 0.0
      %2782 = vmatprep.subr.mxu0 0.0
      %2783 = vmatpush2.msra.mxu0 0.0
      %2784 = vmatprep.subr.mxu0 0.0
      %2785 = vmatpush2.msra.mxu0 0.0
      %2786 = vmatprep.subr.mxu0 0.0
      %2787 = vmatpush2.msra.mxu0 0.0
      %2788 = vmatprep.subr.mxu0 0.0
      %2789 = vmatpush2.msra.mxu0 0.0
      %2790 = vmatprep.subr.mxu0 0.0
      %2791 = vmatpush2.msra.mxu0 0.0
      %2792 = vmatprep.subr.mxu0 0.0
      %2793 = vmatpush2.msra.mxu0 0.0
      %2794 = vmatprep.subr.mxu0 0.0
      %2795 = vmatpush2.msra.mxu0 0.0
      %2796 = vmatprep.subr.mxu0 0.0
      %2797 = vmatpush2.msra.mxu0 0.0
      %2798 = vmatprep.subr.mxu0 0.0
      %2799 = vmatpush2.msra.mxu0 0.0
      %2800 = vmatprep.subr.mxu0 0.0
      %2801 = vmatpush2.msra.mxu0 0.0
      %2802 = vmatprep.subr.mxu0 0.0
      %2803 = vmatpush2.msra.mxu0 0.0
      %2804 = vmatprep.subr.mxu0 0.0
      %2805 = vmatpush2.msra.mxu0 0.0
      %2806 = vmatprep.subr.mxu0 0.0
      %2807 = vmatpush2.msra.mxu0 0.0
      %2808 = vmatprep.subr.mxu0 0.0
      %2809 = vmatpush2.msra.mxu0 0.0
      %2810 = vmatprep.mubr.f32.mxu0 0.0
      %2811 = vmatmul.mubr.f32.gmra.mxu0 %v2671
      %v2812 = vpop.f32.mrf.mxu0
      %v2813 = vadd.f32 0.0, %v2812
      %v2814 = vpop.f32.mrf.mxu0
      %v2815 = vadd.f32 0.0, %v2814
      %2816 = vdwg.mxu0
      %2817 = vmatprep.subr.mxu0 %v2745
      %2818 = vmatpush1.msra.mxu0 %v2744
      %2819 = vmatprep.subr.mxu0 %v2741
      %2820 = vmatpush1.msra.mxu0 %v2740
      %2821 = vmatprep.subr.mxu0 %v2737
      %2822 = vmatpush1.msra.mxu0 %v2736
      %2823 = vmatprep.subr.mxu0 %v2733
      %2824 = vmatpush1.msra.mxu0 %v2732
      %2825 = vmatprep.subr.mxu0 %v2729
      %2826 = vmatpush1.msra.mxu0 %v2728
      %2827 = vmatprep.subr.mxu0 %v2725
      %2828 = vmatpush1.msra.mxu0 %v2724
      %2829 = vmatprep.subr.mxu0 %v2721
      %2830 = vmatpush1.msra.mxu0 %v2720
      %2831 = vmatprep.subr.mxu0 %v2717
      %2832 = vmatpush1.msra.mxu0 %v2716
      %2833 = vmatprep.subr.mxu0 %v2713
      %2834 = vmatpush1.msra.mxu0 %v2712
      %2835 = vmatprep.subr.mxu0 %v2709
      %2836 = vmatpush1.msra.mxu0 %v2708
      %2837 = vmatprep.subr.mxu0 %v2705
      %2838 = vmatpush1.msra.mxu0 %v2704
      %2839 = vmatprep.subr.mxu0 %v2701
      %2840 = vmatpush1.msra.mxu0 %v2700
      %2841 = vmatprep.subr.mxu0 %v2697
      %2842 = vmatpush1.msra.mxu0 %v2696
      %2843 = vmatprep.subr.mxu0 %v2693
      %2844 = vmatpush1.msra.mxu0 %v2692
      %2845 = vmatprep.subr.mxu0 %v2689
      %2846 = vmatpush1.msra.mxu0 %v2688
      %2847 = vmatprep.subr.mxu0 %v2685
      %2848 = vmatpush1.msra.mxu0 %v2684
      %2849 = vmatprep.subr.mxu0 0.0
      %2850 = vmatpush2.msra.mxu0 0.0
      %2851 = vmatprep.subr.mxu0 0.0
      %2852 = vmatpush2.msra.mxu0 0.0
      %2853 = vmatprep.subr.mxu0 0.0
      %2854 = vmatpush2.msra.mxu0 0.0
      %2855 = vmatprep.subr.mxu0 0.0
      %2856 = vmatpush2.msra.mxu0 0.0
      %2857 = vmatprep.subr.mxu0 0.0
      %2858 = vmatpush2.msra.mxu0 0.0
      %2859 = vmatprep.subr.mxu0 0.0
      %2860 = vmatpush2.msra.mxu0 0.0
      %2861 = vmatprep.subr.mxu0 0.0
      %2862 = vmatpush2.msra.mxu0 0.0
      %2863 = vmatprep.subr.mxu0 0.0
      %2864 = vmatpush2.msra.mxu0 0.0
      %2865 = vmatprep.subr.mxu0 0.0
      %2866 = vmatpush2.msra.mxu0 0.0
      %2867 = vmatprep.subr.mxu0 0.0
      %2868 = vmatpush2.msra.mxu0 0.0
      %2869 = vmatprep.subr.mxu0 0.0
      %2870 = vmatpush2.msra.mxu0 0.0
      %2871 = vmatprep.subr.mxu0 0.0
      %2872 = vmatpush2.msra.mxu0 0.0
      %2873 = vmatprep.subr.mxu0 0.0
      %2874 = vmatpush2.msra.mxu0 0.0
      %2875 = vmatprep.subr.mxu0 0.0
      %2876 = vmatpush2.msra.mxu0 0.0
      %2877 = vmatprep.subr.mxu0 0.0
      %2878 = vmatpush2.msra.mxu0 0.0
      %2879 = vmatprep.subr.mxu0 0.0
      %2880 = vmatpush2.msra.mxu0 0.0
      %2881 = vmatprep.mubr.f32.mxu0 0.0
      %2882 = vmatmul.mubr.f32.gmra.mxu0 %v2671
      %v2883 = vpop.f32.mrf.mxu0
      %v2884 = vadd.f32 0.0, %v2883
      %v2885 = vpop.f32.mrf.mxu0
      %v2886 = vadd.f32 0.0, %v2885
      %2887 = vdwg.mxu0
      %v2888 = vadd.f32 %v2678, %v2813
      %v2889 = vadd.f32 %v2679, %v2815
      %v2890 = vadd.f32 %v2680, %v2884
      %v2891 = vadd.f32 %v2681, %v2886
      %v2892 = vmul.f32 %v2888, 0.5
      %v2893 = vtanh.pop %v2892
      %v2894 = vmul.f32 %v2893, 0.5
      %v2895 = vadd.f32 %v2894, 0.5
      %v2896 = vmul.f32 %v2889, 0.5
      %v2897 = vtanh.pop %v2896
      %v2898 = vmul.f32 %v2897, 0.5
      %v2899 = vadd.f32 %v2898, 0.5
      %v2900 = vtanh.pop %v2890
      %v2901 = vmul.f32 %v2891, 0.5
      %v2902 = vtanh.pop %v2901
      %v2903 = vmul.f32 %v2902, 0.5
      %v2904 = vadd.f32 %v2903, 0.5
      %v2905 = vmul.f32 %v2899, %v2669
      %v2906 = vmul.f32 %v2895, %v2900
      %v2907 = vadd.f32 %v2905, %v2906
      %v2908 = vtanh.pop %v2907
      %v2909 = vmul.f32 %v2904, %v2908
      // Predicated region
      $region85: #{predictor_forward.1} parent=47 // pred_check
        %p2910 = pneg %p1244
      $region86: #{predictor_forward.1} parent=47 // pred_check_branch
        %2912 = sbr.rel (%p2910) target = $region88
      $region87: #{predictor_forward.1} parent=47 // pred_region
        %s2913 = scalar_lea.vmem [#allocation2], 56
        %2914 = vst [vmem:[%s2913] sm:$0xff] %v2909
      $region88: #{predictor_forward.1} parent=47 // pred_fallthru
        _
      %p2915 = scmp.eq.s32.totalorder %s18, 1
      // Predicated region
      $region89: #{predictor_forward.1} parent=47 // pred_check
        %p2916 = pneg %p2915
      $region90: #{predictor_forward.1} parent=47 // pred_check_branch
        %2918 = sbr.rel (%p2916) target = $region92
      $region91: #{predictor_forward.1} parent=47 // pred_region
        %v2919 = vld [vmem:[%s5] sm:$0xff]
        %v2920 = vld [vmem:[%s5 + $0x8] sm:$0xff]
        %v2921 = vld [vmem:[%s5 + $0x10] sm:$0xff]
        %v2922 = vld [vmem:[%s5 + $0x18] sm:$0xff]
        %v2923 = vld [vmem:[%s5 + $0x20] sm:$0xff]
        %v2924 = vld [vmem:[%s5 + $0x28] sm:$0xff]
        %v2925 = vld [vmem:[%s5 + $0x30] sm:$0xff]
        %v2926 = vld [vmem:[%s5 + $0x38] sm:$0xff]
        %v2927 = vld [vmem:[%s5 + $0x40] sm:$0xff]
        %v2928 = vld [vmem:[%s5 + $0x48] sm:$0xff]
        %v2929 = vld [vmem:[%s5 + $0x50] sm:$0xff]
        %v2930 = vld [vmem:[%s5 + $0x58] sm:$0xff]
        %v2931 = vld [vmem:[%s5 + $0x60] sm:$0xff]
        %v2932 = vld [vmem:[%s5 + $0x68] sm:$0xff]
        %v2933 = vld [vmem:[%s5 + $0x70] sm:$0xff]
        %v2934 = vld [vmem:[%s5 + $0x78] sm:$0xff]
        %v2935 = vld [vmem:[%s6] sm:$0x1]
        %v2937 = vlaneseq
        %v2938 = vshrl.u32 %v2937, 7
        %v2939 = vsub.s32 0, %v2938
        %v2940 = vrot.slane %v2935, %v2939
        %2942 = vmatprep.subr.mxu0 0.0
        %2943 = vmatpush1.msra.mxu0 %v2934
        %2944 = vmatprep.subr.mxu0 0.0
        %2945 = vmatpush1.msra.mxu0 %v2933
        %2946 = vmatprep.subr.mxu0 0.0
        %2947 = vmatpush1.msra.mxu0 %v2932
        %2948 = vmatprep.subr.mxu0 0.0
        %2949 = vmatpush1.msra.mxu0 %v2931
        %2950 = vmatprep.subr.mxu0 0.0
        %2951 = vmatpush1.msra.mxu0 %v2930
        %2952 = vmatprep.subr.mxu0 0.0
        %2953 = vmatpush1.msra.mxu0 %v2929
        %2954 = vmatprep.subr.mxu0 0.0
        %2955 = vmatpush1.msra.mxu0 %v2928
        %2956 = vmatprep.subr.mxu0 0.0
        %2957 = vmatpush1.msra.mxu0 %v2927
        %2958 = vmatprep.subr.mxu0 0.0
        %2959 = vmatpush1.msra.mxu0 %v2926
        %2960 = vmatprep.subr.mxu0 0.0
        %2961 = vmatpush1.msra.mxu0 %v2925
        %2962 = vmatprep.subr.mxu0 0.0
        %2963 = vmatpush1.msra.mxu0 %v2924
        %2964 = vmatprep.subr.mxu0 0.0
        %2965 = vmatpush1.msra.mxu0 %v2923
        %2966 = vmatprep.subr.mxu0 0.0
        %2967 = vmatpush1.msra.mxu0 %v2922
        %2968 = vmatprep.subr.mxu0 0.0
        %2969 = vmatpush1.msra.mxu0 %v2921
        %2970 = vmatprep.subr.mxu0 0.0
        %2971 = vmatpush1.msra.mxu0 %v2920
        %2972 = vmatprep.subr.mxu0 0.0
        %2973 = vmatpush1.msra.mxu0 %v2919
        %2974 = vmatprep.subr.mxu0 0.0
        %2975 = vmatpush2.msra.mxu0 0.0
        %2976 = vmatprep.subr.mxu0 0.0
        %2977 = vmatpush2.msra.mxu0 0.0
        %2978 = vmatprep.subr.mxu0 0.0
        %2979 = vmatpush2.msra.mxu0 0.0
        %2980 = vmatprep.subr.mxu0 0.0
        %2981 = vmatpush2.msra.mxu0 0.0
        %2982 = vmatprep.subr.mxu0 0.0
        %2983 = vmatpush2.msra.mxu0 0.0
        %2984 = vmatprep.subr.mxu0 0.0
        %2985 = vmatpush2.msra.mxu0 0.0
        %2986 = vmatprep.subr.mxu0 0.0
        %2987 = vmatpush2.msra.mxu0 0.0
        %2988 = vmatprep.subr.mxu0 0.0
        %2989 = vmatpush2.msra.mxu0 0.0
        %2990 = vmatprep.subr.mxu0 0.0
        %2991 = vmatpush2.msra.mxu0 0.0
        %2992 = vmatprep.subr.mxu0 0.0
        %2993 = vmatpush2.msra.mxu0 0.0
        %2994 = vmatprep.subr.mxu0 0.0
        %2995 = vmatpush2.msra.mxu0 0.0
        %2996 = vmatprep.subr.mxu0 0.0
        %2997 = vmatpush2.msra.mxu0 0.0
        %2998 = vmatprep.subr.mxu0 0.0
        %2999 = vmatpush2.msra.mxu0 0.0
        %3000 = vmatprep.subr.mxu0 0.0
        %3001 = vmatpush2.msra.mxu0 0.0
        %3002 = vmatprep.subr.mxu0 0.0
        %3003 = vmatpush2.msra.mxu0 0.0
        %3004 = vmatprep.subr.mxu0 0.0
        %3005 = vmatpush2.msra.mxu0 0.0
        %3006 = vmatprep.mubr.f32.mxu0 0.0
        %3007 = vmatmul.mubr.f32.gmra.mxu0 %v2909
        %v3008 = vpop.f32.mrf.mxu0
        %v3009 = vadd.f32 %v2940, %v3008
        %v3010 = vpop.f32.mrf.mxu0
        %3011 = vdwg.mxu0
        %3012 = vst [vmem:[%s7] sm:$0xff] %v3009
      $region92: #{predictor_forward.1} parent=47 // pred_fallthru
        _
      // Predicated region
      $region93: #{predictor_forward.1} parent=47 // pred_check
        %p3013 = pneg %p193
      $region94: #{predictor_forward.1} parent=47 // pred_check_branch
        %3015 = sbr.rel (%p3013) target = $region96
      $region95: #{predictor_forward.1} parent=47 // pred_region
        _
      $region96: #{predictor_forward.1} parent=47 // pred_fallthru
        _
      // Predicated region
      $region97: #{predictor_forward.1} parent=47 // pred_check
        %p3016 = pneg %p193
      $region98: #{predictor_forward.1} parent=47 // pred_check_branch
        %3018 = sbr.rel (%p3016) target = $region100
      $region99: #{predictor_forward.1} parent=47 // pred_region
        _
      $region100: #{predictor_forward.1} parent=47 // pred_fallthru
        _
    $region48: #{predictor_forward.1} parent=5 // pred_fallthru
      _
    %p3019 = scmp.le.s32.totalorder 2, %s13
    // Predicated region
    $region101: #{predictor_forward.1} parent=5 // pred_check
      %p3020 = pneg %p3019
    $region102: #{predictor_forward.1} parent=5 // pred_check_branch
      %3022 = sbr.rel (%p3020) target = $region104
    $region103: #{predictor_forward.1} parent=5 // pred_region
      %s3023 = ssub.s32 %s13, 2
    $region104: #{predictor_forward.1} parent=5 // pred_fallthru
      _
  $region6: #{predictor_forward.1} parent=0 // loop_footer
    %s17 = sadd.s32 1, %s13
  $region7: #{predictor_forward.1} parent=0 // loop_footer_branch
    %12 = sbr.rel target = $region3
  $region8: #{predictor_forward.1} parent=0 // loop_exit
    _

</llo_original>
